<compile_context>
chip_gen: v7x
topology: tpu7x:2x2x1
jax: 0.10.0
libtpu: 0.0.40
codegen_flags: <defaults>
</compile_context>

<pallas_src>
import math

import jax
import jax.numpy as jnp
from jax.experimental import pallas as pl
from jax.experimental.pallas import tpu as pltpu

# ---- module constants (from u_net.__init__, lowres_images=False) -------------
DIM = 128
CHANNELS = 3
COND_DIM = DIM
TIME_COND_DIM = DIM * 4          # 512
NUM_TIME_TOKENS = 2
KERNEL_SIZES = (3, 7, 15)        # CrossEmbedLayer kernel sizes (already sorted)
DIM_SCALES = (64, 32, 32)        # [128//2, 128//4, 128 - 96]
MAX_K = 15                       # all branches expressed as padded 15x15 kernels
K_PATCH = CHANNELS * MAX_K * MAX_K   # 675

_VMEM = pl.BlockSpec(memory_space=pltpu.MemorySpace.VMEM)

# 4096-row tiles: 2 x (4096*675*2B patch) + 2 x (4096*128*2B out) + 170 KiB weight
# ~= 13.4 MiB — fits every generation's scoped VMEM once the limit is raised.
_TILE_CAP = 4096
_VMEM_LIMIT_BYTES = 32 * 1024 * 1024


# ------------------------------- Pallas kernels --------------------------------
def _time_mlp_kernel(time_ref, freqs_ref, w1_ref, b1_ref, w23_ref, b23_ref, o_ref):
    """Sinusoidal pos-emb + to_time_hiddens(+SiLU) + fused [to_time_cond | to_time_tokens]."""
    emb = time_ref[...] * freqs_ref[...]                           # (Bp, DIM//2)
    pos = jnp.concatenate([jnp.sin(emb), jnp.cos(emb)], axis=-1)   # (Bp, DIM)
    h = jnp.dot(pos, w1_ref[...], preferred_element_type=jnp.float32) + b1_ref[...]
    h = h * jax.nn.sigmoid(h)                                      # SiLU
    # single lane-dense N=768 matmul: [to_time_cond | to_time_tokens]
    o_ref[...] = jnp.dot(h, w23_ref[...], preferred_element_type=jnp.float32) + b23_ref[...]


def _conv_matmul_kernel(p_ref, w_ref, b_ref, o_ref):
    """Fused 3-branch conv as one im2col matmul: bf16 (TM,675)@(675,128), f32 acc, bf16 store."""
    acc = jnp.dot(p_ref[...], w_ref[...], preferred_element_type=jnp.float32)
    o_ref[...] = (acc + b_ref[...]).astype(o_ref.dtype)


# ------------------------------- helpers ---------------------------------------
def _num_tensorcores():
    """Best-effort TensorCore-per-device count (v7x / v4 / v5p = 2, else 1)."""
    try:
        kind = jax.devices()[0].device_kind.lower().replace(" ", "")
        if ("v7" in kind) or ("7x" in kind) or ("v4" in kind) or ("v5p" in kind):
            return 2
        return 1
    except Exception:
        return 2   # unknown: assume 2 so a 2-TC chip still gets both cores busy


def _pick_tile_m(M, n_tc):
    """Big tiles (per-grid-step overhead dwarfs per-tile compute).  Single tile on
    1-TC chips when it fits; >=2 tiles on 2-TC chips; cap by VMEM budget."""
    m256 = ((M + 255) // 256) * 256
    if n_tc >= 2:
        half = ((m256 // 2 + 255) // 256) * 256
        return max(256, min(_TILE_CAP, half))
    return max(256, min(_TILE_CAP, m256))


# ------------------------------- wrappers --------------------------------------
def _time_path(prepared, time):
    B = time.shape[0]
    Bp = ((B + 7) // 8) * 8                       # pad batch to 8 sublanes
    tcol = jnp.zeros((Bp, 1), jnp.float32).at[:B, 0].set(time.astype(jnp.float32))
    out = pl.pallas_call(
        _time_mlp_kernel,
        out_shape=jax.ShapeDtypeStruct(
            (Bp, TIME_COND_DIM + COND_DIM * NUM_TIME_TOKENS), jnp.float32),
        in_specs=[_VMEM] * 6,
        out_specs=_VMEM,
    )(tcol, prepared["freqs"], prepared["w1"], prepared["b1"],
      prepared["w23"], prepared["b23"])
    t = out[:B, :TIME_COND_DIM]
    tok = out[:B, TIME_COND_DIM:]
    return t, tok


def _im2col_bf16(x_nchw):
    """(B, C, H, W) f32 -> (B*H*W, 675) bf16 patches, contraction order (dy, dx, ci).

    Built NHWC with concat along the LAST axis so the final reshape only merges
    leading dims (no materializing transpose of the 225x-inflated tensor)."""
    B, C, H, W = x_nchw.shape
    p = (MAX_K - 1) // 2
    x_nhwc = jnp.transpose(x_nchw, (0, 2, 3, 1)).astype(jnp.bfloat16)   # tiny (1x input)
    xpad = jnp.pad(x_nhwc, ((0, 0), (p, p), (p, p), (0, 0)))
    taps = [xpad[:, dy:dy + H, dx:dx + W, :]
            for dy in range(MAX_K) for dx in range(MAX_K)]
    pat = jnp.concatenate(taps, axis=-1)          # (B, H, W, 675), order (dy, dx, ci)
    return pat.reshape(B * H * W, K_PATCH)        # leading-dim merge only


def _fused_conv_matmul(patches_bf16, w_bf16, bias_f32):
    M, K = patches_bf16.shape
    N = w_bf16.shape[1]
    tile_m = _pick_tile_m(M, _num_tensorcores())
    M_pad = pl.cdiv(M, tile_m) * tile_m
    if M_pad != M:
        patches_bf16 = jnp.pad(patches_bf16, ((0, M_pad - M), (0, 0)))
    out = pl.pallas_call(
        _conv_matmul_kernel,
        out_shape=jax.ShapeDtypeStruct((M_pad, N), jnp.bfloat16),
        grid=(M_pad // tile_m,),
        in_specs=[
            pl.BlockSpec((tile_m, K), lambda i: (i, 0)),   # pipelined bf16 patch tile
            _VMEM,                                         # resident fused weight (1 copy)
            _VMEM,                                         # resident fused bias (1 copy)
        ],
        out_specs=pl.BlockSpec((tile_m, N), lambda i: (i, 0)),
        compiler_params=pltpu.CompilerParams(
            dimension_semantics=("parallel",),
            vmem_limit_bytes=_VMEM_LIMIT_BYTES),
    )(patches_bf16, w_bf16, bias_f32)
    return out[:M]


def u_net_forward(prepared, x, time):
    """Reproduces u_net.forward compute.

    NOTE: the PyTorch forward has no return statement (returns None); here we
    return the computed tensors so they can be checked.  The conv output is
    returned lane-dense NHWC bf16 (B, H, W, 128) — the preferred layout/dtype
    for the next conv block; transpose to NCHW only if a consumer needs it.
    """
    # time conditioning path
    t, time_tokens = _time_path(prepared, time)

    # initial_convolution = CrossEmbedLayer(3 -> 128, kernels (3, 7, 15), stride 1)
    # fused into a single (B*H*W, 675) @ (675, 128) + bias matmul.
    B, C, H, W = x.shape
    patches = _im2col_bf16(x)                                    # (M, 675) bf16
    conv = _fused_conv_matmul(patches, prepared["conv_w"], prepared["conv_b"])
    x_out = conv.reshape(B, H, W, DIM)                           # NHWC bf16, lane-dense
    return x_out, t, time_tokens


# ------------------------------- parameters ------------------------------------
def init_params(key):
    ks = jax.random.split(key, 8)

    def lin(k, fan_in, fan_out):
        k1, k2 = jax.random.split(k)
        bound = 1.0 / math.sqrt(fan_in)
        W = jax.random.uniform(k1, (fan_in, fan_out), jnp.float32, -bound, bound)
        b = jax.random.uniform(k2, (1, fan_out), jnp.float32, -bound, bound)
        return W, b

    def conv(k, cout, cin, ksz):
        k1, k2 = jax.random.split(k)
        bound = 1.0 / math.sqrt(cin * ksz * ksz)
        W = jax.random.uniform(k1, (cout, cin, ksz, ksz), jnp.float32, -bound, bound)
        b = jax.random.uniform(k2, (cout,), jnp.float32, -bound, bound)
        return W, b

    params = {}
    params["w1"], params["b1"] = lin(ks[0], DIM, TIME_COND_DIM)
    params["w2"], params["b2"] = lin(ks[1], TIME_COND_DIM, TIME_COND_DIM)
    params["w3"], params["b3"] = lin(ks[2], TIME_COND_DIM, COND_DIM * NUM_TIME_TOKENS)
    for i, (ksz, dsc) in enumerate(zip(KERNEL_SIZES, DIM_SCALES)):
        params[f"cw{ksz}"], params[f"cb{ksz}"] = conv(ks[3 + i], dsc, CHANNELS, ksz)
    return params


def prepare_params(params):
    """One-time preprocessing: fused padded conv weight/bias in (dy, dx, ci) matmul
    layout (matching the NHWC concat-last patch builder), fused time-MLP head
    weights, sinusoidal freqs table."""
    prepared = {"w1": params["w1"], "b1": params["b1"]}

    # fused to_time_cond || to_time_tokens head: one (512, 768) matmul
    prepared["w23"] = jnp.concatenate([params["w2"], params["w3"]], axis=1)
    prepared["b23"] = jnp.concatenate([params["b2"], params["b3"]], axis=1)

    # zero-pad every branch kernel to 15x15 (centered) -> equivalent 'same' conv
    padded = []
    for ksz in KERNEL_SIZES:
        off = (MAX_K - ksz) // 2
        padded.append(jnp.pad(params[f"cw{ksz}"],
                              ((0, 0), (0, 0), (off, off), (off, off))))
    w_full = jnp.concatenate(padded, axis=0)                  # (128, 3, 15, 15) OIHW
    w_k = jnp.transpose(w_full, (2, 3, 1, 0))                 # (dy, dx, ci, co)
    prepared["conv_w"] = w_k.reshape(K_PATCH, DIM).astype(jnp.bfloat16)   # (675, 128)
    prepared["conv_b"] = jnp.concatenate(
        [params[f"cb{k}"] for k in KERNEL_SIZES]).reshape(1, DIM).astype(jnp.float32)

    half = DIM // 2
    prepared["freqs"] = jnp.exp(
        jnp.arange(half, dtype=jnp.float32) * (-math.log(10000.0) / (half - 1))
    ).reshape(1, half)
    return prepared


# ---------------------------------- main ----------------------------------------
if __name__ == "__main__":
    key = jax.random.PRNGKey(0)
    pkey, xkey, tkey = jax.random.split(key, 3)
    params = init_params(pkey)
    prepared = prepare_params(params)

    B, H, W = 2, 16, 16
    x = jax.random.normal(xkey, (B, CHANNELS, H, W), jnp.float32)
    time = jax.random.uniform(tkey, (B,), jnp.float32, 0.0, 1000.0)

    fwd = jax.jit(u_net_forward)
    x_out, t, tok = jax.block_until_ready(fwd(prepared, x, time))

    # --- plain-JAX references for sanity ---
    half = DIM // 2
    freqs = jnp.exp(jnp.arange(half, dtype=jnp.float32) * (-math.log(10000.0) / (half - 1)))
    emb = time[:, None] * freqs[None, :]
    pos = jnp.concatenate([jnp.sin(emb), jnp.cos(emb)], axis=-1)
    h = pos @ params["w1"] + params["b1"]
    h = h * jax.nn.sigmoid(h)
    t_ref = h @ params["w2"] + params["b2"]
    tok_ref = h @ params["w3"] + params["b3"]

    def conv_ref(cast_dtype):
        outs = []
        for ksz, dsc in zip(KERNEL_SIZES, DIM_SCALES):
            p = (ksz - 1) // 2
            co = jax.lax.conv_general_dilated(
                x.astype(cast_dtype), params[f"cw{ksz}"].astype(cast_dtype),
                window_strides=(1, 1), padding=((p, p), (p, p)),
                dimension_numbers=("NCHW", "OIHW", "NCHW"),
                preferred_element_type=jnp.float32)
            outs.append(co + params[f"cb{ksz}"].reshape(1, dsc, 1, 1))
        return jnp.concatenate(outs, axis=1)

    # references in NHWC to match the kernel's lane-dense output layout
    x_ref_bf16 = jnp.transpose(conv_ref(jnp.bfloat16), (0, 2, 3, 1))
    x_ref_f32 = jnp.transpose(conv_ref(jnp.float32), (0, 2, 3, 1))
    x_out_f32 = x_out.astype(jnp.float32)

    assert x_out.shape == (B, H, W, DIM)
    assert x_out.dtype == jnp.bfloat16
    assert t.shape == (B, TIME_COND_DIM)
    assert tok.shape == (B, COND_DIM * NUM_TIME_TOKENS)
    assert jnp.allclose(t, t_ref, rtol=1e-3, atol=1e-3)
    assert jnp.allclose(tok, tok_ref, rtol=1e-3, atol=1e-3)
    # same bf16-input precision as the kernel; kernel additionally rounds the store to bf16
    assert jnp.allclose(x_out_f32, x_ref_bf16, rtol=2e-2, atol=3e-2)
    # full-precision sanity bound
    assert jnp.allclose(x_out_f32, x_ref_f32, rtol=0.0, atol=6e-2)

    print("KERNEL_OK")
</pallas_src>

<mosaic_0001>
module attributes {stable_mosaic.version = 11 : i64} {
  func.func @_conv_matmul_kernel(%arg0: i32, %arg1: memref<512x675xbf16, #tpu.memory_space<vmem>>, %arg2: memref<675x128xbf16, #tpu.memory_space<vmem>>, %arg3: memref<1x128xf32, #tpu.memory_space<vmem>>, %arg4: memref<512x128xbf16, #tpu.memory_space<vmem>>) attributes {dimension_semantics = [#tpu.dimension_semantics<parallel>], iteration_bounds = array<i64: 1>, scalar_prefetch = 0 : i64, scratch_operands = 0 : i64, tpu.core_type = #tpu.core_type<tc>, window_params = [{transform_indices = @transform_0, window_bounds = array<i64: 512, 675>}, {pipeline_mode = #tpu.pipeline_mode<synchronous>, transform_indices = @transform_1, window_bounds = array<i64: 675, 128>}, {pipeline_mode = #tpu.pipeline_mode<synchronous>, transform_indices = @transform_2, window_bounds = array<i64: 1, 128>}, {transform_indices = @transform_3, window_bounds = array<i64: 512, 128>}]} {
    %c0 = arith.constant 0 : index
    %c0_0 = arith.constant 0 : index
    %0 = vector.load %arg1[%c0, %c0_0] : memref<512x675xbf16, #tpu.memory_space<vmem>>, vector<512x675xbf16>
    %c0_1 = arith.constant 0 : index
    %c0_2 = arith.constant 0 : index
    %1 = vector.load %arg2[%c0_1, %c0_2] : memref<675x128xbf16, #tpu.memory_space<vmem>>, vector<675x128xbf16>
    %cst = arith.constant dense<0.000000e+00> : vector<512x128xf32>
    %2 = tpu.matmul %0, %1, %cst {dimension_numbers = #tpu.dot_dimension_numbers<[1], [0], [0], [1], [0, 0, 1, 1], [], []>} : vector<512x675xbf16>, vector<675x128xbf16>, vector<512x128xf32> -> vector<512x128xf32>
    %c0_3 = arith.constant 0 : index
    %c0_4 = arith.constant 0 : index
    %3 = vector.load %arg3[%c0_3, %c0_4] : memref<1x128xf32, #tpu.memory_space<vmem>>, vector<1x128xf32>
    %4 = vector.broadcast %3 : vector<1x128xf32> to vector<512x128xf32>
    %5 = arith.addf %2, %4 : vector<512x128xf32>
    %6 = arith.truncf %5 : vector<512x128xf32> to vector<512x128xbf16>
    %c0_5 = arith.constant 0 : index
    %c0_6 = arith.constant 0 : index
    %7 = vector.load %arg4[%c0_5, %c0_6] : memref<512x128xbf16, #tpu.memory_space<vmem>>, vector<512x128xbf16>
    tpu.vector_store %arg4[%c0_5, %c0_6], %6 {strides = array<i32>} : memref<512x128xbf16, #tpu.memory_space<vmem>>, vector<512x128xbf16>,
    return
  }
  func.func @transform_0(%arg0: i32) -> (i32, i32) {
    %c0_i32 = arith.constant 0 : i32
    %c0_i32_0 = arith.constant 0 : i32
    return %arg0, %c0_i32 : i32, i32
  }
  func.func @transform_1(%arg0: i32) -> (i32, i32) {
    %c0_i32 = arith.constant 0 : i32
    %c0_i32_0 = arith.constant 0 : i32
    %c0_i32_1 = arith.constant 0 : i32
    return %c0_i32, %c0_i32_0 : i32, i32
  }
  func.func @transform_2(%arg0: i32) -> (i32, i32) {
    %c0_i32 = arith.constant 0 : i32
    %c0_i32_0 = arith.constant 0 : i32
    %c0_i32_1 = arith.constant 0 : i32
    return %c0_i32, %c0_i32_0 : i32, i32
  }
  func.func @transform_3(%arg0: i32) -> (i32, i32) {
    %c0_i32 = arith.constant 0 : i32
    %c0_i32_0 = arith.constant 0 : i32
    return %arg0, %c0_i32 : i32, i32
  }
}

module attributes {stable_mosaic.version = 11 : i64} {
  func.func @_time_mlp_kernel(%arg0: memref<8x1xf32, #tpu.memory_space<vmem>>, %arg1: memref<1x64xf32, #tpu.memory_space<vmem>>, %arg2: memref<128x512xf32, #tpu.memory_space<vmem>>, %arg3: memref<1x512xf32, #tpu.memory_space<vmem>>, %arg4: memref<512x768xf32, #tpu.memory_space<vmem>>, %arg5: memref<1x768xf32, #tpu.memory_space<vmem>>, %arg6: memref<8x768xf32, #tpu.memory_space<vmem>>) attributes {dimension_semantics = [], scalar_prefetch = 0 : i64, scratch_operands = 0 : i64, tpu.core_type = #tpu.core_type<tc>} {
    %c0 = arith.constant 0 : index
    %c0_0 = arith.constant 0 : index
    %0 = vector.load %arg0[%c0, %c0_0] : memref<8x1xf32, #tpu.memory_space<vmem>>, vector<8x1xf32>
    %c0_1 = arith.constant 0 : index
    %c0_2 = arith.constant 0 : index
    %1 = vector.load %arg1[%c0_1, %c0_2] : memref<1x64xf32, #tpu.memory_space<vmem>>, vector<1x64xf32>
    %2 = vector.broadcast %0 : vector<8x1xf32> to vector<8x64xf32>
    %3 = vector.broadcast %1 : vector<1x64xf32> to vector<8x64xf32>
    %4 = arith.mulf %2, %3 : vector<8x64xf32>
    %5 = math.sin %4 : vector<8x64xf32>
    %6 = math.cos %4 : vector<8x64xf32>
    %7 = tpu.concatenate %5, %6 in 1 : vector<8x64xf32>, vector<8x64xf32> -> vector<8x128xf32>
    %c0_3 = arith.constant 0 : index
    %c0_4 = arith.constant 0 : index
    %8 = vector.load %arg2[%c0_3, %c0_4] : memref<128x512xf32, #tpu.memory_space<vmem>>, vector<128x512xf32>
    %cst = arith.constant dense<0.000000e+00> : vector<8x512xf32>
    %9 = tpu.matmul %7, %8, %cst {dimension_numbers = #tpu.dot_dimension_numbers<[1], [0], [0], [1], [0, 0, 1, 1], [], []>} : vector<8x128xf32>, vector<128x512xf32>, vector<8x512xf32> -> vector<8x512xf32>
    %c0_5 = arith.constant 0 : index
    %c0_6 = arith.constant 0 : index
    %10 = vector.load %arg3[%c0_5, %c0_6] : memref<1x512xf32, #tpu.memory_space<vmem>>, vector<1x512xf32>
    %11 = vector.broadcast %10 : vector<1x512xf32> to vector<8x512xf32>
    %12 = arith.addf %9, %11 : vector<8x512xf32>
    %13 = arith.negf %12 : vector<8x512xf32>
    %14 = math.exp %13 : vector<8x512xf32>
    %cst_7 = arith.constant 1.000000e+00 : f32
    %15 = vector.broadcast %cst_7 : f32 to vector<8x512xf32>
    %16 = arith.addf %15, %14 : vector<8x512xf32>
    %17 = arith.divf %15, %16 : vector<8x512xf32>
    %18 = arith.mulf %12, %17 : vector<8x512xf32>
    %c0_8 = arith.constant 0 : index
    %c0_9 = arith.constant 0 : index
    %19 = vector.load %arg4[%c0_8, %c0_9] : memref<512x768xf32, #tpu.memory_space<vmem>>, vector<512x768xf32>
    %cst_10 = arith.constant dense<0.000000e+00> : vector<8x768xf32>
    %20 = tpu.matmul %18, %19, %cst_10 {dimension_numbers = #tpu.dot_dimension_numbers<[1], [0], [0], [1], [0, 0, 1, 1], [], []>} : vector<8x512xf32>, vector<512x768xf32>, vector<8x768xf32> -> vector<8x768xf32>
    %c0_11 = arith.constant 0 : index
    %c0_12 = arith.constant 0 : index
    %21 = vector.load %arg5[%c0_11, %c0_12] : memref<1x768xf32, #tpu.memory_space<vmem>>, vector<1x768xf32>
    %22 = vector.broadcast %21 : vector<1x768xf32> to vector<8x768xf32>
    %23 = arith.addf %20, %22 : vector<8x768xf32>
    %c0_13 = arith.constant 0 : index
    %c0_14 = arith.constant 0 : index
    %24 = vector.load %arg6[%c0_13, %c0_14] : memref<8x768xf32, #tpu.memory_space<vmem>>, vector<8x768xf32>
    tpu.vector_store %arg6[%c0_13, %c0_14], %23 {strides = array<i32>} : memref<8x768xf32, #tpu.memory_space<vmem>>, vector<8x768xf32>,
    return
  }
}

</mosaic_0001>

<llo_original>
// kernel: u_net_forward.2
$region0: #{u_net_forward.2}
  #allocation0 [shape = 'u32[]', space=smem, size = 0x4, offset = 0x4, fixed_abs, tag = 'smem constant byte address 0x4 - core index']
  #allocation1 [shape = 'u32[144,128]{1,0:T(1,128)}', space=vmem, size = 0x12000, scoped, tag = 'internal scratch']
  %s0 = inlined_call_operand.vmem [shape: f32[8,1], index: 0, kind: input, shape index: {}]
  %s1 = inlined_call_operand.vmem [shape: f32[1,64], index: 1, kind: input, shape index: {}]
  %s2 = inlined_call_operand.vmem [shape: f32[128,512], index: 2, kind: input, shape index: {}]
  %s3 = inlined_call_operand.vmem [shape: f32[1,512], index: 3, kind: input, shape index: {}]
  %s4 = inlined_call_operand.vmem [shape: f32[512,768], index: 4, kind: input, shape index: {}]
  %s5 = inlined_call_operand.vmem [shape: f32[1,768], index: 5, kind: input, shape index: {}]
  %s6 = inlined_call_operand.vmem [shape: f32[8,768], index: 6, kind: output, shape index: {}]
  %s7 = sld [smem:[#allocation0]]
  $region34: #{u_net_forward.2} parent=0
    _
  %s9 = ssub.s32 1, %s7
  %s10 = scalar_select 0, %s9, %s7
  // Predicated region
  $region2: #{u_net_forward.2} parent=0 // pred_check
    _
  $region3: #{u_net_forward.2} parent=0 // pred_check_branch
    %12 = sbr.rel (0) target = $region5
  $region4: #{u_net_forward.2} parent=0 // pred_region
    _
  $region5: #{u_net_forward.2} parent=0 // pred_fallthru
    _
  // Predicated region
  $region6: #{u_net_forward.2} parent=0 // pred_check
    _
  $region7: #{u_net_forward.2} parent=0 // pred_check_branch
    %14 = sbr.rel (0) target = $region9
  $region8: #{u_net_forward.2} parent=0 // pred_region
    _
  $region9: #{u_net_forward.2} parent=0 // pred_fallthru
    _
  // Predicated region
  $region10: #{u_net_forward.2} parent=0 // pred_check
    _
  $region11: #{u_net_forward.2} parent=0 // pred_check_branch
    %16 = sbr.rel (0) target = $region13
  $region12: #{u_net_forward.2} parent=0 // pred_region
    _
  $region13: #{u_net_forward.2} parent=0 // pred_fallthru
    _
  // Predicated region
  $region14: #{u_net_forward.2} parent=0 // pred_check
    _
  $region15: #{u_net_forward.2} parent=0 // pred_check_branch
    %18 = sbr.rel (0) target = $region17
  $region16: #{u_net_forward.2} parent=0 // pred_region
    _
  $region17: #{u_net_forward.2} parent=0 // pred_fallthru
    _
  // Predicated region
  $region18: #{u_net_forward.2} parent=0 // pred_check
    _
  $region19: #{u_net_forward.2} parent=0 // pred_check_branch
    %20 = sbr.rel (0) target = $region21
  $region20: #{u_net_forward.2} parent=0 // pred_region
    _
  $region21: #{u_net_forward.2} parent=0 // pred_fallthru
    _
  // Predicated region
  $region22: #{u_net_forward.2} parent=0 // pred_check
    _
  $region23: #{u_net_forward.2} parent=0 // pred_check_branch
    %22 = sbr.rel (0) target = $region25
  $region24: #{u_net_forward.2} parent=0 // pred_region
    _
  $region25: #{u_net_forward.2} parent=0 // pred_fallthru
    _
  %v23 = vld [vmem:[%s0] sm:$0xff]
  %v24 = vld [vmem:[%s1] sm:$0x1]
  %26 = vset.pattern.permute.xlu0 0
  %27 = vperm.xlu0 %26, %v23
  %v28 = vpop.permute.xlu0 %27
  %v31 = vlaneseq
  %v32 = vshrl.u32 %v31, 7
  %v33 = vsub.s32 0, %v32
  %v34 = vrot.slane %v24, %v33
  %v36 = vmul.f32 %v28, %v34
  %v37 = vand.u32 2147483647, %v36
  %vm38 = vcmp.le.f32.partialorder %v37, 0.7853982
  %vm39 = vcmp.lt.s32.totalorder %v36, 0
  %v40 = vand.u32 %v36, 2139095040
  %v41 = vshrl.u32 %v40, 23
  %v42 = vsub.s32 %v41, 127
  %v43 = vand.u32 2147483647, %v36
  %v44 = vand.u32 %v43, 8388607
  %v45 = vor.u32 %v44, 8388608
  %v46 = vsub.s32 0, %v45
  %v47 = vadd.s32 %v42, 1
  %vm48 = vcmp.gt.s32.totalorder %v47, 0
  %v49 = vsel %vm48, %v47, 0
  %v50 = vshrl.u32 %v49, 5
  %v51 = vand.u32 %v49, 31
  %v52 = vsub.s32 32, %v51
  %v53 = vshrl.u32 683565275, %v52
  %v54 = vshll.u32 683565275, %v51
  %v55 = vshrl.u32 2475754826, %v52
  %v56 = vor.u32 %v54, %v55
  %v57 = vshll.u32 2475754826, %v51
  %v58 = vshrl.u32 2131351028, %v52
  %v59 = vor.u32 %v57, %v58
  %v60 = vshll.u32 2131351028, %v51
  %v61 = vshrl.u32 2102212464, %v52
  %v62 = vor.u32 %v60, %v61
  %v63 = vshll.u32 2102212464, %v51
  %v64 = vshrl.u32 920167782, %v52
  %v65 = vor.u32 %v63, %v64
  %v66 = vshll.u32 920167782, %v51
  %v67 = vshrl.u32 1326507024, %v52
  %v68 = vor.u32 %v66, %v67
  %vm69 = vcmp.lt.s32.totalorder %v50, 1
  %vm70 = vcmp.lt.s32.totalorder %v50, 2
  %vm71 = vcmp.lt.s32.totalorder %v50, 3
  %vm72 = vcmp.lt.s32.totalorder %v50, 4
  %v73 = vsel %vm69, %v53, %v56
  %v74 = vsel %vm72, %v62, 2102212464
  %v75 = vsel %vm71, %v59, %v74
  %v76 = vsel %vm70, %v73, %v75
  %v77 = vsel %vm69, %v56, %v59
  %v78 = vsel %vm72, %v65, 920167782
  %v79 = vsel %vm71, %v62, %v78
  %v80 = vsel %vm70, %v77, %v79
  %v81 = vsel %vm69, %v59, %v62
  %v82 = vsel %vm72, %v68, 1326507024
  %v83 = vsel %vm71, %v65, %v82
  %v84 = vsel %vm70, %v81, %v83
  %v85 = vshll.u32 %v45, 8
  %v86 = vmul.u32.u64.compose %v85, %v84
  %v87 = vextract.low.u32 %v86
  %v88 = vextract.high.u32 %v86
  %v89 = vmul.u32.u64.compose %v85, %v80
  %v90 = vextract.low.u32 %v89
  %v91 = vextract.high.u32 %v89
  %v92 = vmul.u32 %v85, %v76
  %v93 = vadd.s32 %v88, %v90
  %vm94 = vc.u32 %v88, %v90
  %v95 = vadd.s32 %v91, 1
  %v96 = vsel %vm94, %v95, %v91
  %v97 = vadd.s32 %v92, %v96
  %v98 = vadd.s32 %v97, 536870912
  %v99 = vshrl.u32 %v98, 30
  %v100 = vshll.u32 %v99, 30
  %v101 = vsub.s32 %v97, %v100
  %vm102 = vcmp.lt.s32.totalorder %v101, 0
  %v103 = vsub.s32 0, %v101
  %v104 = vsel %vm102, %v103, %v101
  %v105 = vclz %v104
  %v106 = vsub.s32 %v105, 2
  %vm107 = vcmp.gt.s32.totalorder 0, %v106
  %v108 = vsel %vm107, 0, %v106
  %v109 = vsub.s32 32, %v108
  %v110 = vshll.u32 %v101, %v108
  %v111 = vshrl.u32 %v93, %v109
  %v112 = vor.u32 %v110, %v111
  %v113 = vsub.s32 4294967266, %v108
  %v114 = vadd.s32 %v113, 127
  %v115 = vshll.u32 %v114, 23
  %v116 = vor.u32 4788187, %v115
  %v117 = vand.u32 2147483647, %v116
  %v119 = vcvt.s32.f32 %v112
  %v120 = vmul.f32 %v119, %v117
  %v121 = vxor.u32 %v120, 2147483648
  %v122 = vsel %vm39, %v121, %v120
  %v123 = vsub.s32 4, %v99
  %v124 = vsel %vm39, %v123, %v99
  %v125 = vsel %vm38, %v36, %v122
  %v126 = vsel %vm38, 0, %v124
  %v127 = vcosq.f32.pop %v125
  %v128 = vsinq.f32.pop %v125
  %vm129 = vweird.f32 %v36
  %v130 = vadd.s32 %v126, 3
  %v131 = vand.u32 %v130, 3
  %vm132 = vcmp.lt.s32.totalorder %v131, 2
  %vm133 = vcmp.eq.s32.totalorder %v131, 0
  %v134 = vxor.u32 %v128, 2147483648
  %v135 = vsel %vm133, %v127, %v134
  %vm136 = vcmp.eq.s32.totalorder %v131, 2
  %v137 = vxor.u32 %v127, 2147483648
  %v138 = vsel %vm136, %v137, %v128
  %v139 = vsel %vm132, %v135, %v138
  %v140 = vsel %vm129, nan, %v139
  %v141 = vand.u32 2147483647, %v36
  %vm142 = vcmp.le.f32.partialorder %v141, 0.7853982
  %vm143 = vcmp.lt.s32.totalorder %v36, 0
  %v144 = vand.u32 %v36, 2139095040
  %v145 = vshrl.u32 %v144, 23
  %v146 = vsub.s32 %v145, 127
  %v147 = vand.u32 2147483647, %v36
  %v148 = vand.u32 %v147, 8388607
  %v149 = vor.u32 %v148, 8388608
  %v150 = vsub.s32 0, %v149
  %v151 = vadd.s32 %v146, 1
  %vm152 = vcmp.gt.s32.totalorder %v151, 0
  %v153 = vsel %vm152, %v151, 0
  %v154 = vshrl.u32 %v153, 5
  %v155 = vand.u32 %v153, 31
  %v156 = vsub.s32 32, %v155
  %v157 = vshrl.u32 683565275, %v156
  %v158 = vshll.u32 683565275, %v155
  %v159 = vshrl.u32 2475754826, %v156
  %v160 = vor.u32 %v158, %v159
  %v161 = vshll.u32 2475754826, %v155
  %v162 = vshrl.u32 2131351028, %v156
  %v163 = vor.u32 %v161, %v162
  %v164 = vshll.u32 2131351028, %v155
  %v165 = vshrl.u32 2102212464, %v156
  %v166 = vor.u32 %v164, %v165
  %v167 = vshll.u32 2102212464, %v155
  %v168 = vshrl.u32 920167782, %v156
  %v169 = vor.u32 %v167, %v168
  %v170 = vshll.u32 920167782, %v155
  %v171 = vshrl.u32 1326507024, %v156
  %v172 = vor.u32 %v170, %v171
  %vm173 = vcmp.lt.s32.totalorder %v154, 1
  %vm174 = vcmp.lt.s32.totalorder %v154, 2
  %vm175 = vcmp.lt.s32.totalorder %v154, 3
  %vm176 = vcmp.lt.s32.totalorder %v154, 4
  %v177 = vsel %vm173, %v157, %v160
  %v178 = vsel %vm176, %v166, 2102212464
  %v179 = vsel %vm175, %v163, %v178
  %v180 = vsel %vm174, %v177, %v179
  %v181 = vsel %vm173, %v160, %v163
  %v182 = vsel %vm176, %v169, 920167782
  %v183 = vsel %vm175, %v166, %v182
  %v184 = vsel %vm174, %v181, %v183
  %v185 = vsel %vm173, %v163, %v166
  %v186 = vsel %vm176, %v172, 1326507024
  %v187 = vsel %vm175, %v169, %v186
  %v188 = vsel %vm174, %v185, %v187
  %v189 = vshll.u32 %v149, 8
  %v190 = vmul.u32.u64.compose %v189, %v188
  %v191 = vextract.low.u32 %v190
  %v192 = vextract.high.u32 %v190
  %v193 = vmul.u32.u64.compose %v189, %v184
  %v194 = vextract.low.u32 %v193
  %v195 = vextract.high.u32 %v193
  %v196 = vmul.u32 %v189, %v180
  %v197 = vadd.s32 %v192, %v194
  %vm198 = vc.u32 %v192, %v194
  %v199 = vadd.s32 %v195, 1
  %v200 = vsel %vm198, %v199, %v195
  %v201 = vadd.s32 %v196, %v200
  %v202 = vadd.s32 %v201, 536870912
  %v203 = vshrl.u32 %v202, 30
  %v204 = vshll.u32 %v203, 30
  %v205 = vsub.s32 %v201, %v204
  %vm206 = vcmp.lt.s32.totalorder %v205, 0
  %v207 = vsub.s32 0, %v205
  %v208 = vsel %vm206, %v207, %v205
  %v209 = vclz %v208
  %v210 = vsub.s32 %v209, 2
  %vm211 = vcmp.gt.s32.totalorder 0, %v210
  %v212 = vsel %vm211, 0, %v210
  %v213 = vsub.s32 32, %v212
  %v214 = vshll.u32 %v205, %v212
  %v215 = vshrl.u32 %v197, %v213
  %v216 = vor.u32 %v214, %v215
  %v217 = vsub.s32 4294967266, %v212
  %v218 = vadd.s32 %v217, 127
  %v219 = vshll.u32 %v218, 23
  %v220 = vor.u32 4788187, %v219
  %v221 = vand.u32 2147483647, %v220
  %v223 = vcvt.s32.f32 %v216
  %v224 = vmul.f32 %v223, %v221
  %v225 = vxor.u32 %v224, 2147483648
  %v226 = vsel %vm143, %v225, %v224
  %v227 = vsub.s32 4, %v203
  %v228 = vsel %vm143, %v227, %v203
  %v229 = vsel %vm142, %v36, %v226
  %v230 = vsel %vm142, 0, %v228
  %v231 = vcosq.f32.pop %v229
  %v232 = vsinq.f32.pop %v229
  %vm233 = vweird.f32 %v36
  %v234 = vand.u32 %v230, 3
  %vm235 = vcmp.lt.s32.totalorder %v234, 2
  %vm236 = vcmp.eq.s32.totalorder %v234, 0
  %v237 = vxor.u32 %v232, 2147483648
  %v238 = vsel %vm236, %v231, %v237
  %vm239 = vcmp.eq.s32.totalorder %v234, 2
  %v240 = vxor.u32 %v231, 2147483648
  %v241 = vsel %vm239, %v240, %v232
  %v242 = vsel %vm235, %v238, %v241
  %v243 = vsel %vm233, nan, %v242
  %245 = vrot.lane.b32.xlu0 %v243, 64
  %v246 = vpop.permute.xlu0 %245
  %vm248 = vcmask 523264
  %v249 = vsel %vm248, %v140, %v246
  %v250 = vld [vmem:[%s2] sm:$0xff]
  %v251 = vld [vmem:[%s2 + $0x8] sm:$0xff]
  %v252 = vld [vmem:[%s2 + $0x10] sm:$0xff]
  %v253 = vld [vmem:[%s2 + $0x18] sm:$0xff]
  %v254 = vld [vmem:[%s2 + $0x20] sm:$0xff]
  %v255 = vld [vmem:[%s2 + $0x28] sm:$0xff]
  %v256 = vld [vmem:[%s2 + $0x30] sm:$0xff]
  %v257 = vld [vmem:[%s2 + $0x38] sm:$0xff]
  %v258 = vld [vmem:[%s2 + $0x40] sm:$0xff]
  %v259 = vld [vmem:[%s2 + $0x48] sm:$0xff]
  %v260 = vld [vmem:[%s2 + $0x50] sm:$0xff]
  %v261 = vld [vmem:[%s2 + $0x58] sm:$0xff]
  %v262 = vld [vmem:[%s2 + $0x60] sm:$0xff]
  %v263 = vld [vmem:[%s2 + $0x68] sm:$0xff]
  %v264 = vld [vmem:[%s2 + $0x70] sm:$0xff]
  %v265 = vld [vmem:[%s2 + $0x78] sm:$0xff]
  %v266 = vld [vmem:[%s2 + $0x80] sm:$0xff]
  %v267 = vld [vmem:[%s2 + $0x88] sm:$0xff]
  %v268 = vld [vmem:[%s2 + $0x90] sm:$0xff]
  %v269 = vld [vmem:[%s2 + $0x98] sm:$0xff]
  %v270 = vld [vmem:[%s2 + $0xa0] sm:$0xff]
  %v271 = vld [vmem:[%s2 + $0xa8] sm:$0xff]
  %v272 = vld [vmem:[%s2 + $0xb0] sm:$0xff]
  %v273 = vld [vmem:[%s2 + $0xb8] sm:$0xff]
  %v274 = vld [vmem:[%s2 + $0xc0] sm:$0xff]
  %v275 = vld [vmem:[%s2 + $0xc8] sm:$0xff]
  %v276 = vld [vmem:[%s2 + $0xd0] sm:$0xff]
  %v277 = vld [vmem:[%s2 + $0xd8] sm:$0xff]
  %v278 = vld [vmem:[%s2 + $0xe0] sm:$0xff]
  %v279 = vld [vmem:[%s2 + $0xe8] sm:$0xff]
  %v280 = vld [vmem:[%s2 + $0xf0] sm:$0xff]
  %v281 = vld [vmem:[%s2 + $0xf8] sm:$0xff]
  %v282 = vld [vmem:[%s2 + $0x100] sm:$0xff]
  %v283 = vld [vmem:[%s2 + $0x108] sm:$0xff]
  %v284 = vld [vmem:[%s2 + $0x110] sm:$0xff]
  %v285 = vld [vmem:[%s2 + $0x118] sm:$0xff]
  %v286 = vld [vmem:[%s2 + $0x120] sm:$0xff]
  %v287 = vld [vmem:[%s2 + $0x128] sm:$0xff]
  %v288 = vld [vmem:[%s2 + $0x130] sm:$0xff]
  %v289 = vld [vmem:[%s2 + $0x138] sm:$0xff]
  %v290 = vld [vmem:[%s2 + $0x140] sm:$0xff]
  %v291 = vld [vmem:[%s2 + $0x148] sm:$0xff]
  %v292 = vld [vmem:[%s2 + $0x150] sm:$0xff]
  %v293 = vld [vmem:[%s2 + $0x158] sm:$0xff]
  %v294 = vld [vmem:[%s2 + $0x160] sm:$0xff]
  %v295 = vld [vmem:[%s2 + $0x168] sm:$0xff]
  %v296 = vld [vmem:[%s2 + $0x170] sm:$0xff]
  %v297 = vld [vmem:[%s2 + $0x178] sm:$0xff]
  %v298 = vld [vmem:[%s2 + $0x180] sm:$0xff]
  %v299 = vld [vmem:[%s2 + $0x188] sm:$0xff]
  %v300 = vld [vmem:[%s2 + $0x190] sm:$0xff]
  %v301 = vld [vmem:[%s2 + $0x198] sm:$0xff]
  %v302 = vld [vmem:[%s2 + $0x1a0] sm:$0xff]
  %v303 = vld [vmem:[%s2 + $0x1a8] sm:$0xff]
  %v304 = vld [vmem:[%s2 + $0x1b0] sm:$0xff]
  %v305 = vld [vmem:[%s2 + $0x1b8] sm:$0xff]
  %v306 = vld [vmem:[%s2 + $0x1c0] sm:$0xff]
  %v307 = vld [vmem:[%s2 + $0x1c8] sm:$0xff]
  %v308 = vld [vmem:[%s2 + $0x1d0] sm:$0xff]
  %v309 = vld [vmem:[%s2 + $0x1d8] sm:$0xff]
  %v310 = vld [vmem:[%s2 + $0x1e0] sm:$0xff]
  %v311 = vld [vmem:[%s2 + $0x1e8] sm:$0xff]
  %v312 = vld [vmem:[%s2 + $0x1f0] sm:$0xff]
  %v313 = vld [vmem:[%s2 + $0x1f8] sm:$0xff]
  %v314 = vld [vmem:[%s3] sm:$0xf]
  %v316 = vlaneseq
  %v317 = vshrl.u32 %v316, 7
  %v318 = vsub.s32 0, %v317
  %v319 = vrot.slane %v314, %v318
  %v320 = vlaneseq
  %v321 = vshrl.u32 %v320, 7
  %v322 = vsub.s32 1, %v321
  %v323 = vrot.slane %v314, %v322
  %v324 = vlaneseq
  %v325 = vshrl.u32 %v324, 7
  %v326 = vsub.s32 2, %v325
  %v327 = vrot.slane %v314, %v326
  %v328 = vlaneseq
  %v329 = vshrl.u32 %v328, 7
  %v330 = vsub.s32 3, %v329
  %v331 = vrot.slane %v314, %v330
  %336 = vmatprep.subr.mxu0 %v251
  %337 = vmatpush1.msra.mxu0 %v250
  %338 = vmatprep.subr.mxu0 %v255
  %339 = vmatpush1.msra.mxu0 %v254
  %340 = vmatprep.subr.mxu0 %v259
  %341 = vmatpush1.msra.mxu0 %v258
  %342 = vmatprep.subr.mxu0 %v263
  %343 = vmatpush1.msra.mxu0 %v262
  %344 = vmatprep.subr.mxu0 %v267
  %345 = vmatpush1.msra.mxu0 %v266
  %346 = vmatprep.subr.mxu0 %v271
  %347 = vmatpush1.msra.mxu0 %v270
  %348 = vmatprep.subr.mxu0 %v275
  %349 = vmatpush1.msra.mxu0 %v274
  %350 = vmatprep.subr.mxu0 %v279
  %351 = vmatpush1.msra.mxu0 %v278
  %352 = vmatprep.subr.mxu0 %v283
  %353 = vmatpush1.msra.mxu0 %v282
  %354 = vmatprep.subr.mxu0 %v287
  %355 = vmatpush1.msra.mxu0 %v286
  %356 = vmatprep.subr.mxu0 %v291
  %357 = vmatpush1.msra.mxu0 %v290
  %358 = vmatprep.subr.mxu0 %v295
  %359 = vmatpush1.msra.mxu0 %v294
  %360 = vmatprep.subr.mxu0 %v299
  %361 = vmatpush1.msra.mxu0 %v298
  %362 = vmatprep.subr.mxu0 %v303
  %363 = vmatpush1.msra.mxu0 %v302
  %364 = vmatprep.subr.mxu0 %v307
  %365 = vmatpush1.msra.mxu0 %v306
  %366 = vmatprep.subr.mxu0 %v311
  %367 = vmatpush1.msra.mxu0 %v310
  %368 = vmatprep.subr.mxu0 0.0
  %369 = vmatpush1.msra.mxu0 0.0
  %370 = vmatprep.subr.mxu0 0.0
  %371 = vmatpush1.msra.mxu0 0.0
  %372 = vmatprep.subr.mxu0 0.0
  %373 = vmatpush1.msra.mxu0 0.0
  %374 = vmatprep.subr.mxu0 0.0
  %375 = vmatpush1.msra.mxu0 0.0
  %376 = vmatprep.subr.mxu0 0.0
  %377 = vmatpush1.msra.mxu0 0.0
  %378 = vmatprep.subr.mxu0 0.0
  %379 = vmatpush1.msra.mxu0 0.0
  %380 = vmatprep.subr.mxu0 0.0
  %381 = vmatpush1.msra.mxu0 0.0
  %382 = vmatprep.subr.mxu0 0.0
  %383 = vmatpush1.msra.mxu0 0.0
  %384 = vmatprep.subr.mxu0 0.0
  %385 = vmatpush1.msra.mxu0 0.0
  %386 = vmatprep.subr.mxu0 0.0
  %387 = vmatpush1.msra.mxu0 0.0
  %388 = vmatprep.subr.mxu0 0.0
  %389 = vmatpush1.msra.mxu0 0.0
  %390 = vmatprep.subr.mxu0 0.0
  %391 = vmatpush1.msra.mxu0 0.0
  %392 = vmatprep.subr.mxu0 0.0
  %393 = vmatpush1.msra.mxu0 0.0
  %394 = vmatprep.subr.mxu0 0.0
  %395 = vmatpush1.msra.mxu0 0.0
  %396 = vmatprep.subr.mxu0 0.0
  %397 = vmatpush1.msra.mxu0 0.0
  %398 = vmatprep.subr.mxu0 0.0
  %399 = vmatpush1.msra.mxu0 0.0
  %400 = vmatprep.mubr.f32.mxu0 0.0
  %401 = vmatmul.mubr.f32.gmra.mrb[0].mxu0 %v249
  %v402 = vpop.f32.mrb[0].mxu0
  %v403 = vadd.f32 %v319, %v402
  %v404 = vpop.f32.mrb[0].mxu0
  %v405 = vadd.f32 %v323, %v404
  %406 = vdwg.mxu0
  %407 = vmatprep.subr.mxu0 %v253
  %408 = vmatpush1.msra.mxu0 %v252
  %409 = vmatprep.subr.mxu0 %v257
  %410 = vmatpush1.msra.mxu0 %v256
  %411 = vmatprep.subr.mxu0 %v261
  %412 = vmatpush1.msra.mxu0 %v260
  %413 = vmatprep.subr.mxu0 %v265
  %414 = vmatpush1.msra.mxu0 %v264
  %415 = vmatprep.subr.mxu0 %v269
  %416 = vmatpush1.msra.mxu0 %v268
  %417 = vmatprep.subr.mxu0 %v273
  %418 = vmatpush1.msra.mxu0 %v272
  %419 = vmatprep.subr.mxu0 %v277
  %420 = vmatpush1.msra.mxu0 %v276
  %421 = vmatprep.subr.mxu0 %v281
  %422 = vmatpush1.msra.mxu0 %v280
  %423 = vmatprep.subr.mxu0 %v285
  %424 = vmatpush1.msra.mxu0 %v284
  %425 = vmatprep.subr.mxu0 %v289
  %426 = vmatpush1.msra.mxu0 %v288
  %427 = vmatprep.subr.mxu0 %v293
  %428 = vmatpush1.msra.mxu0 %v292
  %429 = vmatprep.subr.mxu0 %v297
  %430 = vmatpush1.msra.mxu0 %v296
  %431 = vmatprep.subr.mxu0 %v301
  %432 = vmatpush1.msra.mxu0 %v300
  %433 = vmatprep.subr.mxu0 %v305
  %434 = vmatpush1.msra.mxu0 %v304
  %435 = vmatprep.subr.mxu0 %v309
  %436 = vmatpush1.msra.mxu0 %v308
  %437 = vmatprep.subr.mxu0 %v313
  %438 = vmatpush1.msra.mxu0 %v312
  %439 = vmatprep.subr.mxu0 0.0
  %440 = vmatpush1.msra.mxu0 0.0
  %441 = vmatprep.subr.mxu0 0.0
  %442 = vmatpush1.msra.mxu0 0.0
  %443 = vmatprep.subr.mxu0 0.0
  %444 = vmatpush1.msra.mxu0 0.0
  %445 = vmatprep.subr.mxu0 0.0
  %446 = vmatpush1.msra.mxu0 0.0
  %447 = vmatprep.subr.mxu0 0.0
  %448 = vmatpush1.msra.mxu0 0.0
  %449 = vmatprep.subr.mxu0 0.0
  %450 = vmatpush1.msra.mxu0 0.0
  %451 = vmatprep.subr.mxu0 0.0
  %452 = vmatpush1.msra.mxu0 0.0
  %453 = vmatprep.subr.mxu0 0.0
  %454 = vmatpush1.msra.mxu0 0.0
  %455 = vmatprep.subr.mxu0 0.0
  %456 = vmatpush1.msra.mxu0 0.0
  %457 = vmatprep.subr.mxu0 0.0
  %458 = vmatpush1.msra.mxu0 0.0
  %459 = vmatprep.subr.mxu0 0.0
  %460 = vmatpush1.msra.mxu0 0.0
  %461 = vmatprep.subr.mxu0 0.0
  %462 = vmatpush1.msra.mxu0 0.0
  %463 = vmatprep.subr.mxu0 0.0
  %464 = vmatpush1.msra.mxu0 0.0
  %465 = vmatprep.subr.mxu0 0.0
  %466 = vmatpush1.msra.mxu0 0.0
  %467 = vmatprep.subr.mxu0 0.0
  %468 = vmatpush1.msra.mxu0 0.0
  %469 = vmatprep.subr.mxu0 0.0
  %470 = vmatpush1.msra.mxu0 0.0
  %471 = vmatprep.mubr.f32.mxu0 0.0
  %472 = vmatmul.mubr.f32.gmra.mrb[0].mxu0 %v249
  %v473 = vpop.f32.mrb[0].mxu0
  %v474 = vadd.f32 %v327, %v473
  %v475 = vpop.f32.mrb[0].mxu0
  %v476 = vadd.f32 %v331, %v475
  %477 = vdwg.mxu0
  %v478 = vxor.u32 %v403, 2147483648
  %v479 = vxor.u32 %v405, 2147483648
  %v480 = vxor.u32 %v474, 2147483648
  %v481 = vxor.u32 %v476, 2147483648
  %v482 = vmul.f32 %v478, 1.442695
  %v483 = vpow.pop %v482
  %v484 = vmul.f32 %v479, 1.442695
  %v485 = vpow.pop %v484
  %v486 = vmul.f32 %v480, 1.442695
  %v487 = vpow.pop %v486
  %v488 = vmul.f32 %v481, 1.442695
  %v489 = vpow.pop %v488
  %v490 = vadd.f32 %v483, 1.0
  %v491 = vadd.f32 %v485, 1.0
  %v492 = vadd.f32 %v487, 1.0
  %v493 = vadd.f32 %v489, 1.0
  %v494 = vrcp.pop %v490
  %v495 = vmul.f32 1.0, %v494
  %v496 = vrcp.pop %v491
  %v497 = vmul.f32 1.0, %v496
  %v498 = vrcp.pop %v492
  %v499 = vmul.f32 1.0, %v498
  %v500 = vrcp.pop %v493
  %v501 = vmul.f32 1.0, %v500
  %v502 = vmul.f32 %v403, %v495
  %v503 = vmul.f32 %v405, %v497
  %v504 = vmul.f32 %v474, %v499
  %v505 = vmul.f32 %v476, %v501
  %v506 = vld [vmem:[%s4] sm:$0xff]
  %v507 = vld [vmem:[%s4 + $0x8] sm:$0xff]
  %v508 = vld [vmem:[%s4 + $0x10] sm:$0xff]
  %v509 = vld [vmem:[%s4 + $0x18] sm:$0xff]
  %v510 = vld [vmem:[%s4 + $0x20] sm:$0xff]
  %v511 = vld [vmem:[%s4 + $0x28] sm:$0xff]
  %v512 = vld [vmem:[%s4 + $0x30] sm:$0xff]
  %v513 = vld [vmem:[%s4 + $0x38] sm:$0xff]
  %v514 = vld [vmem:[%s4 + $0x40] sm:$0xff]
  %v515 = vld [vmem:[%s4 + $0x48] sm:$0xff]
  %v516 = vld [vmem:[%s4 + $0x50] sm:$0xff]
  %v517 = vld [vmem:[%s4 + $0x58] sm:$0xff]
  %v518 = vld [vmem:[%s4 + $0x60] sm:$0xff]
  %v519 = vld [vmem:[%s4 + $0x68] sm:$0xff]
  %v520 = vld [vmem:[%s4 + $0x70] sm:$0xff]
  %v521 = vld [vmem:[%s4 + $0x78] sm:$0xff]
  %v522 = vld [vmem:[%s4 + $0x80] sm:$0xff]
  %v523 = vld [vmem:[%s4 + $0x88] sm:$0xff]
  %v524 = vld [vmem:[%s4 + $0x90] sm:$0xff]
  %v525 = vld [vmem:[%s4 + $0x98] sm:$0xff]
  %v526 = vld [vmem:[%s4 + $0xa0] sm:$0xff]
  %v527 = vld [vmem:[%s4 + $0xa8] sm:$0xff]
  %v528 = vld [vmem:[%s4 + $0xb0] sm:$0xff]
  %v529 = vld [vmem:[%s4 + $0xb8] sm:$0xff]
  %v530 = vld [vmem:[%s4 + $0xc0] sm:$0xff]
  %v531 = vld [vmem:[%s4 + $0xc8] sm:$0xff]
  %v532 = vld [vmem:[%s4 + $0xd0] sm:$0xff]
  %v533 = vld [vmem:[%s4 + $0xd8] sm:$0xff]
  %v534 = vld [vmem:[%s4 + $0xe0] sm:$0xff]
  %v535 = vld [vmem:[%s4 + $0xe8] sm:$0xff]
  %v536 = vld [vmem:[%s4 + $0xf0] sm:$0xff]
  %v537 = vld [vmem:[%s4 + $0xf8] sm:$0xff]
  %v538 = vld [vmem:[%s4 + $0x100] sm:$0xff]
  %v539 = vld [vmem:[%s4 + $0x108] sm:$0xff]
  %v540 = vld [vmem:[%s4 + $0x110] sm:$0xff]
  %v541 = vld [vmem:[%s4 + $0x118] sm:$0xff]
  %v542 = vld [vmem:[%s4 + $0x120] sm:$0xff]
  %v543 = vld [vmem:[%s4 + $0x128] sm:$0xff]
  %v544 = vld [vmem:[%s4 + $0x130] sm:$0xff]
  %v545 = vld [vmem:[%s4 + $0x138] sm:$0xff]
  %v546 = vld [vmem:[%s4 + $0x140] sm:$0xff]
  %v547 = vld [vmem:[%s4 + $0x148] sm:$0xff]
  %v548 = vld [vmem:[%s4 + $0x150] sm:$0xff]
  %v549 = vld [vmem:[%s4 + $0x158] sm:$0xff]
  %v550 = vld [vmem:[%s4 + $0x160] sm:$0xff]
  %v551 = vld [vmem:[%s4 + $0x168] sm:$0xff]
  %v552 = vld [vmem:[%s4 + $0x170] sm:$0xff]
  %v553 = vld [vmem:[%s4 + $0x178] sm:$0xff]
  %v554 = vld [vmem:[%s4 + $0x180] sm:$0xff]
  %v555 = vld [vmem:[%s4 + $0x188] sm:$0xff]
  %v556 = vld [vmem:[%s4 + $0x190] sm:$0xff]
  %v557 = vld [vmem:[%s4 + $0x198] sm:$0xff]
  %v558 = vld [vmem:[%s4 + $0x1a0] sm:$0xff]
  %v559 = vld [vmem:[%s4 + $0x1a8] sm:$0xff]
  %v560 = vld [vmem:[%s4 + $0x1b0] sm:$0xff]
  %v561 = vld [vmem:[%s4 + $0x1b8] sm:$0xff]
  %v562 = vld [vmem:[%s4 + $0x1c0] sm:$0xff]
  %v563 = vld [vmem:[%s4 + $0x1c8] sm:$0xff]
  %v564 = vld [vmem:[%s4 + $0x1d0] sm:$0xff]
  %v565 = vld [vmem:[%s4 + $0x1d8] sm:$0xff]
  %v566 = vld [vmem:[%s4 + $0x1e0] sm:$0xff]
  %v567 = vld [vmem:[%s4 + $0x1e8] sm:$0xff]
  %v568 = vld [vmem:[%s4 + $0x1f0] sm:$0xff]
  %v569 = vld [vmem:[%s4 + $0x1f8] sm:$0xff]
  %v570 = vld [vmem:[%s4 + $0x200] sm:$0xff]
  %v571 = vld [vmem:[%s4 + $0x208] sm:$0xff]
  %v572 = vld [vmem:[%s4 + $0x210] sm:$0xff]
  %v573 = vld [vmem:[%s4 + $0x218] sm:$0xff]
  %v574 = vld [vmem:[%s4 + $0x220] sm:$0xff]
  %v575 = vld [vmem:[%s4 + $0x228] sm:$0xff]
  %v576 = vld [vmem:[%s4 + $0x230] sm:$0xff]
  %v577 = vld [vmem:[%s4 + $0x238] sm:$0xff]
  %v578 = vld [vmem:[%s4 + $0x240] sm:$0xff]
  %v579 = vld [vmem:[%s4 + $0x248] sm:$0xff]
  %v580 = vld [vmem:[%s4 + $0x250] sm:$0xff]
  %v581 = vld [vmem:[%s4 + $0x258] sm:$0xff]
  %v582 = vld [vmem:[%s4 + $0x260] sm:$0xff]
  %v583 = vld [vmem:[%s4 + $0x268] sm:$0xff]
  %v584 = vld [vmem:[%s4 + $0x270] sm:$0xff]
  %v585 = vld [vmem:[%s4 + $0x278] sm:$0xff]
  %v586 = vld [vmem:[%s4 + $0x280] sm:$0xff]
  %v587 = vld [vmem:[%s4 + $0x288] sm:$0xff]
  %v588 = vld [vmem:[%s4 + $0x290] sm:$0xff]
  %v589 = vld [vmem:[%s4 + $0x298] sm:$0xff]
  %v590 = vld [vmem:[%s4 + $0x2a0] sm:$0xff]
  %v591 = vld [vmem:[%s4 + $0x2a8] sm:$0xff]
  %v592 = vld [vmem:[%s4 + $0x2b0] sm:$0xff]
  %v593 = vld [vmem:[%s4 + $0x2b8] sm:$0xff]
  %v594 = vld [vmem:[%s4 + $0x2c0] sm:$0xff]
  %v595 = vld [vmem:[%s4 + $0x2c8] sm:$0xff]
  %v596 = vld [vmem:[%s4 + $0x2d0] sm:$0xff]
  %v597 = vld [vmem:[%s4 + $0x2d8] sm:$0xff]
  %v598 = vld [vmem:[%s4 + $0x2e0] sm:$0xff]
  %v599 = vld [vmem:[%s4 + $0x2e8] sm:$0xff]
  %v600 = vld [vmem:[%s4 + $0x2f0] sm:$0xff]
  %v601 = vld [vmem:[%s4 + $0x2f8] sm:$0xff]
  %v602 = vld [vmem:[%s4 + $0x300] sm:$0xff]
  %v603 = vld [vmem:[%s4 + $0x308] sm:$0xff]
  %v604 = vld [vmem:[%s4 + $0x310] sm:$0xff]
  %v605 = vld [vmem:[%s4 + $0x318] sm:$0xff]
  %v606 = vld [vmem:[%s4 + $0x320] sm:$0xff]
  %v607 = vld [vmem:[%s4 + $0x328] sm:$0xff]
  %v608 = vld [vmem:[%s4 + $0x330] sm:$0xff]
  %v609 = vld [vmem:[%s4 + $0x338] sm:$0xff]
  %v610 = vld [vmem:[%s4 + $0x340] sm:$0xff]
  %v611 = vld [vmem:[%s4 + $0x348] sm:$0xff]
  %v612 = vld [vmem:[%s4 + $0x350] sm:$0xff]
  %v613 = vld [vmem:[%s4 + $0x358] sm:$0xff]
  %v614 = vld [vmem:[%s4 + $0x360] sm:$0xff]
  %v615 = vld [vmem:[%s4 + $0x368] sm:$0xff]
  %v616 = vld [vmem:[%s4 + $0x370] sm:$0xff]
  %v617 = vld [vmem:[%s4 + $0x378] sm:$0xff]
  %v618 = vld [vmem:[%s4 + $0x380] sm:$0xff]
  %v619 = vld [vmem:[%s4 + $0x388] sm:$0xff]
  %v620 = vld [vmem:[%s4 + $0x390] sm:$0xff]
  %v621 = vld [vmem:[%s4 + $0x398] sm:$0xff]
  %v622 = vld [vmem:[%s4 + $0x3a0] sm:$0xff]
  %v623 = vld [vmem:[%s4 + $0x3a8] sm:$0xff]
  %v624 = vld [vmem:[%s4 + $0x3b0] sm:$0xff]
  %v625 = vld [vmem:[%s4 + $0x3b8] sm:$0xff]
  %v626 = vld [vmem:[%s4 + $0x3c0] sm:$0xff]
  %v627 = vld [vmem:[%s4 + $0x3c8] sm:$0xff]
  %v628 = vld [vmem:[%s4 + $0x3d0] sm:$0xff]
  %v629 = vld [vmem:[%s4 + $0x3d8] sm:$0xff]
  %v630 = vld [vmem:[%s4 + $0x3e0] sm:$0xff]
  %v631 = vld [vmem:[%s4 + $0x3e8] sm:$0xff]
  %v632 = vld [vmem:[%s4 + $0x3f0] sm:$0xff]
  %v633 = vld [vmem:[%s4 + $0x3f8] sm:$0xff]
  %v634 = vld [vmem:[%s4 + $0x400] sm:$0xff]
  %v635 = vld [vmem:[%s4 + $0x408] sm:$0xff]
  %v636 = vld [vmem:[%s4 + $0x410] sm:$0xff]
  %v637 = vld [vmem:[%s4 + $0x418] sm:$0xff]
  %v638 = vld [vmem:[%s4 + $0x420] sm:$0xff]
  %v639 = vld [vmem:[%s4 + $0x428] sm:$0xff]
  %v640 = vld [vmem:[%s4 + $0x430] sm:$0xff]
  %v641 = vld [vmem:[%s4 + $0x438] sm:$0xff]
  %v642 = vld [vmem:[%s4 + $0x440] sm:$0xff]
  %v643 = vld [vmem:[%s4 + $0x448] sm:$0xff]
  %v644 = vld [vmem:[%s4 + $0x450] sm:$0xff]
  %v645 = vld [vmem:[%s4 + $0x458] sm:$0xff]
  %v646 = vld [vmem:[%s4 + $0x460] sm:$0xff]
  %v647 = vld [vmem:[%s4 + $0x468] sm:$0xff]
  %v648 = vld [vmem:[%s4 + $0x470] sm:$0xff]
  %v649 = vld [vmem:[%s4 + $0x478] sm:$0xff]
  %v650 = vld [vmem:[%s4 + $0x480] sm:$0xff]
  %v651 = vld [vmem:[%s4 + $0x488] sm:$0xff]
  %v652 = vld [vmem:[%s4 + $0x490] sm:$0xff]
  %v653 = vld [vmem:[%s4 + $0x498] sm:$0xff]
  %v654 = vld [vmem:[%s4 + $0x4a0] sm:$0xff]
  %v655 = vld [vmem:[%s4 + $0x4a8] sm:$0xff]
  %v656 = vld [vmem:[%s4 + $0x4b0] sm:$0xff]
  %v657 = vld [vmem:[%s4 + $0x4b8] sm:$0xff]
  %v658 = vld [vmem:[%s4 + $0x4c0] sm:$0xff]
  %v659 = vld [vmem:[%s4 + $0x4c8] sm:$0xff]
  %v660 = vld [vmem:[%s4 + $0x4d0] sm:$0xff]
  %v661 = vld [vmem:[%s4 + $0x4d8] sm:$0xff]
  %v662 = vld [vmem:[%s4 + $0x4e0] sm:$0xff]
  %v663 = vld [vmem:[%s4 + $0x4e8] sm:$0xff]
  %v664 = vld [vmem:[%s4 + $0x4f0] sm:$0xff]
  %v665 = vld [vmem:[%s4 + $0x4f8] sm:$0xff]
  %v666 = vld [vmem:[%s4 + $0x500] sm:$0xff]
  %v667 = vld [vmem:[%s4 + $0x508] sm:$0xff]
  %v668 = vld [vmem:[%s4 + $0x510] sm:$0xff]
  %v669 = vld [vmem:[%s4 + $0x518] sm:$0xff]
  %v670 = vld [vmem:[%s4 + $0x520] sm:$0xff]
  %v671 = vld [vmem:[%s4 + $0x528] sm:$0xff]
  %v672 = vld [vmem:[%s4 + $0x530] sm:$0xff]
  %v673 = vld [vmem:[%s4 + $0x538] sm:$0xff]
  %v674 = vld [vmem:[%s4 + $0x540] sm:$0xff]
  %v675 = vld [vmem:[%s4 + $0x548] sm:$0xff]
  %v676 = vld [vmem:[%s4 + $0x550] sm:$0xff]
  %v677 = vld [vmem:[%s4 + $0x558] sm:$0xff]
  %v678 = vld [vmem:[%s4 + $0x560] sm:$0xff]
  %v679 = vld [vmem:[%s4 + $0x568] sm:$0xff]
  %v680 = vld [vmem:[%s4 + $0x570] sm:$0xff]
  %v681 = vld [vmem:[%s4 + $0x578] sm:$0xff]
  %v682 = vld [vmem:[%s4 + $0x580] sm:$0xff]
  %v683 = vld [vmem:[%s4 + $0x588] sm:$0xff]
  %v684 = vld [vmem:[%s4 + $0x590] sm:$0xff]
  %v685 = vld [vmem:[%s4 + $0x598] sm:$0xff]
  %v686 = vld [vmem:[%s4 + $0x5a0] sm:$0xff]
  %v687 = vld [vmem:[%s4 + $0x5a8] sm:$0xff]
  %v688 = vld [vmem:[%s4 + $0x5b0] sm:$0xff]
  %v689 = vld [vmem:[%s4 + $0x5b8] sm:$0xff]
  %v690 = vld [vmem:[%s4 + $0x5c0] sm:$0xff]
  %v691 = vld [vmem:[%s4 + $0x5c8] sm:$0xff]
  %v692 = vld [vmem:[%s4 + $0x5d0] sm:$0xff]
  %v693 = vld [vmem:[%s4 + $0x5d8] sm:$0xff]
  %v694 = vld [vmem:[%s4 + $0x5e0] sm:$0xff]
  %v695 = vld [vmem:[%s4 + $0x5e8] sm:$0xff]
  %v696 = vld [vmem:[%s4 + $0x5f0] sm:$0xff]
  %v697 = vld [vmem:[%s4 + $0x5f8] sm:$0xff]
  %v698 = vld [vmem:[%s4 + $0x600] sm:$0xff]
  %v699 = vld [vmem:[%s4 + $0x608] sm:$0xff]
  %v700 = vld [vmem:[%s4 + $0x610] sm:$0xff]
  %v701 = vld [vmem:[%s4 + $0x618] sm:$0xff]
  %v702 = vld [vmem:[%s4 + $0x620] sm:$0xff]
  %v703 = vld [vmem:[%s4 + $0x628] sm:$0xff]
  %v704 = vld [vmem:[%s4 + $0x630] sm:$0xff]
  %v705 = vld [vmem:[%s4 + $0x638] sm:$0xff]
  %v706 = vld [vmem:[%s4 + $0x640] sm:$0xff]
  %v707 = vld [vmem:[%s4 + $0x648] sm:$0xff]
  %v708 = vld [vmem:[%s4 + $0x650] sm:$0xff]
  %v709 = vld [vmem:[%s4 + $0x658] sm:$0xff]
  %v710 = vld [vmem:[%s4 + $0x660] sm:$0xff]
  %v711 = vld [vmem:[%s4 + $0x668] sm:$0xff]
  %v712 = vld [vmem:[%s4 + $0x670] sm:$0xff]
  %v713 = vld [vmem:[%s4 + $0x678] sm:$0xff]
  %v714 = vld [vmem:[%s4 + $0x680] sm:$0xff]
  %v715 = vld [vmem:[%s4 + $0x688] sm:$0xff]
  %v716 = vld [vmem:[%s4 + $0x690] sm:$0xff]
  %v717 = vld [vmem:[%s4 + $0x698] sm:$0xff]
  %v718 = vld [vmem:[%s4 + $0x6a0] sm:$0xff]
  %v719 = vld [vmem:[%s4 + $0x6a8] sm:$0xff]
  %v720 = vld [vmem:[%s4 + $0x6b0] sm:$0xff]
  %v721 = vld [vmem:[%s4 + $0x6b8] sm:$0xff]
  %v722 = vld [vmem:[%s4 + $0x6c0] sm:$0xff]
  %v723 = vld [vmem:[%s4 + $0x6c8] sm:$0xff]
  %v724 = vld [vmem:[%s4 + $0x6d0] sm:$0xff]
  %v725 = vld [vmem:[%s4 + $0x6d8] sm:$0xff]
  %v726 = vld [vmem:[%s4 + $0x6e0] sm:$0xff]
  %v727 = vld [vmem:[%s4 + $0x6e8] sm:$0xff]
  %v728 = vld [vmem:[%s4 + $0x6f0] sm:$0xff]
  %v729 = vld [vmem:[%s4 + $0x6f8] sm:$0xff]
  %v730 = vld [vmem:[%s4 + $0x700] sm:$0xff]
  %v731 = vld [vmem:[%s4 + $0x708] sm:$0xff]
  %v732 = vld [vmem:[%s4 + $0x710] sm:$0xff]
  %v733 = vld [vmem:[%s4 + $0x718] sm:$0xff]
  %v734 = vld [vmem:[%s4 + $0x720] sm:$0xff]
  %v735 = vld [vmem:[%s4 + $0x728] sm:$0xff]
  %v736 = vld [vmem:[%s4 + $0x730] sm:$0xff]
  %v737 = vld [vmem:[%s4 + $0x738] sm:$0xff]
  %v738 = vld [vmem:[%s4 + $0x740] sm:$0xff]
  %v739 = vld [vmem:[%s4 + $0x748] sm:$0xff]
  %v740 = vld [vmem:[%s4 + $0x750] sm:$0xff]
  %v741 = vld [vmem:[%s4 + $0x758] sm:$0xff]
  %v742 = vld [vmem:[%s4 + $0x760] sm:$0xff]
  %v743 = vld [vmem:[%s4 + $0x768] sm:$0xff]
  %v744 = vld [vmem:[%s4 + $0x770] sm:$0xff]
  %v745 = vld [vmem:[%s4 + $0x778] sm:$0xff]
  %v746 = vld [vmem:[%s4 + $0x780] sm:$0xff]
  %v747 = vld [vmem:[%s4 + $0x788] sm:$0xff]
  %v748 = vld [vmem:[%s4 + $0x790] sm:$0xff]
  %v749 = vld [vmem:[%s4 + $0x798] sm:$0xff]
  %v750 = vld [vmem:[%s4 + $0x7a0] sm:$0xff]
  %v751 = vld [vmem:[%s4 + $0x7a8] sm:$0xff]
  %v752 = vld [vmem:[%s4 + $0x7b0] sm:$0xff]
  %v753 = vld [vmem:[%s4 + $0x7b8] sm:$0xff]
  %v754 = vld [vmem:[%s4 + $0x7c0] sm:$0xff]
  %v755 = vld [vmem:[%s4 + $0x7c8] sm:$0xff]
  %v756 = vld [vmem:[%s4 + $0x7d0] sm:$0xff]
  %v757 = vld [vmem:[%s4 + $0x7d8] sm:$0xff]
  %v758 = vld [vmem:[%s4 + $0x7e0] sm:$0xff]
  %v759 = vld [vmem:[%s4 + $0x7e8] sm:$0xff]
  %v760 = vld [vmem:[%s4 + $0x7f0] sm:$0xff]
  %v761 = vld [vmem:[%s4 + $0x7f8] sm:$0xff]
  %v762 = vld [vmem:[%s4 + $0x800] sm:$0xff]
  %v763 = vld [vmem:[%s4 + $0x808] sm:$0xff]
  %v764 = vld [vmem:[%s4 + $0x810] sm:$0xff]
  %v765 = vld [vmem:[%s4 + $0x818] sm:$0xff]
  %v766 = vld [vmem:[%s4 + $0x820] sm:$0xff]
  %v767 = vld [vmem:[%s4 + $0x828] sm:$0xff]
  %v768 = vld [vmem:[%s4 + $0x830] sm:$0xff]
  %v769 = vld [vmem:[%s4 + $0x838] sm:$0xff]
  %v770 = vld [vmem:[%s4 + $0x840] sm:$0xff]
  %v771 = vld [vmem:[%s4 + $0x848] sm:$0xff]
  %v772 = vld [vmem:[%s4 + $0x850] sm:$0xff]
  %v773 = vld [vmem:[%s4 + $0x858] sm:$0xff]
  %v774 = vld [vmem:[%s4 + $0x860] sm:$0xff]
  %v775 = vld [vmem:[%s4 + $0x868] sm:$0xff]
  %v776 = vld [vmem:[%s4 + $0x870] sm:$0xff]
  %v777 = vld [vmem:[%s4 + $0x878] sm:$0xff]
  %v778 = vld [vmem:[%s4 + $0x880] sm:$0xff]
  %v779 = vld [vmem:[%s4 + $0x888] sm:$0xff]
  %v780 = vld [vmem:[%s4 + $0x890] sm:$0xff]
  %v781 = vld [vmem:[%s4 + $0x898] sm:$0xff]
  %v782 = vld [vmem:[%s4 + $0x8a0] sm:$0xff]
  %v783 = vld [vmem:[%s4 + $0x8a8] sm:$0xff]
  %v784 = vld [vmem:[%s4 + $0x8b0] sm:$0xff]
  %v785 = vld [vmem:[%s4 + $0x8b8] sm:$0xff]
  %v786 = vld [vmem:[%s4 + $0x8c0] sm:$0xff]
  %v787 = vld [vmem:[%s4 + $0x8c8] sm:$0xff]
  %v788 = vld [vmem:[%s4 + $0x8d0] sm:$0xff]
  %v789 = vld [vmem:[%s4 + $0x8d8] sm:$0xff]
  %v790 = vld [vmem:[%s4 + $0x8e0] sm:$0xff]
  %v791 = vld [vmem:[%s4 + $0x8e8] sm:$0xff]
  %v792 = vld [vmem:[%s4 + $0x8f0] sm:$0xff]
  %v793 = vld [vmem:[%s4 + $0x8f8] sm:$0xff]
  %v794 = vld [vmem:[%s4 + $0x900] sm:$0xff]
  %v795 = vld [vmem:[%s4 + $0x908] sm:$0xff]
  %v796 = vld [vmem:[%s4 + $0x910] sm:$0xff]
  %v797 = vld [vmem:[%s4 + $0x918] sm:$0xff]
  %v798 = vld [vmem:[%s4 + $0x920] sm:$0xff]
  %v799 = vld [vmem:[%s4 + $0x928] sm:$0xff]
  %v800 = vld [vmem:[%s4 + $0x930] sm:$0xff]
  %v801 = vld [vmem:[%s4 + $0x938] sm:$0xff]
  %v802 = vld [vmem:[%s4 + $0x940] sm:$0xff]
  %v803 = vld [vmem:[%s4 + $0x948] sm:$0xff]
  %v804 = vld [vmem:[%s4 + $0x950] sm:$0xff]
  %v805 = vld [vmem:[%s4 + $0x958] sm:$0xff]
  %v806 = vld [vmem:[%s4 + $0x960] sm:$0xff]
  %v807 = vld [vmem:[%s4 + $0x968] sm:$0xff]
  %v808 = vld [vmem:[%s4 + $0x970] sm:$0xff]
  %v809 = vld [vmem:[%s4 + $0x978] sm:$0xff]
  %v810 = vld [vmem:[%s4 + $0x980] sm:$0xff]
  %v811 = vld [vmem:[%s4 + $0x988] sm:$0xff]
  %v812 = vld [vmem:[%s4 + $0x990] sm:$0xff]
  %v813 = vld [vmem:[%s4 + $0x998] sm:$0xff]
  %v814 = vld [vmem:[%s4 + $0x9a0] sm:$0xff]
  %v815 = vld [vmem:[%s4 + $0x9a8] sm:$0xff]
  %v816 = vld [vmem:[%s4 + $0x9b0] sm:$0xff]
  %v817 = vld [vmem:[%s4 + $0x9b8] sm:$0xff]
  %v818 = vld [vmem:[%s4 + $0x9c0] sm:$0xff]
  %v819 = vld [vmem:[%s4 + $0x9c8] sm:$0xff]
  %v820 = vld [vmem:[%s4 + $0x9d0] sm:$0xff]
  %v821 = vld [vmem:[%s4 + $0x9d8] sm:$0xff]
  %v822 = vld [vmem:[%s4 + $0x9e0] sm:$0xff]
  %v823 = vld [vmem:[%s4 + $0x9e8] sm:$0xff]
  %v824 = vld [vmem:[%s4 + $0x9f0] sm:$0xff]
  %v825 = vld [vmem:[%s4 + $0x9f8] sm:$0xff]
  %v826 = vld [vmem:[%s4 + $0xa00] sm:$0xff]
  %v827 = vld [vmem:[%s4 + $0xa08] sm:$0xff]
  %v828 = vld [vmem:[%s4 + $0xa10] sm:$0xff]
  %v829 = vld [vmem:[%s4 + $0xa18] sm:$0xff]
  %v830 = vld [vmem:[%s4 + $0xa20] sm:$0xff]
  %v831 = vld [vmem:[%s4 + $0xa28] sm:$0xff]
  %v832 = vld [vmem:[%s4 + $0xa30] sm:$0xff]
  %v833 = vld [vmem:[%s4 + $0xa38] sm:$0xff]
  %v834 = vld [vmem:[%s4 + $0xa40] sm:$0xff]
  %v835 = vld [vmem:[%s4 + $0xa48] sm:$0xff]
  %v836 = vld [vmem:[%s4 + $0xa50] sm:$0xff]
  %v837 = vld [vmem:[%s4 + $0xa58] sm:$0xff]
  %v838 = vld [vmem:[%s4 + $0xa60] sm:$0xff]
  %v839 = vld [vmem:[%s4 + $0xa68] sm:$0xff]
  %v840 = vld [vmem:[%s4 + $0xa70] sm:$0xff]
  %v841 = vld [vmem:[%s4 + $0xa78] sm:$0xff]
  %v842 = vld [vmem:[%s4 + $0xa80] sm:$0xff]
  %v843 = vld [vmem:[%s4 + $0xa88] sm:$0xff]
  %v844 = vld [vmem:[%s4 + $0xa90] sm:$0xff]
  %v845 = vld [vmem:[%s4 + $0xa98] sm:$0xff]
  %v846 = vld [vmem:[%s4 + $0xaa0] sm:$0xff]
  %v847 = vld [vmem:[%s4 + $0xaa8] sm:$0xff]
  %v848 = vld [vmem:[%s4 + $0xab0] sm:$0xff]
  %v849 = vld [vmem:[%s4 + $0xab8] sm:$0xff]
  %v850 = vld [vmem:[%s4 + $0xac0] sm:$0xff]
  %v851 = vld [vmem:[%s4 + $0xac8] sm:$0xff]
  %v852 = vld [vmem:[%s4 + $0xad0] sm:$0xff]
  %v853 = vld [vmem:[%s4 + $0xad8] sm:$0xff]
  %v854 = vld [vmem:[%s4 + $0xae0] sm:$0xff]
  %v855 = vld [vmem:[%s4 + $0xae8] sm:$0xff]
  %v856 = vld [vmem:[%s4 + $0xaf0] sm:$0xff]
  %v857 = vld [vmem:[%s4 + $0xaf8] sm:$0xff]
  %v858 = vld [vmem:[%s4 + $0xb00] sm:$0xff]
  %v859 = vld [vmem:[%s4 + $0xb08] sm:$0xff]
  %v860 = vld [vmem:[%s4 + $0xb10] sm:$0xff]
  %v861 = vld [vmem:[%s4 + $0xb18] sm:$0xff]
  %v862 = vld [vmem:[%s4 + $0xb20] sm:$0xff]
  %v863 = vld [vmem:[%s4 + $0xb28] sm:$0xff]
  %v864 = vld [vmem:[%s4 + $0xb30] sm:$0xff]
  %v865 = vld [vmem:[%s4 + $0xb38] sm:$0xff]
  %v866 = vld [vmem:[%s4 + $0xb40] sm:$0xff]
  %v867 = vld [vmem:[%s4 + $0xb48] sm:$0xff]
  %v868 = vld [vmem:[%s4 + $0xb50] sm:$0xff]
  %v869 = vld [vmem:[%s4 + $0xb58] sm:$0xff]
  %v870 = vld [vmem:[%s4 + $0xb60] sm:$0xff]
  %v871 = vld [vmem:[%s4 + $0xb68] sm:$0xff]
  %v872 = vld [vmem:[%s4 + $0xb70] sm:$0xff]
  %v873 = vld [vmem:[%s4 + $0xb78] sm:$0xff]
  %v874 = vld [vmem:[%s4 + $0xb80] sm:$0xff]
  %v875 = vld [vmem:[%s4 + $0xb88] sm:$0xff]
  %v876 = vld [vmem:[%s4 + $0xb90] sm:$0xff]
  %v877 = vld [vmem:[%s4 + $0xb98] sm:$0xff]
  %v878 = vld [vmem:[%s4 + $0xba0] sm:$0xff]
  %v879 = vld [vmem:[%s4 + $0xba8] sm:$0xff]
  %v880 = vld [vmem:[%s4 + $0xbb0] sm:$0xff]
  %v881 = vld [vmem:[%s4 + $0xbb8] sm:$0xff]
  %v882 = vld [vmem:[%s4 + $0xbc0] sm:$0xff]
  %v883 = vld [vmem:[%s4 + $0xbc8] sm:$0xff]
  %v884 = vld [vmem:[%s4 + $0xbd0] sm:$0xff]
  %v885 = vld [vmem:[%s4 + $0xbd8] sm:$0xff]
  %v886 = vld [vmem:[%s4 + $0xbe0] sm:$0xff]
  %v887 = vld [vmem:[%s4 + $0xbe8] sm:$0xff]
  %v888 = vld [vmem:[%s4 + $0xbf0] sm:$0xff]
  %v889 = vld [vmem:[%s4 + $0xbf8] sm:$0xff]
  %v890 = vld [vmem:[%s5] sm:$0x3f]
  %v892 = vlaneseq
  %v893 = vshrl.u32 %v892, 7
  %v894 = vsub.s32 0, %v893
  %v895 = vrot.slane %v890, %v894
  %v896 = vlaneseq
  %v897 = vshrl.u32 %v896, 7
  %v898 = vsub.s32 1, %v897
  %v899 = vrot.slane %v890, %v898
  %v900 = vlaneseq
  %v901 = vshrl.u32 %v900, 7
  %v902 = vsub.s32 2, %v901
  %v903 = vrot.slane %v890, %v902
  %v904 = vlaneseq
  %v905 = vshrl.u32 %v904, 7
  %v906 = vsub.s32 3, %v905
  %v907 = vrot.slane %v890, %v906
  %v908 = vlaneseq
  %v909 = vshrl.u32 %v908, 7
  %v910 = vsub.s32 4, %v909
  %v911 = vrot.slane %v890, %v910
  %v912 = vlaneseq
  %v913 = vshrl.u32 %v912, 7
  %v914 = vsub.s32 5, %v913
  %v915 = vrot.slane %v890, %v914
  %922 = vmatprep.subr.mxu0 %v507
  %923 = vmatpush1.msra.mxu0 %v506
  %924 = vmatprep.subr.mxu0 %v513
  %925 = vmatpush1.msra.mxu0 %v512
  %926 = vmatprep.subr.mxu0 %v519
  %927 = vmatpush1.msra.mxu0 %v518
  %928 = vmatprep.subr.mxu0 %v525
  %929 = vmatpush1.msra.mxu0 %v524
  %930 = vmatprep.subr.mxu0 %v531
  %931 = vmatpush1.msra.mxu0 %v530
  %932 = vmatprep.subr.mxu0 %v537
  %933 = vmatpush1.msra.mxu0 %v536
  %934 = vmatprep.subr.mxu0 %v543
  %935 = vmatpush1.msra.mxu0 %v542
  %936 = vmatprep.subr.mxu0 %v549
  %937 = vmatpush1.msra.mxu0 %v548
  %938 = vmatprep.subr.mxu0 %v555
  %939 = vmatpush1.msra.mxu0 %v554
  %940 = vmatprep.subr.mxu0 %v561
  %941 = vmatpush1.msra.mxu0 %v560
  %942 = vmatprep.subr.mxu0 %v567
  %943 = vmatpush1.msra.mxu0 %v566
  %944 = vmatprep.subr.mxu0 %v573
  %945 = vmatpush1.msra.mxu0 %v572
  %946 = vmatprep.subr.mxu0 %v579
  %947 = vmatpush1.msra.mxu0 %v578
  %948 = vmatprep.subr.mxu0 %v585
  %949 = vmatpush1.msra.mxu0 %v584
  %950 = vmatprep.subr.mxu0 %v591
  %951 = vmatpush1.msra.mxu0 %v590
  %952 = vmatprep.subr.mxu0 %v597
  %953 = vmatpush1.msra.mxu0 %v596
  %954 = vmatprep.subr.mxu0 %v603
  %955 = vmatpush1.msra.mxu0 %v602
  %956 = vmatprep.subr.mxu0 %v609
  %957 = vmatpush1.msra.mxu0 %v608
  %958 = vmatprep.subr.mxu0 %v615
  %959 = vmatpush1.msra.mxu0 %v614
  %960 = vmatprep.subr.mxu0 %v621
  %961 = vmatpush1.msra.mxu0 %v620
  %962 = vmatprep.subr.mxu0 %v627
  %963 = vmatpush1.msra.mxu0 %v626
  %964 = vmatprep.subr.mxu0 %v633
  %965 = vmatpush1.msra.mxu0 %v632
  %966 = vmatprep.subr.mxu0 %v639
  %967 = vmatpush1.msra.mxu0 %v638
  %968 = vmatprep.subr.mxu0 %v645
  %969 = vmatpush1.msra.mxu0 %v644
  %970 = vmatprep.subr.mxu0 %v651
  %971 = vmatpush1.msra.mxu0 %v650
  %972 = vmatprep.subr.mxu0 %v657
  %973 = vmatpush1.msra.mxu0 %v656
  %974 = vmatprep.subr.mxu0 %v663
  %975 = vmatpush1.msra.mxu0 %v662
  %976 = vmatprep.subr.mxu0 %v669
  %977 = vmatpush1.msra.mxu0 %v668
  %978 = vmatprep.subr.mxu0 %v675
  %979 = vmatpush1.msra.mxu0 %v674
  %980 = vmatprep.subr.mxu0 %v681
  %981 = vmatpush1.msra.mxu0 %v680
  %982 = vmatprep.subr.mxu0 %v687
  %983 = vmatpush1.msra.mxu0 %v686
  %984 = vmatprep.subr.mxu0 %v693
  %985 = vmatpush1.msra.mxu0 %v692
  %986 = vmatprep.mubr.f32.mxu0 %v503
  %987 = vmatmul.mubr.f32.gmra.mrb[0].mxu0 %v502
  %v988 = vpop.f32.mrb[0].mxu0
  %v989 = vadd.f32 %v895, %v988
  %v990 = vpop.f32.mrb[0].mxu0
  %v991 = vadd.f32 %v899, %v990
  %992 = vdwg.mxu0
  %993 = vmatprep.subr.mxu0 %v699
  %994 = vmatpush1.msra.mxu0 %v698
  %995 = vmatprep.subr.mxu0 %v705
  %996 = vmatpush1.msra.mxu0 %v704
  %997 = vmatprep.subr.mxu0 %v711
  %998 = vmatpush1.msra.mxu0 %v710
  %999 = vmatprep.subr.mxu0 %v717
  %1000 = vmatpush1.msra.mxu0 %v716
  %1001 = vmatprep.subr.mxu0 %v723
  %1002 = vmatpush1.msra.mxu0 %v722
  %1003 = vmatprep.subr.mxu0 %v729
  %1004 = vmatpush1.msra.mxu0 %v728
  %1005 = vmatprep.subr.mxu0 %v735
  %1006 = vmatpush1.msra.mxu0 %v734
  %1007 = vmatprep.subr.mxu0 %v741
  %1008 = vmatpush1.msra.mxu0 %v740
  %1009 = vmatprep.subr.mxu0 %v747
  %1010 = vmatpush1.msra.mxu0 %v746
  %1011 = vmatprep.subr.mxu0 %v753
  %1012 = vmatpush1.msra.mxu0 %v752
  %1013 = vmatprep.subr.mxu0 %v759
  %1014 = vmatpush1.msra.mxu0 %v758
  %1015 = vmatprep.subr.mxu0 %v765
  %1016 = vmatpush1.msra.mxu0 %v764
  %1017 = vmatprep.subr.mxu0 %v771
  %1018 = vmatpush1.msra.mxu0 %v770
  %1019 = vmatprep.subr.mxu0 %v777
  %1020 = vmatpush1.msra.mxu0 %v776
  %1021 = vmatprep.subr.mxu0 %v783
  %1022 = vmatpush1.msra.mxu0 %v782
  %1023 = vmatprep.subr.mxu0 %v789
  %1024 = vmatpush1.msra.mxu0 %v788
  %1025 = vmatprep.subr.mxu0 %v795
  %1026 = vmatpush1.msra.mxu0 %v794
  %1027 = vmatprep.subr.mxu0 %v801
  %1028 = vmatpush1.msra.mxu0 %v800
  %1029 = vmatprep.subr.mxu0 %v807
  %1030 = vmatpush1.msra.mxu0 %v806
  %1031 = vmatprep.subr.mxu0 %v813
  %1032 = vmatpush1.msra.mxu0 %v812
  %1033 = vmatprep.subr.mxu0 %v819
  %1034 = vmatpush1.msra.mxu0 %v818
  %1035 = vmatprep.subr.mxu0 %v825
  %1036 = vmatpush1.msra.mxu0 %v824
  %1037 = vmatprep.subr.mxu0 %v831
  %1038 = vmatpush1.msra.mxu0 %v830
  %1039 = vmatprep.subr.mxu0 %v837
  %1040 = vmatpush1.msra.mxu0 %v836
  %1041 = vmatprep.subr.mxu0 %v843
  %1042 = vmatpush1.msra.mxu0 %v842
  %1043 = vmatprep.subr.mxu0 %v849
  %1044 = vmatpush1.msra.mxu0 %v848
  %1045 = vmatprep.subr.mxu0 %v855
  %1046 = vmatpush1.msra.mxu0 %v854
  %1047 = vmatprep.subr.mxu0 %v861
  %1048 = vmatpush1.msra.mxu0 %v860
  %1049 = vmatprep.subr.mxu0 %v867
  %1050 = vmatpush1.msra.mxu0 %v866
  %1051 = vmatprep.subr.mxu0 %v873
  %1052 = vmatpush1.msra.mxu0 %v872
  %1053 = vmatprep.subr.mxu0 %v879
  %1054 = vmatpush1.msra.mxu0 %v878
  %1055 = vmatprep.subr.mxu0 %v885
  %1056 = vmatpush1.msra.mxu0 %v884
  %1057 = vmatprep.mubr.f32.mxu0 %v505
  %1058 = vmatmul.mubr.f32.gmra.mrb[0].mxu0 %v504
  %v1059 = vpop.f32.mrb[0].mxu0
  %v1060 = vadd.f32 %v989, %v1059
  %v1061 = vpop.f32.mrb[0].mxu0
  %v1062 = vadd.f32 %v991, %v1061
  %1063 = vdwg.mxu0
  %1064 = vmatprep.subr.mxu0 %v509
  %1065 = vmatpush1.msra.mxu0 %v508
  %1066 = vmatprep.subr.mxu0 %v515
  %1067 = vmatpush1.msra.mxu0 %v514
  %1068 = vmatprep.subr.mxu0 %v521
  %1069 = vmatpush1.msra.mxu0 %v520
  %1070 = vmatprep.subr.mxu0 %v527
  %1071 = vmatpush1.msra.mxu0 %v526
  %1072 = vmatprep.subr.mxu0 %v533
  %1073 = vmatpush1.msra.mxu0 %v532
  %1074 = vmatprep.subr.mxu0 %v539
  %1075 = vmatpush1.msra.mxu0 %v538
  %1076 = vmatprep.subr.mxu0 %v545
  %1077 = vmatpush1.msra.mxu0 %v544
  %1078 = vmatprep.subr.mxu0 %v551
  %1079 = vmatpush1.msra.mxu0 %v550
  %1080 = vmatprep.subr.mxu0 %v557
  %1081 = vmatpush1.msra.mxu0 %v556
  %1082 = vmatprep.subr.mxu0 %v563
  %1083 = vmatpush1.msra.mxu0 %v562
  %1084 = vmatprep.subr.mxu0 %v569
  %1085 = vmatpush1.msra.mxu0 %v568
  %1086 = vmatprep.subr.mxu0 %v575
  %1087 = vmatpush1.msra.mxu0 %v574
  %1088 = vmatprep.subr.mxu0 %v581
  %1089 = vmatpush1.msra.mxu0 %v580
  %1090 = vmatprep.subr.mxu0 %v587
  %1091 = vmatpush1.msra.mxu0 %v586
  %1092 = vmatprep.subr.mxu0 %v593
  %1093 = vmatpush1.msra.mxu0 %v592
  %1094 = vmatprep.subr.mxu0 %v599
  %1095 = vmatpush1.msra.mxu0 %v598
  %1096 = vmatprep.subr.mxu0 %v605
  %1097 = vmatpush1.msra.mxu0 %v604
  %1098 = vmatprep.subr.mxu0 %v611
  %1099 = vmatpush1.msra.mxu0 %v610
  %1100 = vmatprep.subr.mxu0 %v617
  %1101 = vmatpush1.msra.mxu0 %v616
  %1102 = vmatprep.subr.mxu0 %v623
  %1103 = vmatpush1.msra.mxu0 %v622
  %1104 = vmatprep.subr.mxu0 %v629
  %1105 = vmatpush1.msra.mxu0 %v628
  %1106 = vmatprep.subr.mxu0 %v635
  %1107 = vmatpush1.msra.mxu0 %v634
  %1108 = vmatprep.subr.mxu0 %v641
  %1109 = vmatpush1.msra.mxu0 %v640
  %1110 = vmatprep.subr.mxu0 %v647
  %1111 = vmatpush1.msra.mxu0 %v646
  %1112 = vmatprep.subr.mxu0 %v653
  %1113 = vmatpush1.msra.mxu0 %v652
  %1114 = vmatprep.subr.mxu0 %v659
  %1115 = vmatpush1.msra.mxu0 %v658
  %1116 = vmatprep.subr.mxu0 %v665
  %1117 = vmatpush1.msra.mxu0 %v664
  %1118 = vmatprep.subr.mxu0 %v671
  %1119 = vmatpush1.msra.mxu0 %v670
  %1120 = vmatprep.subr.mxu0 %v677
  %1121 = vmatpush1.msra.mxu0 %v676
  %1122 = vmatprep.subr.mxu0 %v683
  %1123 = vmatpush1.msra.mxu0 %v682
  %1124 = vmatprep.subr.mxu0 %v689
  %1125 = vmatpush1.msra.mxu0 %v688
  %1126 = vmatprep.subr.mxu0 %v695
  %1127 = vmatpush1.msra.mxu0 %v694
  %1128 = vmatprep.mubr.f32.mxu0 %v503
  %1129 = vmatmul.mubr.f32.gmra.mrb[0].mxu0 %v502
  %v1130 = vpop.f32.mrb[0].mxu0
  %v1131 = vadd.f32 %v903, %v1130
  %v1132 = vpop.f32.mrb[0].mxu0
  %v1133 = vadd.f32 %v907, %v1132
  %1134 = vdwg.mxu0
  %1135 = vmatprep.subr.mxu0 %v701
  %1136 = vmatpush1.msra.mxu0 %v700
  %1137 = vmatprep.subr.mxu0 %v707
  %1138 = vmatpush1.msra.mxu0 %v706
  %1139 = vmatprep.subr.mxu0 %v713
  %1140 = vmatpush1.msra.mxu0 %v712
  %1141 = vmatprep.subr.mxu0 %v719
  %1142 = vmatpush1.msra.mxu0 %v718
  %1143 = vmatprep.subr.mxu0 %v725
  %1144 = vmatpush1.msra.mxu0 %v724
  %1145 = vmatprep.subr.mxu0 %v731
  %1146 = vmatpush1.msra.mxu0 %v730
  %1147 = vmatprep.subr.mxu0 %v737
  %1148 = vmatpush1.msra.mxu0 %v736
  %1149 = vmatprep.subr.mxu0 %v743
  %1150 = vmatpush1.msra.mxu0 %v742
  %1151 = vmatprep.subr.mxu0 %v749
  %1152 = vmatpush1.msra.mxu0 %v748
  %1153 = vmatprep.subr.mxu0 %v755
  %1154 = vmatpush1.msra.mxu0 %v754
  %1155 = vmatprep.subr.mxu0 %v761
  %1156 = vmatpush1.msra.mxu0 %v760
  %1157 = vmatprep.subr.mxu0 %v767
  %1158 = vmatpush1.msra.mxu0 %v766
  %1159 = vmatprep.subr.mxu0 %v773
  %1160 = vmatpush1.msra.mxu0 %v772
  %1161 = vmatprep.subr.mxu0 %v779
  %1162 = vmatpush1.msra.mxu0 %v778
  %1163 = vmatprep.subr.mxu0 %v785
  %1164 = vmatpush1.msra.mxu0 %v784
  %1165 = vmatprep.subr.mxu0 %v791
  %1166 = vmatpush1.msra.mxu0 %v790
  %1167 = vmatprep.subr.mxu0 %v797
  %1168 = vmatpush1.msra.mxu0 %v796
  %1169 = vmatprep.subr.mxu0 %v803
  %1170 = vmatpush1.msra.mxu0 %v802
  %1171 = vmatprep.subr.mxu0 %v809
  %1172 = vmatpush1.msra.mxu0 %v808
  %1173 = vmatprep.subr.mxu0 %v815
  %1174 = vmatpush1.msra.mxu0 %v814
  %1175 = vmatprep.subr.mxu0 %v821
  %1176 = vmatpush1.msra.mxu0 %v820
  %1177 = vmatprep.subr.mxu0 %v827
  %1178 = vmatpush1.msra.mxu0 %v826
  %1179 = vmatprep.subr.mxu0 %v833
  %1180 = vmatpush1.msra.mxu0 %v832
  %1181 = vmatprep.subr.mxu0 %v839
  %1182 = vmatpush1.msra.mxu0 %v838
  %1183 = vmatprep.subr.mxu0 %v845
  %1184 = vmatpush1.msra.mxu0 %v844
  %1185 = vmatprep.subr.mxu0 %v851
  %1186 = vmatpush1.msra.mxu0 %v850
  %1187 = vmatprep.subr.mxu0 %v857
  %1188 = vmatpush1.msra.mxu0 %v856
  %1189 = vmatprep.subr.mxu0 %v863
  %1190 = vmatpush1.msra.mxu0 %v862
  %1191 = vmatprep.subr.mxu0 %v869
  %1192 = vmatpush1.msra.mxu0 %v868
  %1193 = vmatprep.subr.mxu0 %v875
  %1194 = vmatpush1.msra.mxu0 %v874
  %1195 = vmatprep.subr.mxu0 %v881
  %1196 = vmatpush1.msra.mxu0 %v880
  %1197 = vmatprep.subr.mxu0 %v887
  %1198 = vmatpush1.msra.mxu0 %v886
  %1199 = vmatprep.mubr.f32.mxu0 %v505
  %1200 = vmatmul.mubr.f32.gmra.mrb[0].mxu0 %v504
  %v1201 = vpop.f32.mrb[0].mxu0
  %v1202 = vadd.f32 %v1131, %v1201
  %v1203 = vpop.f32.mrb[0].mxu0
  %v1204 = vadd.f32 %v1133, %v1203
  %1205 = vdwg.mxu0
  %1206 = vmatprep.subr.mxu0 %v511
  %1207 = vmatpush1.msra.mxu0 %v510
  %1208 = vmatprep.subr.mxu0 %v517
  %1209 = vmatpush1.msra.mxu0 %v516
  %1210 = vmatprep.subr.mxu0 %v523
  %1211 = vmatpush1.msra.mxu0 %v522
  %1212 = vmatprep.subr.mxu0 %v529
  %1213 = vmatpush1.msra.mxu0 %v528
  %1214 = vmatprep.subr.mxu0 %v535
  %1215 = vmatpush1.msra.mxu0 %v534
  %1216 = vmatprep.subr.mxu0 %v541
  %1217 = vmatpush1.msra.mxu0 %v540
  %1218 = vmatprep.subr.mxu0 %v547
  %1219 = vmatpush1.msra.mxu0 %v546
  %1220 = vmatprep.subr.mxu0 %v553
  %1221 = vmatpush1.msra.mxu0 %v552
  %1222 = vmatprep.subr.mxu0 %v559
  %1223 = vmatpush1.msra.mxu0 %v558
  %1224 = vmatprep.subr.mxu0 %v565
  %1225 = vmatpush1.msra.mxu0 %v564
  %1226 = vmatprep.subr.mxu0 %v571
  %1227 = vmatpush1.msra.mxu0 %v570
  %1228 = vmatprep.subr.mxu0 %v577
  %1229 = vmatpush1.msra.mxu0 %v576
  %1230 = vmatprep.subr.mxu0 %v583
  %1231 = vmatpush1.msra.mxu0 %v582
  %1232 = vmatprep.subr.mxu0 %v589
  %1233 = vmatpush1.msra.mxu0 %v588
  %1234 = vmatprep.subr.mxu0 %v595
  %1235 = vmatpush1.msra.mxu0 %v594
  %1236 = vmatprep.subr.mxu0 %v601
  %1237 = vmatpush1.msra.mxu0 %v600
  %1238 = vmatprep.subr.mxu0 %v607
  %1239 = vmatpush1.msra.mxu0 %v606
  %1240 = vmatprep.subr.mxu0 %v613
  %1241 = vmatpush1.msra.mxu0 %v612
  %1242 = vmatprep.subr.mxu0 %v619
  %1243 = vmatpush1.msra.mxu0 %v618
  %1244 = vmatprep.subr.mxu0 %v625
  %1245 = vmatpush1.msra.mxu0 %v624
  %1246 = vmatprep.subr.mxu0 %v631
  %1247 = vmatpush1.msra.mxu0 %v630
  %1248 = vmatprep.subr.mxu0 %v637
  %1249 = vmatpush1.msra.mxu0 %v636
  %1250 = vmatprep.subr.mxu0 %v643
  %1251 = vmatpush1.msra.mxu0 %v642
  %1252 = vmatprep.subr.mxu0 %v649
  %1253 = vmatpush1.msra.mxu0 %v648
  %1254 = vmatprep.subr.mxu0 %v655
  %1255 = vmatpush1.msra.mxu0 %v654
  %1256 = vmatprep.subr.mxu0 %v661
  %1257 = vmatpush1.msra.mxu0 %v660
  %1258 = vmatprep.subr.mxu0 %v667
  %1259 = vmatpush1.msra.mxu0 %v666
  %1260 = vmatprep.subr.mxu0 %v673
  %1261 = vmatpush1.msra.mxu0 %v672
  %1262 = vmatprep.subr.mxu0 %v679
  %1263 = vmatpush1.msra.mxu0 %v678
  %1264 = vmatprep.subr.mxu0 %v685
  %1265 = vmatpush1.msra.mxu0 %v684
  %1266 = vmatprep.subr.mxu0 %v691
  %1267 = vmatpush1.msra.mxu0 %v690
  %1268 = vmatprep.subr.mxu0 %v697
  %1269 = vmatpush1.msra.mxu0 %v696
  %1270 = vmatprep.mubr.f32.mxu0 %v503
  %1271 = vmatmul.mubr.f32.gmra.mrb[0].mxu0 %v502
  %v1272 = vpop.f32.mrb[0].mxu0
  %v1273 = vadd.f32 %v911, %v1272
  %v1274 = vpop.f32.mrb[0].mxu0
  %v1275 = vadd.f32 %v915, %v1274
  %1276 = vdwg.mxu0
  %1277 = vmatprep.subr.mxu0 %v703
  %1278 = vmatpush1.msra.mxu0 %v702
  %1279 = vmatprep.subr.mxu0 %v709
  %1280 = vmatpush1.msra.mxu0 %v708
  %1281 = vmatprep.subr.mxu0 %v715
  %1282 = vmatpush1.msra.mxu0 %v714
  %1283 = vmatprep.subr.mxu0 %v721
  %1284 = vmatpush1.msra.mxu0 %v720
  %1285 = vmatprep.subr.mxu0 %v727
  %1286 = vmatpush1.msra.mxu0 %v726
  %1287 = vmatprep.subr.mxu0 %v733
  %1288 = vmatpush1.msra.mxu0 %v732
  %1289 = vmatprep.subr.mxu0 %v739
  %1290 = vmatpush1.msra.mxu0 %v738
  %1291 = vmatprep.subr.mxu0 %v745
  %1292 = vmatpush1.msra.mxu0 %v744
  %1293 = vmatprep.subr.mxu0 %v751
  %1294 = vmatpush1.msra.mxu0 %v750
  %1295 = vmatprep.subr.mxu0 %v757
  %1296 = vmatpush1.msra.mxu0 %v756
  %1297 = vmatprep.subr.mxu0 %v763
  %1298 = vmatpush1.msra.mxu0 %v762
  %1299 = vmatprep.subr.mxu0 %v769
  %1300 = vmatpush1.msra.mxu0 %v768
  %1301 = vmatprep.subr.mxu0 %v775
  %1302 = vmatpush1.msra.mxu0 %v774
  %1303 = vmatprep.subr.mxu0 %v781
  %1304 = vmatpush1.msra.mxu0 %v780
  %1305 = vmatprep.subr.mxu0 %v787
  %1306 = vmatpush1.msra.mxu0 %v786
  %1307 = vmatprep.subr.mxu0 %v793
  %1308 = vmatpush1.msra.mxu0 %v792
  %1309 = vmatprep.subr.mxu0 %v799
  %1310 = vmatpush1.msra.mxu0 %v798
  %1311 = vmatprep.subr.mxu0 %v805
  %1312 = vmatpush1.msra.mxu0 %v804
  %1313 = vmatprep.subr.mxu0 %v811
  %1314 = vmatpush1.msra.mxu0 %v810
  %1315 = vmatprep.subr.mxu0 %v817
  %1316 = vmatpush1.msra.mxu0 %v816
  %1317 = vmatprep.subr.mxu0 %v823
  %1318 = vmatpush1.msra.mxu0 %v822
  %1319 = vmatprep.subr.mxu0 %v829
  %1320 = vmatpush1.msra.mxu0 %v828
  %1321 = vmatprep.subr.mxu0 %v835
  %1322 = vmatpush1.msra.mxu0 %v834
  %1323 = vmatprep.subr.mxu0 %v841
  %1324 = vmatpush1.msra.mxu0 %v840
  %1325 = vmatprep.subr.mxu0 %v847
  %1326 = vmatpush1.msra.mxu0 %v846
  %1327 = vmatprep.subr.mxu0 %v853
  %1328 = vmatpush1.msra.mxu0 %v852
  %1329 = vmatprep.subr.mxu0 %v859
  %1330 = vmatpush1.msra.mxu0 %v858
  %1331 = vmatprep.subr.mxu0 %v865
  %1332 = vmatpush1.msra.mxu0 %v864
  %1333 = vmatprep.subr.mxu0 %v871
  %1334 = vmatpush1.msra.mxu0 %v870
  %1335 = vmatprep.subr.mxu0 %v877
  %1336 = vmatpush1.msra.mxu0 %v876
  %1337 = vmatprep.subr.mxu0 %v883
  %1338 = vmatpush1.msra.mxu0 %v882
  %1339 = vmatprep.subr.mxu0 %v889
  %1340 = vmatpush1.msra.mxu0 %v888
  %1341 = vmatprep.mubr.f32.mxu0 %v505
  %1342 = vmatmul.mubr.f32.gmra.mrb[0].mxu0 %v504
  %v1343 = vpop.f32.mrb[0].mxu0
  %v1344 = vadd.f32 %v1273, %v1343
  %v1345 = vpop.f32.mrb[0].mxu0
  %v1346 = vadd.f32 %v1275, %v1345
  %1347 = vdwg.mxu0
  %1348 = vst [vmem:[%s6] sm:$0xff] %v1060
  %1349 = vst [vmem:[%s6 + $0x8] sm:$0xff] %v1062
  %1350 = vst [vmem:[%s6 + $0x10] sm:$0xff] %v1202
  %1351 = vst [vmem:[%s6 + $0x18] sm:$0xff] %v1204
  %1352 = vst [vmem:[%s6 + $0x20] sm:$0xff] %v1344
  %1353 = vst [vmem:[%s6 + $0x28] sm:$0xff] %v1346
  // Predicated region
  $region26: #{u_net_forward.2} parent=0 // pred_check
    _
  $region27: #{u_net_forward.2} parent=0 // pred_check_branch
    %1355 = sbr.rel (0) target = $region29
  $region28: #{u_net_forward.2} parent=0 // pred_region
    _
  $region29: #{u_net_forward.2} parent=0 // pred_fallthru
    _
  // Predicated region
  $region30: #{u_net_forward.2} parent=0 // pred_check
    _
  $region31: #{u_net_forward.2} parent=0 // pred_check_branch
    %1357 = sbr.rel (0) target = $region33
  $region32: #{u_net_forward.2} parent=0 // pred_region
    _
  $region33: #{u_net_forward.2} parent=0 // pred_fallthru
    _

// kernel: u_net_forward.3
$region0: #{u_net_forward.3}
  #allocation0 [shape = 'u32[]', space=smem, size = 0x4, offset = 0x4, fixed_abs, tag = 'smem constant byte address 0x4 - core index']
  #allocation1 [shape = 'u32[144,128]{1,0:T(1,128)}', space=vmem, size = 0x12000, scoped, tag = 'internal scratch']
  %s0 = inlined_call_operand.vmem [shape: bf16[512,675], index: 0, kind: input, shape index: {}]
  %s1 = inlined_call_operand.vmem [shape: bf16[675,128], index: 1, kind: input, shape index: {}]
  %s2 = inlined_call_operand.vmem [shape: f32[1,128], index: 2, kind: input, shape index: {}]
  %s3 = inlined_call_operand.hbm [shape: bf16[512,128], index: 3, kind: output, shape index: {}]
  %s4 = sld [smem:[#allocation0]]
  $region22: #{u_net_forward.3} parent=0
    _
  %s6 = ssub.s32 1, %s4
  %s7 = scalar_select 0, %s6, %s4
  $region1: #{u_net_forward.3} parent=0
    #allocation2 [shape = 'u8[131072]{0}', space=vmem, size = 0x20000, scoped, tag = 'output window, operand 0, single buffered']
    #allocation3 [shape = 's32[1]{0}', space=sflag, size = 0x4, scoped, tag = 'scoped memory for u_net_forward.3']
    %8 = vsyncpa [#allocation3], 0
    // Predicated region
    $region2: #{u_net_forward.3} parent=1 // pred_check
      _
    $region3: #{u_net_forward.3} parent=1 // pred_check_branch
      %10 = sbr.rel (0) target = $region5
    $region4: #{u_net_forward.3} parent=1 // pred_region
      _
    $region5: #{u_net_forward.3} parent=1 // pred_fallthru
      _
    // Predicated region
    $region6: #{u_net_forward.3} parent=1 // pred_check
      _
    $region7: #{u_net_forward.3} parent=1 // pred_check_branch
      %12 = sbr.rel (0) target = $region9
    $region8: #{u_net_forward.3} parent=1 // pred_region
      _
    $region9: #{u_net_forward.3} parent=1 // pred_fallthru
      _
    // Predicated region
    $region10: #{u_net_forward.3} parent=1 // pred_check
      _
    $region11: #{u_net_forward.3} parent=1 // pred_check_branch
      %14 = sbr.rel (0) target = $region13
    $region12: #{u_net_forward.3} parent=1 // pred_region
      _
    $region13: #{u_net_forward.3} parent=1 // pred_fallthru
      _
    %v16 = vld [vmem:[%s0] sm:$0xff]
    %v17 = vld [vmem:[%s0 + $0x8] sm:$0xff]
    %v18 = vld [vmem:[%s0 + $0x10] sm:$0xff]
    %v19 = vld [vmem:[%s0 + $0x18] sm:$0xff]
    %v20 = vld [vmem:[%s0 + $0x20] sm:$0xff]
    %v21 = vld [vmem:[%s0 + $0x28] sm:$0xff]
    %v22 = vld [vmem:[%s0 + $0x30] sm:$0xff]
    %v23 = vld [vmem:[%s0 + $0x38] sm:$0xff]
    %v24 = vld [vmem:[%s0 + $0x40] sm:$0xff]
    %v25 = vld [vmem:[%s0 + $0x48] sm:$0xff]
    %v26 = vld [vmem:[%s0 + $0x50] sm:$0xff]
    %v27 = vld [vmem:[%s0 + $0x58] sm:$0xff]
    %v28 = vld [vmem:[%s0 + $0x60] sm:$0xff]
    %v29 = vld [vmem:[%s0 + $0x68] sm:$0xff]
    %v30 = vld [vmem:[%s0 + $0x70] sm:$0xff]
    %v31 = vld [vmem:[%s0 + $0x78] sm:$0xff]
    %v32 = vld [vmem:[%s0 + $0x80] sm:$0xff]
    %v33 = vld [vmem:[%s0 + $0x88] sm:$0xff]
    %v34 = vld [vmem:[%s0 + $0x90] sm:$0xff]
    %v35 = vld [vmem:[%s0 + $0x98] sm:$0xff]
    %v36 = vld [vmem:[%s0 + $0xa0] sm:$0xff]
    %v37 = vld [vmem:[%s0 + $0xa8] sm:$0xff]
    %v38 = vld [vmem:[%s0 + $0xb0] sm:$0xff]
    %v39 = vld [vmem:[%s0 + $0xb8] sm:$0xff]
    %v40 = vld [vmem:[%s0 + $0xc0] sm:$0xff]
    %v41 = vld [vmem:[%s0 + $0xc8] sm:$0xff]
    %v42 = vld [vmem:[%s0 + $0xd0] sm:$0xff]
    %v43 = vld [vmem:[%s0 + $0xd8] sm:$0xff]
    %v44 = vld [vmem:[%s0 + $0xe0] sm:$0xff]
    %v45 = vld [vmem:[%s0 + $0xe8] sm:$0xff]
    %v46 = vld [vmem:[%s0 + $0xf0] sm:$0xff]
    %v47 = vld [vmem:[%s0 + $0xf8] sm:$0xff]
    %v48 = vld [vmem:[%s0 + $0x100] sm:$0xff]
    %v49 = vld [vmem:[%s0 + $0x108] sm:$0xff]
    %v50 = vld [vmem:[%s0 + $0x110] sm:$0xff]
    %v51 = vld [vmem:[%s0 + $0x118] sm:$0xff]
    %v52 = vld [vmem:[%s0 + $0x120] sm:$0xff]
    %v53 = vld [vmem:[%s0 + $0x128] sm:$0xff]
    %v54 = vld [vmem:[%s0 + $0x130] sm:$0xff]
    %v55 = vld [vmem:[%s0 + $0x138] sm:$0xff]
    %v56 = vld [vmem:[%s0 + $0x140] sm:$0xff]
    %v57 = vld [vmem:[%s0 + $0x148] sm:$0xff]
    %v58 = vld [vmem:[%s0 + $0x150] sm:$0xff]
    %v59 = vld [vmem:[%s0 + $0x158] sm:$0xff]
    %v60 = vld [vmem:[%s0 + $0x160] sm:$0xff]
    %v61 = vld [vmem:[%s0 + $0x168] sm:$0xff]
    %v62 = vld [vmem:[%s0 + $0x170] sm:$0xff]
    %v63 = vld [vmem:[%s0 + $0x178] sm:$0xff]
    %v64 = vld [vmem:[%s0 + $0x180] sm:$0xff]
    %v65 = vld [vmem:[%s0 + $0x188] sm:$0xff]
    %v66 = vld [vmem:[%s0 + $0x190] sm:$0xff]
    %v67 = vld [vmem:[%s0 + $0x198] sm:$0xff]
    %v68 = vld [vmem:[%s0 + $0x1a0] sm:$0xff]
    %v69 = vld [vmem:[%s0 + $0x1a8] sm:$0xff]
    %v70 = vld [vmem:[%s0 + $0x1b0] sm:$0xff]
    %v71 = vld [vmem:[%s0 + $0x1b8] sm:$0xff]
    %v72 = vld [vmem:[%s0 + $0x1c0] sm:$0xff]
    %v73 = vld [vmem:[%s0 + $0x1c8] sm:$0xff]
    %v74 = vld [vmem:[%s0 + $0x1d0] sm:$0xff]
    %v75 = vld [vmem:[%s0 + $0x1d8] sm:$0xff]
    %v76 = vld [vmem:[%s0 + $0x1e0] sm:$0xff]
    %v77 = vld [vmem:[%s0 + $0x1e8] sm:$0xff]
    %v78 = vld [vmem:[%s0 + $0x1f0] sm:$0xff]
    %v79 = vld [vmem:[%s0 + $0x1f8] sm:$0xff]
    %v80 = vld [vmem:[%s0 + $0x200] sm:$0xff]
    %v81 = vld [vmem:[%s0 + $0x208] sm:$0xff]
    %v82 = vld [vmem:[%s0 + $0x210] sm:$0xff]
    %v83 = vld [vmem:[%s0 + $0x218] sm:$0xff]
    %v84 = vld [vmem:[%s0 + $0x220] sm:$0xff]
    %v85 = vld [vmem:[%s0 + $0x228] sm:$0xff]
    %v86 = vld [vmem:[%s0 + $0x230] sm:$0xff]
    %v87 = vld [vmem:[%s0 + $0x238] sm:$0xff]
    %v88 = vld [vmem:[%s0 + $0x240] sm:$0xff]
    %v89 = vld [vmem:[%s0 + $0x248] sm:$0xff]
    %v90 = vld [vmem:[%s0 + $0x250] sm:$0xff]
    %v91 = vld [vmem:[%s0 + $0x258] sm:$0xff]
    %v92 = vld [vmem:[%s0 + $0x260] sm:$0xff]
    %v93 = vld [vmem:[%s0 + $0x268] sm:$0xff]
    %v94 = vld [vmem:[%s0 + $0x270] sm:$0xff]
    %v95 = vld [vmem:[%s0 + $0x278] sm:$0xff]
    %v96 = vld [vmem:[%s0 + $0x280] sm:$0xff]
    %v97 = vld [vmem:[%s0 + $0x288] sm:$0xff]
    %v98 = vld [vmem:[%s0 + $0x290] sm:$0xff]
    %v99 = vld [vmem:[%s0 + $0x298] sm:$0xff]
    %v100 = vld [vmem:[%s0 + $0x2a0] sm:$0xff]
    %v101 = vld [vmem:[%s0 + $0x2a8] sm:$0xff]
    %v102 = vld [vmem:[%s0 + $0x2b0] sm:$0xff]
    %v103 = vld [vmem:[%s0 + $0x2b8] sm:$0xff]
    %v104 = vld [vmem:[%s0 + $0x2c0] sm:$0xff]
    %v105 = vld [vmem:[%s0 + $0x2c8] sm:$0xff]
    %v106 = vld [vmem:[%s0 + $0x2d0] sm:$0xff]
    %v107 = vld [vmem:[%s0 + $0x2d8] sm:$0xff]
    %v108 = vld [vmem:[%s0 + $0x2e0] sm:$0xff]
    %v109 = vld [vmem:[%s0 + $0x2e8] sm:$0xff]
    %v110 = vld [vmem:[%s0 + $0x2f0] sm:$0xff]
    %v111 = vld [vmem:[%s0 + $0x2f8] sm:$0xff]
    %v112 = vld [vmem:[%s0 + $0x300] sm:$0xff]
    %v113 = vld [vmem:[%s0 + $0x308] sm:$0xff]
    %v114 = vld [vmem:[%s0 + $0x310] sm:$0xff]
    %v115 = vld [vmem:[%s0 + $0x318] sm:$0xff]
    %v116 = vld [vmem:[%s0 + $0x320] sm:$0xff]
    %v117 = vld [vmem:[%s0 + $0x328] sm:$0xff]
    %v118 = vld [vmem:[%s0 + $0x330] sm:$0xff]
    %v119 = vld [vmem:[%s0 + $0x338] sm:$0xff]
    %v120 = vld [vmem:[%s0 + $0x340] sm:$0xff]
    %v121 = vld [vmem:[%s0 + $0x348] sm:$0xff]
    %v122 = vld [vmem:[%s0 + $0x350] sm:$0xff]
    %v123 = vld [vmem:[%s0 + $0x358] sm:$0xff]
    %v124 = vld [vmem:[%s0 + $0x360] sm:$0xff]
    %v125 = vld [vmem:[%s0 + $0x368] sm:$0xff]
    %v126 = vld [vmem:[%s0 + $0x370] sm:$0xff]
    %v127 = vld [vmem:[%s0 + $0x378] sm:$0xff]
    %v128 = vld [vmem:[%s0 + $0x380] sm:$0xff]
    %v129 = vld [vmem:[%s0 + $0x388] sm:$0xff]
    %v130 = vld [vmem:[%s0 + $0x390] sm:$0xff]
    %v131 = vld [vmem:[%s0 + $0x398] sm:$0xff]
    %v132 = vld [vmem:[%s0 + $0x3a0] sm:$0xff]
    %v133 = vld [vmem:[%s0 + $0x3a8] sm:$0xff]
    %v134 = vld [vmem:[%s0 + $0x3b0] sm:$0xff]
    %v135 = vld [vmem:[%s0 + $0x3b8] sm:$0xff]
    %v136 = vld [vmem:[%s0 + $0x3c0] sm:$0xff]
    %v137 = vld [vmem:[%s0 + $0x3c8] sm:$0xff]
    %v138 = vld [vmem:[%s0 + $0x3d0] sm:$0xff]
    %v139 = vld [vmem:[%s0 + $0x3d8] sm:$0xff]
    %v140 = vld [vmem:[%s0 + $0x3e0] sm:$0xff]
    %v141 = vld [vmem:[%s0 + $0x3e8] sm:$0xff]
    %v142 = vld [vmem:[%s0 + $0x3f0] sm:$0xff]
    %v143 = vld [vmem:[%s0 + $0x3f8] sm:$0xff]
    %v144 = vld [vmem:[%s0 + $0x400] sm:$0xff]
    %v145 = vld [vmem:[%s0 + $0x408] sm:$0xff]
    %v146 = vld [vmem:[%s0 + $0x410] sm:$0xff]
    %v147 = vld [vmem:[%s0 + $0x418] sm:$0xff]
    %v148 = vld [vmem:[%s0 + $0x420] sm:$0xff]
    %v149 = vld [vmem:[%s0 + $0x428] sm:$0xff]
    %v150 = vld [vmem:[%s0 + $0x430] sm:$0xff]
    %v151 = vld [vmem:[%s0 + $0x438] sm:$0xff]
    %v152 = vld [vmem:[%s0 + $0x440] sm:$0xff]
    %v153 = vld [vmem:[%s0 + $0x448] sm:$0xff]
    %v154 = vld [vmem:[%s0 + $0x450] sm:$0xff]
    %v155 = vld [vmem:[%s0 + $0x458] sm:$0xff]
    %v156 = vld [vmem:[%s0 + $0x460] sm:$0xff]
    %v157 = vld [vmem:[%s0 + $0x468] sm:$0xff]
    %v158 = vld [vmem:[%s0 + $0x470] sm:$0xff]
    %v159 = vld [vmem:[%s0 + $0x478] sm:$0xff]
    %v160 = vld [vmem:[%s0 + $0x480] sm:$0xff]
    %v161 = vld [vmem:[%s0 + $0x488] sm:$0xff]
    %v162 = vld [vmem:[%s0 + $0x490] sm:$0xff]
    %v163 = vld [vmem:[%s0 + $0x498] sm:$0xff]
    %v164 = vld [vmem:[%s0 + $0x4a0] sm:$0xff]
    %v165 = vld [vmem:[%s0 + $0x4a8] sm:$0xff]
    %v166 = vld [vmem:[%s0 + $0x4b0] sm:$0xff]
    %v167 = vld [vmem:[%s0 + $0x4b8] sm:$0xff]
    %v168 = vld [vmem:[%s0 + $0x4c0] sm:$0xff]
    %v169 = vld [vmem:[%s0 + $0x4c8] sm:$0xff]
    %v170 = vld [vmem:[%s0 + $0x4d0] sm:$0xff]
    %v171 = vld [vmem:[%s0 + $0x4d8] sm:$0xff]
    %v172 = vld [vmem:[%s0 + $0x4e0] sm:$0xff]
    %v173 = vld [vmem:[%s0 + $0x4e8] sm:$0xff]
    %v174 = vld [vmem:[%s0 + $0x4f0] sm:$0xff]
    %v175 = vld [vmem:[%s0 + $0x4f8] sm:$0xff]
    %v176 = vld [vmem:[%s0 + $0x500] sm:$0xff]
    %v177 = vld [vmem:[%s0 + $0x508] sm:$0xff]
    %v178 = vld [vmem:[%s0 + $0x510] sm:$0xff]
    %v179 = vld [vmem:[%s0 + $0x518] sm:$0xff]
    %v180 = vld [vmem:[%s0 + $0x520] sm:$0xff]
    %v181 = vld [vmem:[%s0 + $0x528] sm:$0xff]
    %v182 = vld [vmem:[%s0 + $0x530] sm:$0xff]
    %v183 = vld [vmem:[%s0 + $0x538] sm:$0xff]
    %v184 = vld [vmem:[%s0 + $0x540] sm:$0xff]
    %v185 = vld [vmem:[%s0 + $0x548] sm:$0xff]
    %v186 = vld [vmem:[%s0 + $0x550] sm:$0xff]
    %v187 = vld [vmem:[%s0 + $0x558] sm:$0xff]
    %v188 = vld [vmem:[%s0 + $0x560] sm:$0xff]
    %v189 = vld [vmem:[%s0 + $0x568] sm:$0xff]
    %v190 = vld [vmem:[%s0 + $0x570] sm:$0xff]
    %v191 = vld [vmem:[%s0 + $0x578] sm:$0xff]
    %v192 = vld [vmem:[%s0 + $0x580] sm:$0xff]
    %v193 = vld [vmem:[%s0 + $0x588] sm:$0xff]
    %v194 = vld [vmem:[%s0 + $0x590] sm:$0xff]
    %v195 = vld [vmem:[%s0 + $0x598] sm:$0xff]
    %v196 = vld [vmem:[%s0 + $0x5a0] sm:$0xff]
    %v197 = vld [vmem:[%s0 + $0x5a8] sm:$0xff]
    %v198 = vld [vmem:[%s0 + $0x5b0] sm:$0xff]
    %v199 = vld [vmem:[%s0 + $0x5b8] sm:$0xff]
    %v200 = vld [vmem:[%s0 + $0x5c0] sm:$0xff]
    %v201 = vld [vmem:[%s0 + $0x5c8] sm:$0xff]
    %v202 = vld [vmem:[%s0 + $0x5d0] sm:$0xff]
    %v203 = vld [vmem:[%s0 + $0x5d8] sm:$0xff]
    %v204 = vld [vmem:[%s0 + $0x5e0] sm:$0xff]
    %v205 = vld [vmem:[%s0 + $0x5e8] sm:$0xff]
    %v206 = vld [vmem:[%s0 + $0x5f0] sm:$0xff]
    %v207 = vld [vmem:[%s0 + $0x5f8] sm:$0xff]
    %v208 = vld [vmem:[%s1] sm:$0xf]
    %v209 = vld [vmem:[%s1 + $0x4] sm:$0xf]
    %v210 = vld [vmem:[%s1 + $0x8] sm:$0xf]
    %v211 = vld [vmem:[%s1 + $0xc] sm:$0xf]
    %v212 = vld [vmem:[%s1 + $0x10] sm:$0xf]
    %v213 = vld [vmem:[%s1 + $0x14] sm:$0xf]
    %v214 = vld [vmem:[%s1 + $0x18] sm:$0xf]
    %v215 = vld [vmem:[%s1 + $0x1c] sm:$0xf]
    %v216 = vld [vmem:[%s1 + $0x20] sm:$0xf]
    %v217 = vld [vmem:[%s1 + $0x24] sm:$0xf]
    %v218 = vld [vmem:[%s1 + $0x28] sm:$0xf]
    %v219 = vld [vmem:[%s1 + $0x2c] sm:$0xf]
    %v220 = vld [vmem:[%s1 + $0x30] sm:$0xf]
    %v221 = vld [vmem:[%s1 + $0x34] sm:$0xf]
    %v222 = vld [vmem:[%s1 + $0x38] sm:$0xf]
    %v223 = vld [vmem:[%s1 + $0x3c] sm:$0xf]
    %v224 = vld [vmem:[%s1 + $0x40] sm:$0xf]
    %v225 = vld [vmem:[%s1 + $0x44] sm:$0xf]
    %v226 = vld [vmem:[%s1 + $0x48] sm:$0xf]
    %v227 = vld [vmem:[%s1 + $0x4c] sm:$0xf]
    %v228 = vld [vmem:[%s1 + $0x50] sm:$0xf]
    %v229 = vld [vmem:[%s1 + $0x54] sm:$0xf]
    %v230 = vld [vmem:[%s1 + $0x58] sm:$0xf]
    %v231 = vld [vmem:[%s1 + $0x5c] sm:$0xf]
    %v232 = vld [vmem:[%s1 + $0x60] sm:$0xf]
    %v233 = vld [vmem:[%s1 + $0x64] sm:$0xf]
    %v234 = vld [vmem:[%s1 + $0x68] sm:$0xf]
    %v235 = vld [vmem:[%s1 + $0x6c] sm:$0xf]
    %v236 = vld [vmem:[%s1 + $0x70] sm:$0xf]
    %v237 = vld [vmem:[%s1 + $0x74] sm:$0xf]
    %v238 = vld [vmem:[%s1 + $0x78] sm:$0xf]
    %v239 = vld [vmem:[%s1 + $0x7c] sm:$0xf]
    %v240 = vld [vmem:[%s1 + $0x80] sm:$0xf]
    %v241 = vld [vmem:[%s1 + $0x84] sm:$0xf]
    %v242 = vld [vmem:[%s1 + $0x88] sm:$0xf]
    %v243 = vld [vmem:[%s1 + $0x8c] sm:$0xf]
    %v244 = vld [vmem:[%s1 + $0x90] sm:$0xf]
    %v245 = vld [vmem:[%s1 + $0x94] sm:$0xf]
    %v246 = vld [vmem:[%s1 + $0x98] sm:$0xf]
    %v247 = vld [vmem:[%s1 + $0x9c] sm:$0xf]
    %v248 = vld [vmem:[%s1 + $0xa0] sm:$0xf]
    %v249 = vld [vmem:[%s1 + $0xa4] sm:$0xf]
    %v250 = vld [vmem:[%s1 + $0xa8] sm:$0xf]
    %v251 = vld [vmem:[%s1 + $0xac] sm:$0xf]
    %v252 = vld [vmem:[%s1 + $0xb0] sm:$0xf]
    %v253 = vld [vmem:[%s1 + $0xb4] sm:$0xf]
    %v254 = vld [vmem:[%s1 + $0xb8] sm:$0xf]
    %v255 = vld [vmem:[%s1 + $0xbc] sm:$0xf]
    %v256 = vld [vmem:[%s1 + $0xc0] sm:$0xf]
    %v257 = vld [vmem:[%s1 + $0xc4] sm:$0xf]
    %v258 = vld [vmem:[%s1 + $0xc8] sm:$0xf]
    %v259 = vld [vmem:[%s1 + $0xcc] sm:$0xf]
    %v260 = vld [vmem:[%s1 + $0xd0] sm:$0xf]
    %v261 = vld [vmem:[%s1 + $0xd4] sm:$0xf]
    %v262 = vld [vmem:[%s1 + $0xd8] sm:$0xf]
    %v263 = vld [vmem:[%s1 + $0xdc] sm:$0xf]
    %v264 = vld [vmem:[%s1 + $0xe0] sm:$0xf]
    %v265 = vld [vmem:[%s1 + $0xe4] sm:$0xf]
    %v266 = vld [vmem:[%s1 + $0xe8] sm:$0xf]
    %v267 = vld [vmem:[%s1 + $0xec] sm:$0xf]
    %v268 = vld [vmem:[%s1 + $0xf0] sm:$0xf]
    %v269 = vld [vmem:[%s1 + $0xf4] sm:$0xf]
    %v270 = vld [vmem:[%s1 + $0xf8] sm:$0xf]
    %v271 = vld [vmem:[%s1 + $0xfc] sm:$0xf]
    %v272 = vld [vmem:[%s1 + $0x100] sm:$0xf]
    %v273 = vld [vmem:[%s1 + $0x104] sm:$0xf]
    %v274 = vld [vmem:[%s1 + $0x108] sm:$0xf]
    %v275 = vld [vmem:[%s1 + $0x10c] sm:$0xf]
    %v276 = vld [vmem:[%s1 + $0x110] sm:$0xf]
    %v277 = vld [vmem:[%s1 + $0x114] sm:$0xf]
    %v278 = vld [vmem:[%s1 + $0x118] sm:$0xf]
    %v279 = vld [vmem:[%s1 + $0x11c] sm:$0xf]
    %v280 = vld [vmem:[%s1 + $0x120] sm:$0xf]
    %v281 = vld [vmem:[%s1 + $0x124] sm:$0xf]
    %v282 = vld [vmem:[%s1 + $0x128] sm:$0xf]
    %v283 = vld [vmem:[%s1 + $0x12c] sm:$0xf]
    %v284 = vld [vmem:[%s1 + $0x130] sm:$0xf]
    %v285 = vld [vmem:[%s1 + $0x134] sm:$0xf]
    %v286 = vld [vmem:[%s1 + $0x138] sm:$0xf]
    %v287 = vld [vmem:[%s1 + $0x13c] sm:$0xf]
    %v288 = vld [vmem:[%s1 + $0x140] sm:$0xf]
    %v289 = vld [vmem:[%s1 + $0x144] sm:$0xf]
    %v290 = vld [vmem:[%s1 + $0x148] sm:$0xf]
    %v291 = vld [vmem:[%s1 + $0x14c] sm:$0xf]
    %v292 = vld [vmem:[%s1 + $0x150] sm:$0x3]
    %v293 = vld [vmem:[%s2] sm:$0x1]
    %v295 = vlaneseq
    %v296 = vshrl.u32 %v295, 7
    %v297 = vsub.s32 0, %v296
    %v298 = vrot.slane %v293, %v297
    %v492 = vunpack.c.l.b16 %v16
    %v493 = vunpack.c.h.b16 %v16
    %v494 = vunpack.c.l.b16 %v17
    %v495 = vunpack.c.h.b16 %v17
    %v496 = vunpack.c.l.b16 %v18
    %v497 = vunpack.c.h.b16 %v18
    %v498 = vunpack.c.l.b16 %v19
    %v499 = vunpack.c.h.b16 %v19
    %v500 = vunpack.c.l.b16 %v20
    %v501 = vunpack.c.h.b16 %v20
    %v502 = vunpack.c.l.b16 %v21
    %v503 = vunpack.c.h.b16 %v21
    %v504 = vunpack.c.l.b16 %v22
    %v505 = vunpack.c.h.b16 %v22
    %v506 = vunpack.c.l.b16 %v23
    %v507 = vunpack.c.h.b16 %v23
    %v508 = vunpack.c.l.b16 %v24
    %v509 = vunpack.c.h.b16 %v24
    %v510 = vunpack.c.l.b16 %v25
    %v511 = vunpack.c.h.b16 %v25
    %v512 = vunpack.c.l.b16 %v26
    %v513 = vunpack.c.h.b16 %v26
    %v514 = vunpack.c.l.b16 %v27
    %v515 = vunpack.c.h.b16 %v27
    %v516 = vunpack.c.l.b16 %v28
    %v517 = vunpack.c.h.b16 %v28
    %v518 = vunpack.c.l.b16 %v29
    %v519 = vunpack.c.h.b16 %v29
    %v520 = vunpack.c.l.b16 %v30
    %v521 = vunpack.c.h.b16 %v30
    %v522 = vunpack.c.l.b16 %v31
    %v523 = vunpack.c.h.b16 %v31
    %v524 = vunpack.c.l.b16 %v32
    %v525 = vunpack.c.h.b16 %v32
    %v526 = vunpack.c.l.b16 %v33
    %v527 = vunpack.c.h.b16 %v33
    %v528 = vunpack.c.l.b16 %v34
    %v529 = vunpack.c.h.b16 %v34
    %v530 = vunpack.c.l.b16 %v35
    %v531 = vunpack.c.h.b16 %v35
    %v532 = vunpack.c.l.b16 %v36
    %v533 = vunpack.c.h.b16 %v36
    %v534 = vunpack.c.l.b16 %v37
    %v535 = vunpack.c.h.b16 %v37
    %v536 = vunpack.c.l.b16 %v38
    %v537 = vunpack.c.h.b16 %v38
    %v538 = vunpack.c.l.b16 %v39
    %v539 = vunpack.c.h.b16 %v39
    %v540 = vunpack.c.l.b16 %v40
    %v541 = vunpack.c.h.b16 %v40
    %v542 = vunpack.c.l.b16 %v41
    %v543 = vunpack.c.h.b16 %v41
    %v544 = vunpack.c.l.b16 %v42
    %v545 = vunpack.c.h.b16 %v42
    %v546 = vunpack.c.l.b16 %v43
    %v547 = vunpack.c.h.b16 %v43
    %v548 = vunpack.c.l.b16 %v44
    %v549 = vunpack.c.h.b16 %v44
    %v550 = vunpack.c.l.b16 %v45
    %v551 = vunpack.c.h.b16 %v45
    %v552 = vunpack.c.l.b16 %v46
    %v553 = vunpack.c.h.b16 %v46
    %v554 = vunpack.c.l.b16 %v47
    %v555 = vunpack.c.h.b16 %v47
    %v556 = vunpack.c.l.b16 %v48
    %v557 = vunpack.c.h.b16 %v48
    %v558 = vunpack.c.l.b16 %v49
    %v559 = vunpack.c.h.b16 %v49
    %v560 = vunpack.c.l.b16 %v50
    %v561 = vunpack.c.h.b16 %v50
    %v562 = vunpack.c.l.b16 %v51
    %v563 = vunpack.c.h.b16 %v51
    %v564 = vunpack.c.l.b16 %v52
    %v565 = vunpack.c.h.b16 %v52
    %v566 = vunpack.c.l.b16 %v53
    %v567 = vunpack.c.h.b16 %v53
    %v568 = vunpack.c.l.b16 %v54
    %v569 = vunpack.c.h.b16 %v54
    %v570 = vunpack.c.l.b16 %v55
    %v571 = vunpack.c.h.b16 %v55
    %v572 = vunpack.c.l.b16 %v56
    %v573 = vunpack.c.h.b16 %v56
    %v574 = vunpack.c.l.b16 %v57
    %v575 = vunpack.c.h.b16 %v57
    %v576 = vunpack.c.l.b16 %v58
    %v577 = vunpack.c.h.b16 %v58
    %v578 = vunpack.c.l.b16 %v59
    %v579 = vunpack.c.h.b16 %v59
    %v580 = vunpack.c.l.b16 %v60
    %v581 = vunpack.c.h.b16 %v60
    %v582 = vunpack.c.l.b16 %v61
    %v583 = vunpack.c.h.b16 %v61
    %v584 = vunpack.c.l.b16 %v62
    %v585 = vunpack.c.h.b16 %v62
    %v586 = vunpack.c.l.b16 %v63
    %v587 = vunpack.c.h.b16 %v63
    %v588 = vunpack.c.l.b16 %v64
    %v589 = vunpack.c.h.b16 %v64
    %v590 = vunpack.c.l.b16 %v65
    %v591 = vunpack.c.h.b16 %v65
    %v592 = vunpack.c.l.b16 %v66
    %v593 = vunpack.c.h.b16 %v66
    %v594 = vunpack.c.l.b16 %v67
    %v595 = vunpack.c.h.b16 %v67
    %v596 = vunpack.c.l.b16 %v68
    %v597 = vunpack.c.h.b16 %v68
    %v598 = vunpack.c.l.b16 %v69
    %v599 = vunpack.c.h.b16 %v69
    %v600 = vunpack.c.l.b16 %v70
    %v601 = vunpack.c.h.b16 %v70
    %v602 = vunpack.c.l.b16 %v71
    %v603 = vunpack.c.h.b16 %v71
    %v604 = vunpack.c.l.b16 %v72
    %v605 = vunpack.c.h.b16 %v72
    %v606 = vunpack.c.l.b16 %v73
    %v607 = vunpack.c.h.b16 %v73
    %v608 = vunpack.c.l.b16 %v74
    %v609 = vunpack.c.h.b16 %v74
    %v610 = vunpack.c.l.b16 %v75
    %v611 = vunpack.c.h.b16 %v75
    %v612 = vunpack.c.l.b16 %v76
    %v613 = vunpack.c.h.b16 %v76
    %v614 = vunpack.c.l.b16 %v77
    %v615 = vunpack.c.h.b16 %v77
    %v616 = vunpack.c.l.b16 %v78
    %v617 = vunpack.c.h.b16 %v78
    %v618 = vunpack.c.l.b16 %v79
    %v619 = vunpack.c.h.b16 %v79
    %v620 = vunpack.c.l.b16 %v80
    %v621 = vunpack.c.h.b16 %v80
    %v622 = vunpack.c.l.b16 %v81
    %v623 = vunpack.c.h.b16 %v81
    %v624 = vunpack.c.l.b16 %v82
    %v625 = vunpack.c.h.b16 %v82
    %v626 = vunpack.c.l.b16 %v83
    %v627 = vunpack.c.h.b16 %v83
    %v628 = vunpack.c.l.b16 %v84
    %v629 = vunpack.c.h.b16 %v84
    %v630 = vunpack.c.l.b16 %v85
    %v631 = vunpack.c.h.b16 %v85
    %v632 = vunpack.c.l.b16 %v86
    %v633 = vunpack.c.h.b16 %v86
    %v634 = vunpack.c.l.b16 %v87
    %v635 = vunpack.c.h.b16 %v87
    %v636 = vunpack.c.l.b16 %v88
    %v637 = vunpack.c.h.b16 %v88
    %v638 = vunpack.c.l.b16 %v89
    %v639 = vunpack.c.h.b16 %v89
    %v640 = vunpack.c.l.b16 %v90
    %v641 = vunpack.c.h.b16 %v90
    %v642 = vunpack.c.l.b16 %v91
    %v643 = vunpack.c.h.b16 %v91
    %v644 = vunpack.c.l.b16 %v92
    %v645 = vunpack.c.h.b16 %v92
    %v646 = vunpack.c.l.b16 %v93
    %v647 = vunpack.c.h.b16 %v93
    %v648 = vunpack.c.l.b16 %v94
    %v649 = vunpack.c.h.b16 %v94
    %v650 = vunpack.c.l.b16 %v95
    %v651 = vunpack.c.h.b16 %v95
    %v652 = vunpack.c.l.b16 %v96
    %v653 = vunpack.c.h.b16 %v96
    %v654 = vunpack.c.l.b16 %v97
    %v655 = vunpack.c.h.b16 %v97
    %v656 = vunpack.c.l.b16 %v98
    %v657 = vunpack.c.h.b16 %v98
    %v658 = vunpack.c.l.b16 %v99
    %v659 = vunpack.c.h.b16 %v99
    %v660 = vunpack.c.l.b16 %v100
    %v661 = vunpack.c.h.b16 %v100
    %v662 = vunpack.c.l.b16 %v101
    %v663 = vunpack.c.h.b16 %v101
    %v664 = vunpack.c.l.b16 %v102
    %v665 = vunpack.c.h.b16 %v102
    %v666 = vunpack.c.l.b16 %v103
    %v667 = vunpack.c.h.b16 %v103
    %v668 = vunpack.c.l.b16 %v104
    %v669 = vunpack.c.h.b16 %v104
    %v670 = vunpack.c.l.b16 %v105
    %v671 = vunpack.c.h.b16 %v105
    %v672 = vunpack.c.l.b16 %v106
    %v673 = vunpack.c.h.b16 %v106
    %v674 = vunpack.c.l.b16 %v107
    %v675 = vunpack.c.h.b16 %v107
    %v676 = vunpack.c.l.b16 %v108
    %v677 = vunpack.c.h.b16 %v108
    %v678 = vunpack.c.l.b16 %v109
    %v679 = vunpack.c.h.b16 %v109
    %v680 = vunpack.c.l.b16 %v110
    %v681 = vunpack.c.h.b16 %v110
    %v682 = vunpack.c.l.b16 %v111
    %v683 = vunpack.c.h.b16 %v111
    %v684 = vunpack.c.l.b16 %v112
    %v685 = vunpack.c.h.b16 %v112
    %v686 = vunpack.c.l.b16 %v113
    %v687 = vunpack.c.h.b16 %v113
    %v688 = vunpack.c.l.b16 %v114
    %v689 = vunpack.c.h.b16 %v114
    %v690 = vunpack.c.l.b16 %v115
    %v691 = vunpack.c.h.b16 %v115
    %v692 = vunpack.c.l.b16 %v116
    %v693 = vunpack.c.h.b16 %v116
    %v694 = vunpack.c.l.b16 %v117
    %v695 = vunpack.c.h.b16 %v117
    %v696 = vunpack.c.l.b16 %v118
    %v697 = vunpack.c.h.b16 %v118
    %v698 = vunpack.c.l.b16 %v119
    %v699 = vunpack.c.h.b16 %v119
    %v700 = vunpack.c.l.b16 %v120
    %v701 = vunpack.c.h.b16 %v120
    %v702 = vunpack.c.l.b16 %v121
    %v703 = vunpack.c.h.b16 %v121
    %v704 = vunpack.c.l.b16 %v122
    %v705 = vunpack.c.h.b16 %v122
    %v706 = vunpack.c.l.b16 %v123
    %v707 = vunpack.c.h.b16 %v123
    %v708 = vunpack.c.l.b16 %v124
    %v709 = vunpack.c.h.b16 %v124
    %v710 = vunpack.c.l.b16 %v125
    %v711 = vunpack.c.h.b16 %v125
    %v712 = vunpack.c.l.b16 %v126
    %v713 = vunpack.c.h.b16 %v126
    %v714 = vunpack.c.l.b16 %v127
    %v715 = vunpack.c.h.b16 %v127
    %v716 = vunpack.c.l.b16 %v128
    %v717 = vunpack.c.h.b16 %v128
    %v718 = vunpack.c.l.b16 %v129
    %v719 = vunpack.c.h.b16 %v129
    %v720 = vunpack.c.l.b16 %v130
    %v721 = vunpack.c.h.b16 %v130
    %v722 = vunpack.c.l.b16 %v131
    %v723 = vunpack.c.h.b16 %v131
    %v724 = vunpack.c.l.b16 %v132
    %v725 = vunpack.c.h.b16 %v132
    %v726 = vunpack.c.l.b16 %v133
    %v727 = vunpack.c.h.b16 %v133
    %v728 = vunpack.c.l.b16 %v134
    %v729 = vunpack.c.h.b16 %v134
    %v730 = vunpack.c.l.b16 %v135
    %v731 = vunpack.c.h.b16 %v135
    %v732 = vunpack.c.l.b16 %v136
    %v733 = vunpack.c.h.b16 %v136
    %v734 = vunpack.c.l.b16 %v137
    %v735 = vunpack.c.h.b16 %v137
    %v736 = vunpack.c.l.b16 %v138
    %v737 = vunpack.c.h.b16 %v138
    %v738 = vunpack.c.l.b16 %v139
    %v739 = vunpack.c.h.b16 %v139
    %v740 = vunpack.c.l.b16 %v140
    %v741 = vunpack.c.h.b16 %v140
    %v742 = vunpack.c.l.b16 %v141
    %v743 = vunpack.c.h.b16 %v141
    %v744 = vunpack.c.l.b16 %v142
    %v745 = vunpack.c.h.b16 %v142
    %v746 = vunpack.c.l.b16 %v143
    %v747 = vunpack.c.h.b16 %v143
    %v748 = vunpack.c.l.b16 %v144
    %v749 = vunpack.c.h.b16 %v144
    %v750 = vunpack.c.l.b16 %v145
    %v751 = vunpack.c.h.b16 %v145
    %v752 = vunpack.c.l.b16 %v146
    %v753 = vunpack.c.h.b16 %v146
    %v754 = vunpack.c.l.b16 %v147
    %v755 = vunpack.c.h.b16 %v147
    %v756 = vunpack.c.l.b16 %v148
    %v757 = vunpack.c.h.b16 %v148
    %v758 = vunpack.c.l.b16 %v149
    %v759 = vunpack.c.h.b16 %v149
    %v760 = vunpack.c.l.b16 %v150
    %v761 = vunpack.c.h.b16 %v150
    %v762 = vunpack.c.l.b16 %v151
    %v763 = vunpack.c.h.b16 %v151
    %v764 = vunpack.c.l.b16 %v152
    %v765 = vunpack.c.h.b16 %v152
    %v766 = vunpack.c.l.b16 %v153
    %v767 = vunpack.c.h.b16 %v153
    %v768 = vunpack.c.l.b16 %v154
    %v769 = vunpack.c.h.b16 %v154
    %v770 = vunpack.c.l.b16 %v155
    %v771 = vunpack.c.h.b16 %v155
    %v772 = vunpack.c.l.b16 %v156
    %v773 = vunpack.c.h.b16 %v156
    %v774 = vunpack.c.l.b16 %v157
    %v775 = vunpack.c.h.b16 %v157
    %v776 = vunpack.c.l.b16 %v158
    %v777 = vunpack.c.h.b16 %v158
    %v778 = vunpack.c.l.b16 %v159
    %v779 = vunpack.c.h.b16 %v159
    %v780 = vunpack.c.l.b16 %v160
    %v781 = vunpack.c.h.b16 %v160
    %v782 = vunpack.c.l.b16 %v161
    %v783 = vunpack.c.h.b16 %v161
    %v784 = vunpack.c.l.b16 %v162
    %v785 = vunpack.c.h.b16 %v162
    %v786 = vunpack.c.l.b16 %v163
    %v787 = vunpack.c.h.b16 %v163
    %v788 = vunpack.c.l.b16 %v164
    %v789 = vunpack.c.h.b16 %v164
    %v790 = vunpack.c.l.b16 %v165
    %v791 = vunpack.c.h.b16 %v165
    %v792 = vunpack.c.l.b16 %v166
    %v793 = vunpack.c.h.b16 %v166
    %v794 = vunpack.c.l.b16 %v167
    %v795 = vunpack.c.h.b16 %v167
    %v796 = vunpack.c.l.b16 %v168
    %v797 = vunpack.c.h.b16 %v168
    %v798 = vunpack.c.l.b16 %v169
    %v799 = vunpack.c.h.b16 %v169
    %v800 = vunpack.c.l.b16 %v170
    %v801 = vunpack.c.h.b16 %v170
    %v802 = vunpack.c.l.b16 %v171
    %v803 = vunpack.c.h.b16 %v171
    %v804 = vunpack.c.l.b16 %v172
    %v805 = vunpack.c.h.b16 %v172
    %v806 = vunpack.c.l.b16 %v173
    %v807 = vunpack.c.h.b16 %v173
    %v808 = vunpack.c.l.b16 %v174
    %v809 = vunpack.c.h.b16 %v174
    %v810 = vunpack.c.l.b16 %v175
    %v811 = vunpack.c.h.b16 %v175
    %v812 = vunpack.c.l.b16 %v176
    %v813 = vunpack.c.h.b16 %v176
    %v814 = vunpack.c.l.b16 %v177
    %v815 = vunpack.c.h.b16 %v177
    %v816 = vunpack.c.l.b16 %v178
    %v817 = vunpack.c.h.b16 %v178
    %v818 = vunpack.c.l.b16 %v179
    %v819 = vunpack.c.h.b16 %v179
    %v820 = vunpack.c.l.b16 %v180
    %v821 = vunpack.c.h.b16 %v180
    %v822 = vunpack.c.l.b16 %v181
    %v823 = vunpack.c.h.b16 %v181
    %v824 = vunpack.c.l.b16 %v182
    %v825 = vunpack.c.h.b16 %v182
    %v826 = vunpack.c.l.b16 %v183
    %v827 = vunpack.c.h.b16 %v183
    %v828 = vunpack.c.l.b16 %v184
    %v829 = vunpack.c.h.b16 %v184
    %v830 = vunpack.c.l.b16 %v185
    %v831 = vunpack.c.h.b16 %v185
    %v832 = vunpack.c.l.b16 %v186
    %v833 = vunpack.c.h.b16 %v186
    %v834 = vunpack.c.l.b16 %v187
    %v835 = vunpack.c.h.b16 %v187
    %v836 = vunpack.c.l.b16 %v188
    %v837 = vunpack.c.h.b16 %v188
    %v838 = vunpack.c.l.b16 %v189
    %v839 = vunpack.c.h.b16 %v189
    %v840 = vunpack.c.l.b16 %v190
    %v841 = vunpack.c.h.b16 %v190
    %v842 = vunpack.c.l.b16 %v191
    %v843 = vunpack.c.h.b16 %v191
    %v844 = vunpack.c.l.b16 %v192
    %v845 = vunpack.c.h.b16 %v192
    %v846 = vunpack.c.l.b16 %v193
    %v847 = vunpack.c.h.b16 %v193
    %v848 = vunpack.c.l.b16 %v194
    %v849 = vunpack.c.h.b16 %v194
    %v850 = vunpack.c.l.b16 %v195
    %v851 = vunpack.c.h.b16 %v195
    %v852 = vunpack.c.l.b16 %v196
    %v853 = vunpack.c.h.b16 %v196
    %v854 = vunpack.c.l.b16 %v197
    %v855 = vunpack.c.h.b16 %v197
    %v856 = vunpack.c.l.b16 %v198
    %v857 = vunpack.c.h.b16 %v198
    %v858 = vunpack.c.l.b16 %v199
    %v859 = vunpack.c.h.b16 %v199
    %v860 = vunpack.c.l.b16 %v200
    %v861 = vunpack.c.h.b16 %v200
    %v862 = vunpack.c.l.b16 %v201
    %v863 = vunpack.c.h.b16 %v201
    %v864 = vunpack.c.l.b16 %v202
    %v865 = vunpack.c.h.b16 %v202
    %v866 = vunpack.c.l.b16 %v203
    %v867 = vunpack.c.h.b16 %v203
    %v868 = vunpack.c.l.b16 %v204
    %v869 = vunpack.c.h.b16 %v204
    %v870 = vunpack.c.l.b16 %v205
    %v871 = vunpack.c.h.b16 %v205
    %v872 = vunpack.c.l.b16 %v206
    %v873 = vunpack.c.h.b16 %v206
    %v874 = vunpack.c.l.b16 %v207
    %v875 = vunpack.c.h.b16 %v207
    %v876 = vpack.c.b16 %v498, %v492
    %v877 = vpack.c.b16 %v499, %v493
    %v878 = vpack.c.b16 %v500, %v494
    %v879 = vpack.c.b16 %v501, %v495
    %v880 = vpack.c.b16 %v502, %v496
    %v881 = vpack.c.b16 %v503, %v497
    %v882 = vpack.c.b16 %v510, %v504
    %v883 = vpack.c.b16 %v511, %v505
    %v884 = vpack.c.b16 %v512, %v506
    %v885 = vpack.c.b16 %v513, %v507
    %v886 = vpack.c.b16 %v514, %v508
    %v887 = vpack.c.b16 %v515, %v509
    %v888 = vpack.c.b16 %v522, %v516
    %v889 = vpack.c.b16 %v523, %v517
    %v890 = vpack.c.b16 %v524, %v518
    %v891 = vpack.c.b16 %v525, %v519
    %v892 = vpack.c.b16 %v526, %v520
    %v893 = vpack.c.b16 %v527, %v521
    %v894 = vpack.c.b16 %v534, %v528
    %v895 = vpack.c.b16 %v535, %v529
    %v896 = vpack.c.b16 %v536, %v530
    %v897 = vpack.c.b16 %v537, %v531
    %v898 = vpack.c.b16 %v538, %v532
    %v899 = vpack.c.b16 %v539, %v533
    %v900 = vpack.c.b16 %v546, %v540
    %v901 = vpack.c.b16 %v547, %v541
    %v902 = vpack.c.b16 %v548, %v542
    %v903 = vpack.c.b16 %v549, %v543
    %v904 = vpack.c.b16 %v550, %v544
    %v905 = vpack.c.b16 %v551, %v545
    %v906 = vpack.c.b16 %v558, %v552
    %v907 = vpack.c.b16 %v559, %v553
    %v908 = vpack.c.b16 %v560, %v554
    %v909 = vpack.c.b16 %v561, %v555
    %v910 = vpack.c.b16 %v562, %v556
    %v911 = vpack.c.b16 %v563, %v557
    %v912 = vpack.c.b16 %v570, %v564
    %v913 = vpack.c.b16 %v571, %v565
    %v914 = vpack.c.b16 %v572, %v566
    %v915 = vpack.c.b16 %v573, %v567
    %v916 = vpack.c.b16 %v574, %v568
    %v917 = vpack.c.b16 %v575, %v569
    %v918 = vpack.c.b16 %v582, %v576
    %v919 = vpack.c.b16 %v583, %v577
    %v920 = vpack.c.b16 %v584, %v578
    %v921 = vpack.c.b16 %v585, %v579
    %v922 = vpack.c.b16 %v586, %v580
    %v923 = vpack.c.b16 %v587, %v581
    %v924 = vpack.c.b16 %v594, %v588
    %v925 = vpack.c.b16 %v595, %v589
    %v926 = vpack.c.b16 %v596, %v590
    %v927 = vpack.c.b16 %v597, %v591
    %v928 = vpack.c.b16 %v598, %v592
    %v929 = vpack.c.b16 %v599, %v593
    %v930 = vpack.c.b16 %v606, %v600
    %v931 = vpack.c.b16 %v607, %v601
    %v932 = vpack.c.b16 %v608, %v602
    %v933 = vpack.c.b16 %v609, %v603
    %v934 = vpack.c.b16 %v610, %v604
    %v935 = vpack.c.b16 %v611, %v605
    %v936 = vpack.c.b16 %v618, %v612
    %v937 = vpack.c.b16 %v619, %v613
    %v938 = vpack.c.b16 %v620, %v614
    %v939 = vpack.c.b16 %v621, %v615
    %v940 = vpack.c.b16 %v622, %v616
    %v941 = vpack.c.b16 %v623, %v617
    %v942 = vpack.c.b16 %v630, %v624
    %v943 = vpack.c.b16 %v631, %v625
    %v944 = vpack.c.b16 %v632, %v626
    %v945 = vpack.c.b16 %v633, %v627
    %v946 = vpack.c.b16 %v634, %v628
    %v947 = vpack.c.b16 %v635, %v629
    %v948 = vpack.c.b16 %v642, %v636
    %v949 = vpack.c.b16 %v643, %v637
    %v950 = vpack.c.b16 %v644, %v638
    %v951 = vpack.c.b16 %v645, %v639
    %v952 = vpack.c.b16 %v646, %v640
    %v953 = vpack.c.b16 %v647, %v641
    %v954 = vpack.c.b16 %v654, %v648
    %v955 = vpack.c.b16 %v655, %v649
    %v956 = vpack.c.b16 %v656, %v650
    %v957 = vpack.c.b16 %v657, %v651
    %v958 = vpack.c.b16 %v658, %v652
    %v959 = vpack.c.b16 %v659, %v653
    %v960 = vpack.c.b16 %v666, %v660
    %v961 = vpack.c.b16 %v667, %v661
    %v962 = vpack.c.b16 %v668, %v662
    %v963 = vpack.c.b16 %v669, %v663
    %v964 = vpack.c.b16 %v670, %v664
    %v965 = vpack.c.b16 %v671, %v665
    %v966 = vpack.c.b16 %v678, %v672
    %v967 = vpack.c.b16 %v679, %v673
    %v968 = vpack.c.b16 %v680, %v674
    %v969 = vpack.c.b16 %v681, %v675
    %v970 = vpack.c.b16 %v682, %v676
    %v971 = vpack.c.b16 %v683, %v677
    %v972 = vpack.c.b16 %v690, %v684
    %v973 = vpack.c.b16 %v691, %v685
    %v974 = vpack.c.b16 %v692, %v686
    %v975 = vpack.c.b16 %v693, %v687
    %v976 = vpack.c.b16 %v694, %v688
    %v977 = vpack.c.b16 %v695, %v689
    %v978 = vpack.c.b16 %v702, %v696
    %v979 = vpack.c.b16 %v703, %v697
    %v980 = vpack.c.b16 %v704, %v698
    %v981 = vpack.c.b16 %v705, %v699
    %v982 = vpack.c.b16 %v706, %v700
    %v983 = vpack.c.b16 %v707, %v701
    %v984 = vpack.c.b16 %v714, %v708
    %v985 = vpack.c.b16 %v715, %v709
    %v986 = vpack.c.b16 %v716, %v710
    %v987 = vpack.c.b16 %v717, %v711
    %v988 = vpack.c.b16 %v718, %v712
    %v989 = vpack.c.b16 %v719, %v713
    %v990 = vpack.c.b16 %v726, %v720
    %v991 = vpack.c.b16 %v727, %v721
    %v992 = vpack.c.b16 %v728, %v722
    %v993 = vpack.c.b16 %v729, %v723
    %v994 = vpack.c.b16 %v730, %v724
    %v995 = vpack.c.b16 %v731, %v725
    %v996 = vpack.c.b16 %v738, %v732
    %v997 = vpack.c.b16 %v739, %v733
    %v998 = vpack.c.b16 %v740, %v734
    %v999 = vpack.c.b16 %v741, %v735
    %v1000 = vpack.c.b16 %v742, %v736
    %v1001 = vpack.c.b16 %v743, %v737
    %v1002 = vpack.c.b16 %v750, %v744
    %v1003 = vpack.c.b16 %v751, %v745
    %v1004 = vpack.c.b16 %v752, %v746
    %v1005 = vpack.c.b16 %v753, %v747
    %v1006 = vpack.c.b16 %v754, %v748
    %v1007 = vpack.c.b16 %v755, %v749
    %v1008 = vpack.c.b16 %v762, %v756
    %v1009 = vpack.c.b16 %v763, %v757
    %v1010 = vpack.c.b16 %v764, %v758
    %v1011 = vpack.c.b16 %v765, %v759
    %v1012 = vpack.c.b16 %v766, %v760
    %v1013 = vpack.c.b16 %v767, %v761
    %v1014 = vpack.c.b16 %v774, %v768
    %v1015 = vpack.c.b16 %v775, %v769
    %v1016 = vpack.c.b16 %v776, %v770
    %v1017 = vpack.c.b16 %v777, %v771
    %v1018 = vpack.c.b16 %v778, %v772
    %v1019 = vpack.c.b16 %v779, %v773
    %v1020 = vpack.c.b16 %v786, %v780
    %v1021 = vpack.c.b16 %v787, %v781
    %v1022 = vpack.c.b16 %v788, %v782
    %v1023 = vpack.c.b16 %v789, %v783
    %v1024 = vpack.c.b16 %v790, %v784
    %v1025 = vpack.c.b16 %v791, %v785
    %v1026 = vpack.c.b16 %v798, %v792
    %v1027 = vpack.c.b16 %v799, %v793
    %v1028 = vpack.c.b16 %v800, %v794
    %v1029 = vpack.c.b16 %v801, %v795
    %v1030 = vpack.c.b16 %v802, %v796
    %v1031 = vpack.c.b16 %v803, %v797
    %v1032 = vpack.c.b16 %v810, %v804
    %v1033 = vpack.c.b16 %v811, %v805
    %v1034 = vpack.c.b16 %v812, %v806
    %v1035 = vpack.c.b16 %v813, %v807
    %v1036 = vpack.c.b16 %v814, %v808
    %v1037 = vpack.c.b16 %v815, %v809
    %v1038 = vpack.c.b16 %v822, %v816
    %v1039 = vpack.c.b16 %v823, %v817
    %v1040 = vpack.c.b16 %v824, %v818
    %v1041 = vpack.c.b16 %v825, %v819
    %v1042 = vpack.c.b16 %v826, %v820
    %v1043 = vpack.c.b16 %v827, %v821
    %v1044 = vpack.c.b16 %v834, %v828
    %v1045 = vpack.c.b16 %v835, %v829
    %v1046 = vpack.c.b16 %v836, %v830
    %v1047 = vpack.c.b16 %v837, %v831
    %v1048 = vpack.c.b16 %v838, %v832
    %v1049 = vpack.c.b16 %v839, %v833
    %v1050 = vpack.c.b16 %v846, %v840
    %v1051 = vpack.c.b16 %v847, %v841
    %v1052 = vpack.c.b16 %v848, %v842
    %v1053 = vpack.c.b16 %v849, %v843
    %v1054 = vpack.c.b16 %v850, %v844
    %v1055 = vpack.c.b16 %v851, %v845
    %v1056 = vpack.c.b16 %v858, %v852
    %v1057 = vpack.c.b16 %v859, %v853
    %v1058 = vpack.c.b16 %v860, %v854
    %v1059 = vpack.c.b16 %v861, %v855
    %v1060 = vpack.c.b16 %v862, %v856
    %v1061 = vpack.c.b16 %v863, %v857
    %v1062 = vpack.c.b16 %v870, %v864
    %v1063 = vpack.c.b16 %v871, %v865
    %v1064 = vpack.c.b16 %v872, %v866
    %v1065 = vpack.c.b16 %v873, %v867
    %v1066 = vpack.c.b16 %v874, %v868
    %v1067 = vpack.c.b16 %v875, %v869
    %v1313 = vunpack.c.l.b16 %v208
    %v1314 = vunpack.c.l.b16 %v209
    %v1315 = vunpack.c.l.b16 %v210
    %v1316 = vunpack.c.l.b16 %v211
    %v1317 = vunpack.c.l.b16 %v212
    %v1318 = vunpack.c.l.b16 %v213
    %v1319 = vunpack.c.l.b16 %v214
    %v1320 = vunpack.c.l.b16 %v215
    %v1321 = vunpack.c.l.b16 %v216
    %v1322 = vunpack.c.l.b16 %v217
    %v1323 = vunpack.c.l.b16 %v218
    %v1324 = vunpack.c.l.b16 %v219
    %v1325 = vunpack.c.l.b16 %v220
    %v1326 = vunpack.c.l.b16 %v221
    %v1327 = vunpack.c.l.b16 %v222
    %v1328 = vunpack.c.l.b16 %v223
    %v1329 = vunpack.c.l.b16 %v224
    %v1330 = vunpack.c.l.b16 %v225
    %v1331 = vunpack.c.l.b16 %v226
    %v1332 = vunpack.c.l.b16 %v227
    %v1333 = vunpack.c.l.b16 %v228
    %v1334 = vunpack.c.l.b16 %v229
    %v1335 = vunpack.c.l.b16 %v230
    %v1336 = vunpack.c.l.b16 %v231
    %v1337 = vunpack.c.l.b16 %v232
    %v1338 = vunpack.c.l.b16 %v233
    %v1339 = vunpack.c.l.b16 %v234
    %v1340 = vunpack.c.l.b16 %v235
    %v1341 = vunpack.c.l.b16 %v236
    %v1342 = vunpack.c.l.b16 %v237
    %v1343 = vunpack.c.l.b16 %v238
    %v1344 = vunpack.c.l.b16 %v239
    %v1345 = vunpack.c.l.b16 %v240
    %v1346 = vunpack.c.l.b16 %v241
    %v1347 = vunpack.c.l.b16 %v242
    %v1348 = vunpack.c.l.b16 %v243
    %v1349 = vunpack.c.l.b16 %v244
    %v1350 = vunpack.c.l.b16 %v245
    %v1351 = vunpack.c.l.b16 %v246
    %v1352 = vunpack.c.l.b16 %v247
    %v1353 = vunpack.c.l.b16 %v248
    %v1354 = vunpack.c.l.b16 %v249
    %v1355 = vunpack.c.l.b16 %v250
    %v1356 = vunpack.c.l.b16 %v251
    %v1357 = vunpack.c.l.b16 %v252
    %v1358 = vunpack.c.l.b16 %v253
    %v1359 = vunpack.c.l.b16 %v254
    %v1360 = vunpack.c.l.b16 %v255
    %v1361 = vunpack.c.l.b16 %v256
    %v1362 = vunpack.c.l.b16 %v257
    %v1363 = vunpack.c.l.b16 %v258
    %v1364 = vunpack.c.l.b16 %v259
    %v1365 = vunpack.c.l.b16 %v260
    %v1366 = vunpack.c.l.b16 %v261
    %v1367 = vunpack.c.l.b16 %v262
    %v1368 = vunpack.c.l.b16 %v263
    %v1369 = vunpack.c.l.b16 %v264
    %v1370 = vunpack.c.l.b16 %v265
    %v1371 = vunpack.c.l.b16 %v266
    %v1372 = vunpack.c.l.b16 %v267
    %v1373 = vunpack.c.l.b16 %v268
    %v1374 = vunpack.c.l.b16 %v269
    %v1375 = vunpack.c.l.b16 %v270
    %v1376 = vunpack.c.l.b16 %v271
    %v1377 = vunpack.c.l.b16 %v272
    %v1378 = vunpack.c.l.b16 %v273
    %v1379 = vunpack.c.l.b16 %v274
    %v1380 = vunpack.c.l.b16 %v275
    %v1381 = vunpack.c.l.b16 %v276
    %v1382 = vunpack.c.l.b16 %v277
    %v1383 = vunpack.c.l.b16 %v278
    %v1384 = vunpack.c.l.b16 %v279
    %v1385 = vunpack.c.l.b16 %v280
    %v1386 = vunpack.c.l.b16 %v281
    %v1387 = vunpack.c.l.b16 %v282
    %v1388 = vunpack.c.l.b16 %v283
    %v1389 = vunpack.c.l.b16 %v284
    %v1390 = vunpack.c.l.b16 %v285
    %v1391 = vunpack.c.l.b16 %v286
    %v1392 = vunpack.c.l.b16 %v287
    %v1393 = vunpack.c.l.b16 %v288
    %v1394 = vunpack.c.l.b16 %v289
    %v1395 = vunpack.c.l.b16 %v290
    %v1396 = vunpack.c.l.b16 %v291
    %v1397 = vunpack.c.l.b16 %v292
    %v1398 = vpack.c.b16 %v1314, %v1313
    %v1399 = vpack.c.b16 %v1316, %v1315
    %v1400 = vpack.c.b16 %v1318, %v1317
    %v1401 = vpack.c.b16 %v1320, %v1319
    %v1402 = vpack.c.b16 %v1322, %v1321
    %v1403 = vpack.c.b16 %v1324, %v1323
    %v1404 = vpack.c.b16 %v1326, %v1325
    %v1405 = vpack.c.b16 %v1328, %v1327
    %v1406 = vpack.c.b16 %v1330, %v1329
    %v1407 = vpack.c.b16 %v1332, %v1331
    %v1408 = vpack.c.b16 %v1334, %v1333
    %v1409 = vpack.c.b16 %v1336, %v1335
    %v1410 = vpack.c.b16 %v1338, %v1337
    %v1411 = vpack.c.b16 %v1340, %v1339
    %v1412 = vpack.c.b16 %v1342, %v1341
    %v1413 = vpack.c.b16 %v1344, %v1343
    %v1414 = vpack.c.b16 %v1346, %v1345
    %v1415 = vpack.c.b16 %v1348, %v1347
    %v1416 = vpack.c.b16 %v1350, %v1349
    %v1417 = vpack.c.b16 %v1352, %v1351
    %v1418 = vpack.c.b16 %v1354, %v1353
    %v1419 = vpack.c.b16 %v1356, %v1355
    %v1420 = vpack.c.b16 %v1358, %v1357
    %v1421 = vpack.c.b16 %v1360, %v1359
    %v1422 = vpack.c.b16 %v1362, %v1361
    %v1423 = vpack.c.b16 %v1364, %v1363
    %v1424 = vpack.c.b16 %v1366, %v1365
    %v1425 = vpack.c.b16 %v1368, %v1367
    %v1426 = vpack.c.b16 %v1370, %v1369
    %v1427 = vpack.c.b16 %v1372, %v1371
    %v1428 = vpack.c.b16 %v1374, %v1373
    %v1429 = vpack.c.b16 %v1376, %v1375
    %v1430 = vpack.c.b16 %v1378, %v1377
    %v1431 = vpack.c.b16 %v1380, %v1379
    %v1432 = vpack.c.b16 %v1382, %v1381
    %v1433 = vpack.c.b16 %v1384, %v1383
    %v1434 = vpack.c.b16 %v1386, %v1385
    %v1435 = vpack.c.b16 %v1388, %v1387
    %v1436 = vpack.c.b16 %v1390, %v1389
    %v1437 = vpack.c.b16 %v1392, %v1391
    %v1438 = vpack.c.b16 %v1394, %v1393
    %v1439 = vpack.c.b16 %v1396, %v1395
    %v1440 = vpack.c.b16 %v1397, %v1397
    %vm1483 = vcmask 285696
    %v1485 = vsel %vm1483, %v881, 0
    %v1488 = vsel %vm1483, %v887, 0
    %v1491 = vsel %vm1483, %v893, 0
    %v1494 = vsel %vm1483, %v899, 0
    %v1497 = vsel %vm1483, %v905, 0
    %v1500 = vsel %vm1483, %v911, 0
    %v1503 = vsel %vm1483, %v917, 0
    %v1506 = vsel %vm1483, %v923, 0
    %v1509 = vsel %vm1483, %v929, 0
    %v1512 = vsel %vm1483, %v935, 0
    %v1515 = vsel %vm1483, %v941, 0
    %v1518 = vsel %vm1483, %v947, 0
    %v1521 = vsel %vm1483, %v953, 0
    %v1524 = vsel %vm1483, %v959, 0
    %v1527 = vsel %vm1483, %v965, 0
    %v1530 = vsel %vm1483, %v971, 0
    %v1533 = vsel %vm1483, %v977, 0
    %v1536 = vsel %vm1483, %v983, 0
    %v1539 = vsel %vm1483, %v989, 0
    %v1542 = vsel %vm1483, %v995, 0
    %v1545 = vsel %vm1483, %v1001, 0
    %v1548 = vsel %vm1483, %v1007, 0
    %v1551 = vsel %vm1483, %v1013, 0
    %v1554 = vsel %vm1483, %v1019, 0
    %v1557 = vsel %vm1483, %v1025, 0
    %v1560 = vsel %vm1483, %v1031, 0
    %v1563 = vsel %vm1483, %v1037, 0
    %v1566 = vsel %vm1483, %v1043, 0
    %v1569 = vsel %vm1483, %v1049, 0
    %v1572 = vsel %vm1483, %v1055, 0
    %v1575 = vsel %vm1483, %v1061, 0
    %v1578 = vsel %vm1483, %v1067, 0
    %vm1580 = vcmask 1040384
    %vm1581 = vcmask 1041408
    %v1582 = vsel %vm1580, 4294967295, 65535
    %v1583 = vsel %vm1581, %v1582, 0
    %v1585 = vand.u32 %v1440, %v1583
    %1587 = vmatprep.subr.bf16.mxu0 0
    %1588 = vmatpush1.bf16.msra.mxu0 %v1398
    %1589 = vmatprep.subr.bf16.mxu0 0
    %1590 = vmatpush1.bf16.msra.mxu0 %v1399
    %1591 = vmatprep.subr.bf16.mxu0 0
    %1592 = vmatpush1.bf16.msra.mxu0 %v1400
    %1593 = vmatprep.subr.bf16.mxu0 0
    %1594 = vmatpush1.bf16.msra.mxu0 %v1401
    %1595 = vmatprep.subr.bf16.mxu0 0
    %1596 = vmatpush1.bf16.msra.mxu0 %v1402
    %1597 = vmatprep.subr.bf16.mxu0 0
    %1598 = vmatpush1.bf16.msra.mxu0 %v1403
    %1599 = vmatprep.subr.bf16.mxu0 0
    %1600 = vmatpush1.bf16.msra.mxu0 %v1404
    %1601 = vmatprep.subr.bf16.mxu0 0
    %1602 = vmatpush1.bf16.msra.mxu0 %v1405
    %1603 = vmatprep.subr.bf16.mxu0 0
    %1604 = vmatpush1.bf16.msra.mxu0 %v1406
    %1605 = vmatprep.subr.bf16.mxu0 0
    %1606 = vmatpush1.bf16.msra.mxu0 %v1407
    %1607 = vmatprep.subr.bf16.mxu0 0
    %1608 = vmatpush1.bf16.msra.mxu0 %v1408
    %1609 = vmatprep.subr.bf16.mxu0 0
    %1610 = vmatpush1.bf16.msra.mxu0 %v1409
    %1611 = vmatprep.subr.bf16.mxu0 0
    %1612 = vmatpush1.bf16.msra.mxu0 %v1410
    %1613 = vmatprep.subr.bf16.mxu0 0
    %1614 = vmatpush1.bf16.msra.mxu0 %v1411
    %1615 = vmatprep.subr.bf16.mxu0 0
    %1616 = vmatpush1.bf16.msra.mxu0 %v1412
    %1617 = vmatprep.subr.bf16.mxu0 0
    %1618 = vmatpush1.bf16.msra.mxu0 %v1413
    %1619 = vmatprep.mubr.bf16.mxu0 %v877
    %1620 = vmatmul.mubr.bf16.gmra.mrb[0].mxu0 %v876
    %v1621 = vpop.f32.mrb[0].mxu0
    %v1622 = vadd.f32 %v298, %v1621
    %v1623 = vpop.f32.mrb[0].mxu0
    %v1624 = vpop.f32.mrb[0].mxu0
    %v1625 = vadd.f32 %v298, %v1624
    %v1626 = vpop.f32.mrb[0].mxu0
    %1627 = vmatprep.mubr.bf16.mxu0 %v883
    %1628 = vmatmul.mubr.bf16.gmra.mrb[0].mxu0 %v882
    %v1629 = vpop.f32.mrb[0].mxu0
    %v1630 = vadd.f32 %v298, %v1629
    %v1631 = vpop.f32.mrb[0].mxu0
    %v1632 = vpop.f32.mrb[0].mxu0
    %v1633 = vadd.f32 %v298, %v1632
    %v1634 = vpop.f32.mrb[0].mxu0
    %1635 = vmatprep.mubr.bf16.mxu0 %v889
    %1636 = vmatmul.mubr.bf16.gmra.mrb[0].mxu0 %v888
    %v1637 = vpop.f32.mrb[0].mxu0
    %v1638 = vadd.f32 %v298, %v1637
    %v1639 = vpop.f32.mrb[0].mxu0
    %v1640 = vpop.f32.mrb[0].mxu0
    %v1641 = vadd.f32 %v298, %v1640
    %v1642 = vpop.f32.mrb[0].mxu0
    %1643 = vmatprep.mubr.bf16.mxu0 %v895
    %1644 = vmatmul.mubr.bf16.gmra.mrb[0].mxu0 %v894
    %v1645 = vpop.f32.mrb[0].mxu0
    %v1646 = vadd.f32 %v298, %v1645
    %v1647 = vpop.f32.mrb[0].mxu0
    %v1648 = vpop.f32.mrb[0].mxu0
    %v1649 = vadd.f32 %v298, %v1648
    %v1650 = vpop.f32.mrb[0].mxu0
    %1651 = vmatprep.mubr.bf16.mxu0 %v901
    %1652 = vmatmul.mubr.bf16.gmra.mrb[0].mxu0 %v900
    %v1653 = vpop.f32.mrb[0].mxu0
    %v1654 = vadd.f32 %v298, %v1653
    %v1655 = vpop.f32.mrb[0].mxu0
    %v1656 = vpop.f32.mrb[0].mxu0
    %v1657 = vadd.f32 %v298, %v1656
    %v1658 = vpop.f32.mrb[0].mxu0
    %1659 = vmatprep.mubr.bf16.mxu0 %v907
    %1660 = vmatmul.mubr.bf16.gmra.mrb[0].mxu0 %v906
    %v1661 = vpop.f32.mrb[0].mxu0
    %v1662 = vadd.f32 %v298, %v1661
    %v1663 = vpop.f32.mrb[0].mxu0
    %v1664 = vpop.f32.mrb[0].mxu0
    %v1665 = vadd.f32 %v298, %v1664
    %v1666 = vpop.f32.mrb[0].mxu0
    %1667 = vmatprep.mubr.bf16.mxu0 %v913
    %1668 = vmatmul.mubr.bf16.gmra.mrb[0].mxu0 %v912
    %v1669 = vpop.f32.mrb[0].mxu0
    %v1670 = vadd.f32 %v298, %v1669
    %v1671 = vpop.f32.mrb[0].mxu0
    %v1672 = vpop.f32.mrb[0].mxu0
    %v1673 = vadd.f32 %v298, %v1672
    %v1674 = vpop.f32.mrb[0].mxu0
    %1675 = vmatprep.mubr.bf16.mxu0 %v919
    %1676 = vmatmul.mubr.bf16.gmra.mrb[0].mxu0 %v918
    %v1677 = vpop.f32.mrb[0].mxu0
    %v1678 = vadd.f32 %v298, %v1677
    %v1679 = vpop.f32.mrb[0].mxu0
    %v1680 = vpop.f32.mrb[0].mxu0
    %v1681 = vadd.f32 %v298, %v1680
    %v1682 = vpop.f32.mrb[0].mxu0
    %1683 = vmatprep.mubr.bf16.mxu0 %v925
    %1684 = vmatmul.mubr.bf16.gmra.mrb[0].mxu0 %v924
    %v1685 = vpop.f32.mrb[0].mxu0
    %v1686 = vadd.f32 %v298, %v1685
    %v1687 = vpop.f32.mrb[0].mxu0
    %v1688 = vpop.f32.mrb[0].mxu0
    %v1689 = vadd.f32 %v298, %v1688
    %v1690 = vpop.f32.mrb[0].mxu0
    %1691 = vmatprep.mubr.bf16.mxu0 %v931
    %1692 = vmatmul.mubr.bf16.gmra.mrb[0].mxu0 %v930
    %v1693 = vpop.f32.mrb[0].mxu0
    %v1694 = vadd.f32 %v298, %v1693
    %v1695 = vpop.f32.mrb[0].mxu0
    %v1696 = vpop.f32.mrb[0].mxu0
    %v1697 = vadd.f32 %v298, %v1696
    %v1698 = vpop.f32.mrb[0].mxu0
    %1699 = vmatprep.mubr.bf16.mxu0 %v937
    %1700 = vmatmul.mubr.bf16.gmra.mrb[0].mxu0 %v936
    %v1701 = vpop.f32.mrb[0].mxu0
    %v1702 = vadd.f32 %v298, %v1701
    %v1703 = vpop.f32.mrb[0].mxu0
    %v1704 = vpop.f32.mrb[0].mxu0
    %v1705 = vadd.f32 %v298, %v1704
    %v1706 = vpop.f32.mrb[0].mxu0
    %1707 = vmatprep.mubr.bf16.mxu0 %v943
    %1708 = vmatmul.mubr.bf16.gmra.mrb[0].mxu0 %v942
    %v1709 = vpop.f32.mrb[0].mxu0
    %v1710 = vadd.f32 %v298, %v1709
    %v1711 = vpop.f32.mrb[0].mxu0
    %v1712 = vpop.f32.mrb[0].mxu0
    %v1713 = vadd.f32 %v298, %v1712
    %v1714 = vpop.f32.mrb[0].mxu0
    %1715 = vmatprep.mubr.bf16.mxu0 %v949
    %1716 = vmatmul.mubr.bf16.gmra.mrb[0].mxu0 %v948
    %v1717 = vpop.f32.mrb[0].mxu0
    %v1718 = vadd.f32 %v298, %v1717
    %v1719 = vpop.f32.mrb[0].mxu0
    %v1720 = vpop.f32.mrb[0].mxu0
    %v1721 = vadd.f32 %v298, %v1720
    %v1722 = vpop.f32.mrb[0].mxu0
    %1723 = vmatprep.mubr.bf16.mxu0 %v955
    %1724 = vmatmul.mubr.bf16.gmra.mrb[0].mxu0 %v954
    %v1725 = vpop.f32.mrb[0].mxu0
    %v1726 = vadd.f32 %v298, %v1725
    %v1727 = vpop.f32.mrb[0].mxu0
    %v1728 = vpop.f32.mrb[0].mxu0
    %v1729 = vadd.f32 %v298, %v1728
    %v1730 = vpop.f32.mrb[0].mxu0
    %1731 = vmatprep.mubr.bf16.mxu0 %v961
    %1732 = vmatmul.mubr.bf16.gmra.mrb[0].mxu0 %v960
    %v1733 = vpop.f32.mrb[0].mxu0
    %v1734 = vadd.f32 %v298, %v1733
    %v1735 = vpop.f32.mrb[0].mxu0
    %v1736 = vpop.f32.mrb[0].mxu0
    %v1737 = vadd.f32 %v298, %v1736
    %v1738 = vpop.f32.mrb[0].mxu0
    %1739 = vmatprep.mubr.bf16.mxu0 %v967
    %1740 = vmatmul.mubr.bf16.gmra.mrb[0].mxu0 %v966
    %v1741 = vpop.f32.mrb[0].mxu0
    %v1742 = vadd.f32 %v298, %v1741
    %v1743 = vpop.f32.mrb[0].mxu0
    %v1744 = vpop.f32.mrb[0].mxu0
    %v1745 = vadd.f32 %v298, %v1744
    %v1746 = vpop.f32.mrb[0].mxu0
    %1747 = vmatprep.mubr.bf16.mxu0 %v973
    %1748 = vmatmul.mubr.bf16.gmra.mrb[0].mxu0 %v972
    %v1749 = vpop.f32.mrb[0].mxu0
    %v1750 = vadd.f32 %v298, %v1749
    %v1751 = vpop.f32.mrb[0].mxu0
    %v1752 = vpop.f32.mrb[0].mxu0
    %v1753 = vadd.f32 %v298, %v1752
    %v1754 = vpop.f32.mrb[0].mxu0
    %1755 = vmatprep.mubr.bf16.mxu0 %v979
    %1756 = vmatmul.mubr.bf16.gmra.mrb[0].mxu0 %v978
    %v1757 = vpop.f32.mrb[0].mxu0
    %v1758 = vadd.f32 %v298, %v1757
    %v1759 = vpop.f32.mrb[0].mxu0
    %v1760 = vpop.f32.mrb[0].mxu0
    %v1761 = vadd.f32 %v298, %v1760
    %v1762 = vpop.f32.mrb[0].mxu0
    %1763 = vmatprep.mubr.bf16.mxu0 %v985
    %1764 = vmatmul.mubr.bf16.gmra.mrb[0].mxu0 %v984
    %v1765 = vpop.f32.mrb[0].mxu0
    %v1766 = vadd.f32 %v298, %v1765
    %v1767 = vpop.f32.mrb[0].mxu0
    %v1768 = vpop.f32.mrb[0].mxu0
    %v1769 = vadd.f32 %v298, %v1768
    %v1770 = vpop.f32.mrb[0].mxu0
    %1771 = vmatprep.mubr.bf16.mxu0 %v991
    %1772 = vmatmul.mubr.bf16.gmra.mrb[0].mxu0 %v990
    %v1773 = vpop.f32.mrb[0].mxu0
    %v1774 = vadd.f32 %v298, %v1773
    %v1775 = vpop.f32.mrb[0].mxu0
    %v1776 = vpop.f32.mrb[0].mxu0
    %v1777 = vadd.f32 %v298, %v1776
    %v1778 = vpop.f32.mrb[0].mxu0
    %1779 = vmatprep.mubr.bf16.mxu0 %v997
    %1780 = vmatmul.mubr.bf16.gmra.mrb[0].mxu0 %v996
    %v1781 = vpop.f32.mrb[0].mxu0
    %v1782 = vadd.f32 %v298, %v1781
    %v1783 = vpop.f32.mrb[0].mxu0
    %v1784 = vpop.f32.mrb[0].mxu0
    %v1785 = vadd.f32 %v298, %v1784
    %v1786 = vpop.f32.mrb[0].mxu0
    %1787 = vmatprep.mubr.bf16.mxu0 %v1003
    %1788 = vmatmul.mubr.bf16.gmra.mrb[0].mxu0 %v1002
    %v1789 = vpop.f32.mrb[0].mxu0
    %v1790 = vadd.f32 %v298, %v1789
    %v1791 = vpop.f32.mrb[0].mxu0
    %v1792 = vpop.f32.mrb[0].mxu0
    %v1793 = vadd.f32 %v298, %v1792
    %v1794 = vpop.f32.mrb[0].mxu0
    %1795 = vmatprep.mubr.bf16.mxu0 %v1009
    %1796 = vmatmul.mubr.bf16.gmra.mrb[0].mxu0 %v1008
    %v1797 = vpop.f32.mrb[0].mxu0
    %v1798 = vadd.f32 %v298, %v1797
    %v1799 = vpop.f32.mrb[0].mxu0
    %v1800 = vpop.f32.mrb[0].mxu0
    %v1801 = vadd.f32 %v298, %v1800
    %v1802 = vpop.f32.mrb[0].mxu0
    %1803 = vmatprep.mubr.bf16.mxu0 %v1015
    %1804 = vmatmul.mubr.bf16.gmra.mrb[0].mxu0 %v1014
    %v1805 = vpop.f32.mrb[0].mxu0
    %v1806 = vadd.f32 %v298, %v1805
    %v1807 = vpop.f32.mrb[0].mxu0
    %v1808 = vpop.f32.mrb[0].mxu0
    %v1809 = vadd.f32 %v298, %v1808
    %v1810 = vpop.f32.mrb[0].mxu0
    %1811 = vmatprep.mubr.bf16.mxu0 %v1021
    %1812 = vmatmul.mubr.bf16.gmra.mrb[0].mxu0 %v1020
    %v1813 = vpop.f32.mrb[0].mxu0
    %v1814 = vadd.f32 %v298, %v1813
    %v1815 = vpop.f32.mrb[0].mxu0
    %v1816 = vpop.f32.mrb[0].mxu0
    %v1817 = vadd.f32 %v298, %v1816
    %v1818 = vpop.f32.mrb[0].mxu0
    %1819 = vmatprep.mubr.bf16.mxu0 %v1027
    %1820 = vmatmul.mubr.bf16.gmra.mrb[0].mxu0 %v1026
    %v1821 = vpop.f32.mrb[0].mxu0
    %v1822 = vadd.f32 %v298, %v1821
    %v1823 = vpop.f32.mrb[0].mxu0
    %v1824 = vpop.f32.mrb[0].mxu0
    %v1825 = vadd.f32 %v298, %v1824
    %v1826 = vpop.f32.mrb[0].mxu0
    %1827 = vmatprep.mubr.bf16.mxu0 %v1033
    %1828 = vmatmul.mubr.bf16.gmra.mrb[0].mxu0 %v1032
    %v1829 = vpop.f32.mrb[0].mxu0
    %v1830 = vadd.f32 %v298, %v1829
    %v1831 = vpop.f32.mrb[0].mxu0
    %v1832 = vpop.f32.mrb[0].mxu0
    %v1833 = vadd.f32 %v298, %v1832
    %v1834 = vpop.f32.mrb[0].mxu0
    %1835 = vmatprep.mubr.bf16.mxu0 %v1039
    %1836 = vmatmul.mubr.bf16.gmra.mrb[0].mxu0 %v1038
    %v1837 = vpop.f32.mrb[0].mxu0
    %v1838 = vadd.f32 %v298, %v1837
    %v1839 = vpop.f32.mrb[0].mxu0
    %v1840 = vpop.f32.mrb[0].mxu0
    %v1841 = vadd.f32 %v298, %v1840
    %v1842 = vpop.f32.mrb[0].mxu0
    %1843 = vmatprep.mubr.bf16.mxu0 %v1045
    %1844 = vmatmul.mubr.bf16.gmra.mrb[0].mxu0 %v1044
    %v1845 = vpop.f32.mrb[0].mxu0
    %v1846 = vadd.f32 %v298, %v1845
    %v1847 = vpop.f32.mrb[0].mxu0
    %v1848 = vpop.f32.mrb[0].mxu0
    %v1849 = vadd.f32 %v298, %v1848
    %v1850 = vpop.f32.mrb[0].mxu0
    %1851 = vmatprep.mubr.bf16.mxu0 %v1051
    %1852 = vmatmul.mubr.bf16.gmra.mrb[0].mxu0 %v1050
    %v1853 = vpop.f32.mrb[0].mxu0
    %v1854 = vadd.f32 %v298, %v1853
    %v1855 = vpop.f32.mrb[0].mxu0
    %v1856 = vpop.f32.mrb[0].mxu0
    %v1857 = vadd.f32 %v298, %v1856
    %v1858 = vpop.f32.mrb[0].mxu0
    %1859 = vmatprep.mubr.bf16.mxu0 %v1057
    %1860 = vmatmul.mubr.bf16.gmra.mrb[0].mxu0 %v1056
    %v1861 = vpop.f32.mrb[0].mxu0
    %v1862 = vadd.f32 %v298, %v1861
    %v1863 = vpop.f32.mrb[0].mxu0
    %v1864 = vpop.f32.mrb[0].mxu0
    %v1865 = vadd.f32 %v298, %v1864
    %v1866 = vpop.f32.mrb[0].mxu0
    %1867 = vmatprep.mubr.bf16.mxu0 %v1063
    %1868 = vmatmul.mubr.bf16.gmra.mrb[0].mxu0 %v1062
    %v1869 = vpop.f32.mrb[0].mxu0
    %v1870 = vadd.f32 %v298, %v1869
    %v1871 = vpop.f32.mrb[0].mxu0
    %v1872 = vpop.f32.mrb[0].mxu0
    %v1873 = vadd.f32 %v298, %v1872
    %v1874 = vpop.f32.mrb[0].mxu0
    %1875 = vdwg.mxu0
    %1876 = vmatprep.subr.bf16.mxu0 0
    %1877 = vmatpush1.bf16.msra.mxu0 %v1414
    %1878 = vmatprep.subr.bf16.mxu0 0
    %1879 = vmatpush1.bf16.msra.mxu0 %v1415
    %1880 = vmatprep.subr.bf16.mxu0 0
    %1881 = vmatpush1.bf16.msra.mxu0 %v1416
    %1882 = vmatprep.subr.bf16.mxu0 0
    %1883 = vmatpush1.bf16.msra.mxu0 %v1417
    %1884 = vmatprep.subr.bf16.mxu0 0
    %1885 = vmatpush1.bf16.msra.mxu0 %v1418
    %1886 = vmatprep.subr.bf16.mxu0 0
    %1887 = vmatpush1.bf16.msra.mxu0 %v1419
    %1888 = vmatprep.subr.bf16.mxu0 0
    %1889 = vmatpush1.bf16.msra.mxu0 %v1420
    %1890 = vmatprep.subr.bf16.mxu0 0
    %1891 = vmatpush1.bf16.msra.mxu0 %v1421
    %1892 = vmatprep.subr.bf16.mxu0 0
    %1893 = vmatpush1.bf16.msra.mxu0 %v1422
    %1894 = vmatprep.subr.bf16.mxu0 0
    %1895 = vmatpush1.bf16.msra.mxu0 %v1423
    %1896 = vmatprep.subr.bf16.mxu0 0
    %1897 = vmatpush1.bf16.msra.mxu0 %v1424
    %1898 = vmatprep.subr.bf16.mxu0 0
    %1899 = vmatpush1.bf16.msra.mxu0 %v1425
    %1900 = vmatprep.subr.bf16.mxu0 0
    %1901 = vmatpush1.bf16.msra.mxu0 %v1426
    %1902 = vmatprep.subr.bf16.mxu0 0
    %1903 = vmatpush1.bf16.msra.mxu0 %v1427
    %1904 = vmatprep.subr.bf16.mxu0 0
    %1905 = vmatpush1.bf16.msra.mxu0 %v1428
    %1906 = vmatprep.subr.bf16.mxu0 0
    %1907 = vmatpush1.bf16.msra.mxu0 %v1429
    %1908 = vmatprep.mubr.bf16.mxu0 %v879
    %1909 = vmatmul.mubr.bf16.gmra.mrb[0].mxu0 %v878
    %v1910 = vpop.f32.mrb[0].mxu0
    %v1911 = vadd.f32 %v1622, %v1910
    %v1912 = vpop.f32.mrb[0].mxu0
    %v1913 = vpop.f32.mrb[0].mxu0
    %v1914 = vadd.f32 %v1625, %v1913
    %v1915 = vpop.f32.mrb[0].mxu0
    %1916 = vmatprep.mubr.bf16.mxu0 %v885
    %1917 = vmatmul.mubr.bf16.gmra.mrb[0].mxu0 %v884
    %v1918 = vpop.f32.mrb[0].mxu0
    %v1919 = vadd.f32 %v1630, %v1918
    %v1920 = vpop.f32.mrb[0].mxu0
    %v1921 = vpop.f32.mrb[0].mxu0
    %v1922 = vadd.f32 %v1633, %v1921
    %v1923 = vpop.f32.mrb[0].mxu0
    %1924 = vmatprep.mubr.bf16.mxu0 %v891
    %1925 = vmatmul.mubr.bf16.gmra.mrb[0].mxu0 %v890
    %v1926 = vpop.f32.mrb[0].mxu0
    %v1927 = vadd.f32 %v1638, %v1926
    %v1928 = vpop.f32.mrb[0].mxu0
    %v1929 = vpop.f32.mrb[0].mxu0
    %v1930 = vadd.f32 %v1641, %v1929
    %v1931 = vpop.f32.mrb[0].mxu0
    %1932 = vmatprep.mubr.bf16.mxu0 %v897
    %1933 = vmatmul.mubr.bf16.gmra.mrb[0].mxu0 %v896
    %v1934 = vpop.f32.mrb[0].mxu0
    %v1935 = vadd.f32 %v1646, %v1934
    %v1936 = vpop.f32.mrb[0].mxu0
    %v1937 = vpop.f32.mrb[0].mxu0
    %v1938 = vadd.f32 %v1649, %v1937
    %v1939 = vpop.f32.mrb[0].mxu0
    %1940 = vmatprep.mubr.bf16.mxu0 %v903
    %1941 = vmatmul.mubr.bf16.gmra.mrb[0].mxu0 %v902
    %v1942 = vpop.f32.mrb[0].mxu0
    %v1943 = vadd.f32 %v1654, %v1942
    %v1944 = vpop.f32.mrb[0].mxu0
    %v1945 = vpop.f32.mrb[0].mxu0
    %v1946 = vadd.f32 %v1657, %v1945
    %v1947 = vpop.f32.mrb[0].mxu0
    %1948 = vmatprep.mubr.bf16.mxu0 %v909
    %1949 = vmatmul.mubr.bf16.gmra.mrb[0].mxu0 %v908
    %v1950 = vpop.f32.mrb[0].mxu0
    %v1951 = vadd.f32 %v1662, %v1950
    %v1952 = vpop.f32.mrb[0].mxu0
    %v1953 = vpop.f32.mrb[0].mxu0
    %v1954 = vadd.f32 %v1665, %v1953
    %v1955 = vpop.f32.mrb[0].mxu0
    %1956 = vmatprep.mubr.bf16.mxu0 %v915
    %1957 = vmatmul.mubr.bf16.gmra.mrb[0].mxu0 %v914
    %v1958 = vpop.f32.mrb[0].mxu0
    %v1959 = vadd.f32 %v1670, %v1958
    %v1960 = vpop.f32.mrb[0].mxu0
    %v1961 = vpop.f32.mrb[0].mxu0
    %v1962 = vadd.f32 %v1673, %v1961
    %v1963 = vpop.f32.mrb[0].mxu0
    %1964 = vmatprep.mubr.bf16.mxu0 %v921
    %1965 = vmatmul.mubr.bf16.gmra.mrb[0].mxu0 %v920
    %v1966 = vpop.f32.mrb[0].mxu0
    %v1967 = vadd.f32 %v1678, %v1966
    %v1968 = vpop.f32.mrb[0].mxu0
    %v1969 = vpop.f32.mrb[0].mxu0
    %v1970 = vadd.f32 %v1681, %v1969
    %v1971 = vpop.f32.mrb[0].mxu0
    %1972 = vmatprep.mubr.bf16.mxu0 %v927
    %1973 = vmatmul.mubr.bf16.gmra.mrb[0].mxu0 %v926
    %v1974 = vpop.f32.mrb[0].mxu0
    %v1975 = vadd.f32 %v1686, %v1974
    %v1976 = vpop.f32.mrb[0].mxu0
    %v1977 = vpop.f32.mrb[0].mxu0
    %v1978 = vadd.f32 %v1689, %v1977
    %v1979 = vpop.f32.mrb[0].mxu0
    %1980 = vmatprep.mubr.bf16.mxu0 %v933
    %1981 = vmatmul.mubr.bf16.gmra.mrb[0].mxu0 %v932
    %v1982 = vpop.f32.mrb[0].mxu0
    %v1983 = vadd.f32 %v1694, %v1982
    %v1984 = vpop.f32.mrb[0].mxu0
    %v1985 = vpop.f32.mrb[0].mxu0
    %v1986 = vadd.f32 %v1697, %v1985
    %v1987 = vpop.f32.mrb[0].mxu0
    %1988 = vmatprep.mubr.bf16.mxu0 %v939
    %1989 = vmatmul.mubr.bf16.gmra.mrb[0].mxu0 %v938
    %v1990 = vpop.f32.mrb[0].mxu0
    %v1991 = vadd.f32 %v1702, %v1990
    %v1992 = vpop.f32.mrb[0].mxu0
    %v1993 = vpop.f32.mrb[0].mxu0
    %v1994 = vadd.f32 %v1705, %v1993
    %v1995 = vpop.f32.mrb[0].mxu0
    %1996 = vmatprep.mubr.bf16.mxu0 %v945
    %1997 = vmatmul.mubr.bf16.gmra.mrb[0].mxu0 %v944
    %v1998 = vpop.f32.mrb[0].mxu0
    %v1999 = vadd.f32 %v1710, %v1998
    %v2000 = vpop.f32.mrb[0].mxu0
    %v2001 = vpop.f32.mrb[0].mxu0
    %v2002 = vadd.f32 %v1713, %v2001
    %v2003 = vpop.f32.mrb[0].mxu0
    %2004 = vmatprep.mubr.bf16.mxu0 %v951
    %2005 = vmatmul.mubr.bf16.gmra.mrb[0].mxu0 %v950
    %v2006 = vpop.f32.mrb[0].mxu0
    %v2007 = vadd.f32 %v1718, %v2006
    %v2008 = vpop.f32.mrb[0].mxu0
    %v2009 = vpop.f32.mrb[0].mxu0
    %v2010 = vadd.f32 %v1721, %v2009
    %v2011 = vpop.f32.mrb[0].mxu0
    %2012 = vmatprep.mubr.bf16.mxu0 %v957
    %2013 = vmatmul.mubr.bf16.gmra.mrb[0].mxu0 %v956
    %v2014 = vpop.f32.mrb[0].mxu0
    %v2015 = vadd.f32 %v1726, %v2014
    %v2016 = vpop.f32.mrb[0].mxu0
    %v2017 = vpop.f32.mrb[0].mxu0
    %v2018 = vadd.f32 %v1729, %v2017
    %v2019 = vpop.f32.mrb[0].mxu0
    %2020 = vmatprep.mubr.bf16.mxu0 %v963
    %2021 = vmatmul.mubr.bf16.gmra.mrb[0].mxu0 %v962
    %v2022 = vpop.f32.mrb[0].mxu0
    %v2023 = vadd.f32 %v1734, %v2022
    %v2024 = vpop.f32.mrb[0].mxu0
    %v2025 = vpop.f32.mrb[0].mxu0
    %v2026 = vadd.f32 %v1737, %v2025
    %v2027 = vpop.f32.mrb[0].mxu0
    %2028 = vmatprep.mubr.bf16.mxu0 %v969
    %2029 = vmatmul.mubr.bf16.gmra.mrb[0].mxu0 %v968
    %v2030 = vpop.f32.mrb[0].mxu0
    %v2031 = vadd.f32 %v1742, %v2030
    %v2032 = vpop.f32.mrb[0].mxu0
    %v2033 = vpop.f32.mrb[0].mxu0
    %v2034 = vadd.f32 %v1745, %v2033
    %v2035 = vpop.f32.mrb[0].mxu0
    %2036 = vmatprep.mubr.bf16.mxu0 %v975
    %2037 = vmatmul.mubr.bf16.gmra.mrb[0].mxu0 %v974
    %v2038 = vpop.f32.mrb[0].mxu0
    %v2039 = vadd.f32 %v1750, %v2038
    %v2040 = vpop.f32.mrb[0].mxu0
    %v2041 = vpop.f32.mrb[0].mxu0
    %v2042 = vadd.f32 %v1753, %v2041
    %v2043 = vpop.f32.mrb[0].mxu0
    %2044 = vmatprep.mubr.bf16.mxu0 %v981
    %2045 = vmatmul.mubr.bf16.gmra.mrb[0].mxu0 %v980
    %v2046 = vpop.f32.mrb[0].mxu0
    %v2047 = vadd.f32 %v1758, %v2046
    %v2048 = vpop.f32.mrb[0].mxu0
    %v2049 = vpop.f32.mrb[0].mxu0
    %v2050 = vadd.f32 %v1761, %v2049
    %v2051 = vpop.f32.mrb[0].mxu0
    %2052 = vmatprep.mubr.bf16.mxu0 %v987
    %2053 = vmatmul.mubr.bf16.gmra.mrb[0].mxu0 %v986
    %v2054 = vpop.f32.mrb[0].mxu0
    %v2055 = vadd.f32 %v1766, %v2054
    %v2056 = vpop.f32.mrb[0].mxu0
    %v2057 = vpop.f32.mrb[0].mxu0
    %v2058 = vadd.f32 %v1769, %v2057
    %v2059 = vpop.f32.mrb[0].mxu0
    %2060 = vmatprep.mubr.bf16.mxu0 %v993
    %2061 = vmatmul.mubr.bf16.gmra.mrb[0].mxu0 %v992
    %v2062 = vpop.f32.mrb[0].mxu0
    %v2063 = vadd.f32 %v1774, %v2062
    %v2064 = vpop.f32.mrb[0].mxu0
    %v2065 = vpop.f32.mrb[0].mxu0
    %v2066 = vadd.f32 %v1777, %v2065
    %v2067 = vpop.f32.mrb[0].mxu0
    %2068 = vmatprep.mubr.bf16.mxu0 %v999
    %2069 = vmatmul.mubr.bf16.gmra.mrb[0].mxu0 %v998
    %v2070 = vpop.f32.mrb[0].mxu0
    %v2071 = vadd.f32 %v1782, %v2070
    %v2072 = vpop.f32.mrb[0].mxu0
    %v2073 = vpop.f32.mrb[0].mxu0
    %v2074 = vadd.f32 %v1785, %v2073
    %v2075 = vpop.f32.mrb[0].mxu0
    %2076 = vmatprep.mubr.bf16.mxu0 %v1005
    %2077 = vmatmul.mubr.bf16.gmra.mrb[0].mxu0 %v1004
    %v2078 = vpop.f32.mrb[0].mxu0
    %v2079 = vadd.f32 %v1790, %v2078
    %v2080 = vpop.f32.mrb[0].mxu0
    %v2081 = vpop.f32.mrb[0].mxu0
    %v2082 = vadd.f32 %v1793, %v2081
    %v2083 = vpop.f32.mrb[0].mxu0
    %2084 = vmatprep.mubr.bf16.mxu0 %v1011
    %2085 = vmatmul.mubr.bf16.gmra.mrb[0].mxu0 %v1010
    %v2086 = vpop.f32.mrb[0].mxu0
    %v2087 = vadd.f32 %v1798, %v2086
    %v2088 = vpop.f32.mrb[0].mxu0
    %v2089 = vpop.f32.mrb[0].mxu0
    %v2090 = vadd.f32 %v1801, %v2089
    %v2091 = vpop.f32.mrb[0].mxu0
    %2092 = vmatprep.mubr.bf16.mxu0 %v1017
    %2093 = vmatmul.mubr.bf16.gmra.mrb[0].mxu0 %v1016
    %v2094 = vpop.f32.mrb[0].mxu0
    %v2095 = vadd.f32 %v1806, %v2094
    %v2096 = vpop.f32.mrb[0].mxu0
    %v2097 = vpop.f32.mrb[0].mxu0
    %v2098 = vadd.f32 %v1809, %v2097
    %v2099 = vpop.f32.mrb[0].mxu0
    %2100 = vmatprep.mubr.bf16.mxu0 %v1023
    %2101 = vmatmul.mubr.bf16.gmra.mrb[0].mxu0 %v1022
    %v2102 = vpop.f32.mrb[0].mxu0
    %v2103 = vadd.f32 %v1814, %v2102
    %v2104 = vpop.f32.mrb[0].mxu0
    %v2105 = vpop.f32.mrb[0].mxu0
    %v2106 = vadd.f32 %v1817, %v2105
    %v2107 = vpop.f32.mrb[0].mxu0
    %2108 = vmatprep.mubr.bf16.mxu0 %v1029
    %2109 = vmatmul.mubr.bf16.gmra.mrb[0].mxu0 %v1028
    %v2110 = vpop.f32.mrb[0].mxu0
    %v2111 = vadd.f32 %v1822, %v2110
    %v2112 = vpop.f32.mrb[0].mxu0
    %v2113 = vpop.f32.mrb[0].mxu0
    %v2114 = vadd.f32 %v1825, %v2113
    %v2115 = vpop.f32.mrb[0].mxu0
    %2116 = vmatprep.mubr.bf16.mxu0 %v1035
    %2117 = vmatmul.mubr.bf16.gmra.mrb[0].mxu0 %v1034
    %v2118 = vpop.f32.mrb[0].mxu0
    %v2119 = vadd.f32 %v1830, %v2118
    %v2120 = vpop.f32.mrb[0].mxu0
    %v2121 = vpop.f32.mrb[0].mxu0
    %v2122 = vadd.f32 %v1833, %v2121
    %v2123 = vpop.f32.mrb[0].mxu0
    %2124 = vmatprep.mubr.bf16.mxu0 %v1041
    %2125 = vmatmul.mubr.bf16.gmra.mrb[0].mxu0 %v1040
    %v2126 = vpop.f32.mrb[0].mxu0
    %v2127 = vadd.f32 %v1838, %v2126
    %v2128 = vpop.f32.mrb[0].mxu0
    %v2129 = vpop.f32.mrb[0].mxu0
    %v2130 = vadd.f32 %v1841, %v2129
    %v2131 = vpop.f32.mrb[0].mxu0
    %2132 = vmatprep.mubr.bf16.mxu0 %v1047
    %2133 = vmatmul.mubr.bf16.gmra.mrb[0].mxu0 %v1046
    %v2134 = vpop.f32.mrb[0].mxu0
    %v2135 = vadd.f32 %v1846, %v2134
    %v2136 = vpop.f32.mrb[0].mxu0
    %v2137 = vpop.f32.mrb[0].mxu0
    %v2138 = vadd.f32 %v1849, %v2137
    %v2139 = vpop.f32.mrb[0].mxu0
    %2140 = vmatprep.mubr.bf16.mxu0 %v1053
    %2141 = vmatmul.mubr.bf16.gmra.mrb[0].mxu0 %v1052
    %v2142 = vpop.f32.mrb[0].mxu0
    %v2143 = vadd.f32 %v1854, %v2142
    %v2144 = vpop.f32.mrb[0].mxu0
    %v2145 = vpop.f32.mrb[0].mxu0
    %v2146 = vadd.f32 %v1857, %v2145
    %v2147 = vpop.f32.mrb[0].mxu0
    %2148 = vmatprep.mubr.bf16.mxu0 %v1059
    %2149 = vmatmul.mubr.bf16.gmra.mrb[0].mxu0 %v1058
    %v2150 = vpop.f32.mrb[0].mxu0
    %v2151 = vadd.f32 %v1862, %v2150
    %v2152 = vpop.f32.mrb[0].mxu0
    %v2153 = vpop.f32.mrb[0].mxu0
    %v2154 = vadd.f32 %v1865, %v2153
    %v2155 = vpop.f32.mrb[0].mxu0
    %2156 = vmatprep.mubr.bf16.mxu0 %v1065
    %2157 = vmatmul.mubr.bf16.gmra.mrb[0].mxu0 %v1064
    %v2158 = vpop.f32.mrb[0].mxu0
    %v2159 = vadd.f32 %v1870, %v2158
    %v2160 = vpop.f32.mrb[0].mxu0
    %v2161 = vpop.f32.mrb[0].mxu0
    %v2162 = vadd.f32 %v1873, %v2161
    %v2163 = vpop.f32.mrb[0].mxu0
    %2164 = vdwg.mxu0
    %2165 = vmatprep.subr.bf16.mxu0 0
    %2166 = vmatpush1.bf16.msra.mxu0 %v1430
    %2167 = vmatprep.subr.bf16.mxu0 0
    %2168 = vmatpush1.bf16.msra.mxu0 %v1431
    %2169 = vmatprep.subr.bf16.mxu0 0
    %2170 = vmatpush1.bf16.msra.mxu0 %v1432
    %2171 = vmatprep.subr.bf16.mxu0 0
    %2172 = vmatpush1.bf16.msra.mxu0 %v1433
    %2173 = vmatprep.subr.bf16.mxu0 0
    %2174 = vmatpush1.bf16.msra.mxu0 %v1434
    %2175 = vmatprep.subr.bf16.mxu0 0
    %2176 = vmatpush1.bf16.msra.mxu0 %v1435
    %2177 = vmatprep.subr.bf16.mxu0 0
    %2178 = vmatpush1.bf16.msra.mxu0 %v1436
    %2179 = vmatprep.subr.bf16.mxu0 0
    %2180 = vmatpush1.bf16.msra.mxu0 %v1437
    %2181 = vmatprep.subr.bf16.mxu0 0
    %2182 = vmatpush1.bf16.msra.mxu0 %v1438
    %2183 = vmatprep.subr.bf16.mxu0 0
    %2184 = vmatpush1.bf16.msra.mxu0 %v1439
    %2185 = vmatprep.subr.bf16.mxu0 0
    %2186 = vmatpush1.bf16.msra.mxu0 %v1585
    %2187 = vmatprep.subr.bf16.mxu0 0
    %2188 = vmatpush1.bf16.msra.mxu0 0
    %2189 = vmatprep.subr.bf16.mxu0 0
    %2190 = vmatpush1.bf16.msra.mxu0 0
    %2191 = vmatprep.subr.bf16.mxu0 0
    %2192 = vmatpush1.bf16.msra.mxu0 0
    %2193 = vmatprep.subr.bf16.mxu0 0
    %2194 = vmatpush1.bf16.msra.mxu0 0
    %2195 = vmatprep.subr.bf16.mxu0 0
    %2196 = vmatpush1.bf16.msra.mxu0 0
    %2197 = vmatprep.mubr.bf16.mxu0 %v1485
    %2198 = vmatmul.mubr.bf16.gmra.mrb[0].mxu0 %v880
    %v2199 = vpop.f32.mrb[0].mxu0
    %v2200 = vadd.f32 %v1911, %v2199
    %v2201 = vpop.f32.mrb[0].mxu0
    %v2202 = vpop.f32.mrb[0].mxu0
    %v2203 = vadd.f32 %v1914, %v2202
    %v2204 = vpop.f32.mrb[0].mxu0
    %2205 = vmatprep.mubr.bf16.mxu0 %v1488
    %2206 = vmatmul.mubr.bf16.gmra.mrb[0].mxu0 %v886
    %v2207 = vpop.f32.mrb[0].mxu0
    %v2208 = vadd.f32 %v1919, %v2207
    %v2209 = vpop.f32.mrb[0].mxu0
    %v2210 = vpop.f32.mrb[0].mxu0
    %v2211 = vadd.f32 %v1922, %v2210
    %v2212 = vpop.f32.mrb[0].mxu0
    %2213 = vmatprep.mubr.bf16.mxu0 %v1491
    %2214 = vmatmul.mubr.bf16.gmra.mrb[0].mxu0 %v892
    %v2215 = vpop.f32.mrb[0].mxu0
    %v2216 = vadd.f32 %v1927, %v2215
    %v2217 = vpop.f32.mrb[0].mxu0
    %v2218 = vpop.f32.mrb[0].mxu0
    %v2219 = vadd.f32 %v1930, %v2218
    %v2220 = vpop.f32.mrb[0].mxu0
    %2221 = vmatprep.mubr.bf16.mxu0 %v1494
    %2222 = vmatmul.mubr.bf16.gmra.mrb[0].mxu0 %v898
    %v2223 = vpop.f32.mrb[0].mxu0
    %v2224 = vadd.f32 %v1935, %v2223
    %v2225 = vpop.f32.mrb[0].mxu0
    %v2226 = vpop.f32.mrb[0].mxu0
    %v2227 = vadd.f32 %v1938, %v2226
    %v2228 = vpop.f32.mrb[0].mxu0
    %2229 = vmatprep.mubr.bf16.mxu0 %v1497
    %2230 = vmatmul.mubr.bf16.gmra.mrb[0].mxu0 %v904
    %v2231 = vpop.f32.mrb[0].mxu0
    %v2232 = vadd.f32 %v1943, %v2231
    %v2233 = vpop.f32.mrb[0].mxu0
    %v2234 = vpop.f32.mrb[0].mxu0
    %v2235 = vadd.f32 %v1946, %v2234
    %v2236 = vpop.f32.mrb[0].mxu0
    %2237 = vmatprep.mubr.bf16.mxu0 %v1500
    %2238 = vmatmul.mubr.bf16.gmra.mrb[0].mxu0 %v910
    %v2239 = vpop.f32.mrb[0].mxu0
    %v2240 = vadd.f32 %v1951, %v2239
    %v2241 = vpop.f32.mrb[0].mxu0
    %v2242 = vpop.f32.mrb[0].mxu0
    %v2243 = vadd.f32 %v1954, %v2242
    %v2244 = vpop.f32.mrb[0].mxu0
    %2245 = vmatprep.mubr.bf16.mxu0 %v1503
    %2246 = vmatmul.mubr.bf16.gmra.mrb[0].mxu0 %v916
    %v2247 = vpop.f32.mrb[0].mxu0
    %v2248 = vadd.f32 %v1959, %v2247
    %v2249 = vpop.f32.mrb[0].mxu0
    %v2250 = vpop.f32.mrb[0].mxu0
    %v2251 = vadd.f32 %v1962, %v2250
    %v2252 = vpop.f32.mrb[0].mxu0
    %2253 = vmatprep.mubr.bf16.mxu0 %v1506
    %2254 = vmatmul.mubr.bf16.gmra.mrb[0].mxu0 %v922
    %v2255 = vpop.f32.mrb[0].mxu0
    %v2256 = vadd.f32 %v1967, %v2255
    %v2257 = vpop.f32.mrb[0].mxu0
    %v2258 = vpop.f32.mrb[0].mxu0
    %v2259 = vadd.f32 %v1970, %v2258
    %v2260 = vpop.f32.mrb[0].mxu0
    %2261 = vmatprep.mubr.bf16.mxu0 %v1509
    %2262 = vmatmul.mubr.bf16.gmra.mrb[0].mxu0 %v928
    %v2263 = vpop.f32.mrb[0].mxu0
    %v2264 = vadd.f32 %v1975, %v2263
    %v2265 = vpop.f32.mrb[0].mxu0
    %v2266 = vpop.f32.mrb[0].mxu0
    %v2267 = vadd.f32 %v1978, %v2266
    %v2268 = vpop.f32.mrb[0].mxu0
    %2269 = vmatprep.mubr.bf16.mxu0 %v1512
    %2270 = vmatmul.mubr.bf16.gmra.mrb[0].mxu0 %v934
    %v2271 = vpop.f32.mrb[0].mxu0
    %v2272 = vadd.f32 %v1983, %v2271
    %v2273 = vpop.f32.mrb[0].mxu0
    %v2274 = vpop.f32.mrb[0].mxu0
    %v2275 = vadd.f32 %v1986, %v2274
    %v2276 = vpop.f32.mrb[0].mxu0
    %2277 = vmatprep.mubr.bf16.mxu0 %v1515
    %2278 = vmatmul.mubr.bf16.gmra.mrb[0].mxu0 %v940
    %v2279 = vpop.f32.mrb[0].mxu0
    %v2280 = vadd.f32 %v1991, %v2279
    %v2281 = vpop.f32.mrb[0].mxu0
    %v2282 = vpop.f32.mrb[0].mxu0
    %v2283 = vadd.f32 %v1994, %v2282
    %v2284 = vpop.f32.mrb[0].mxu0
    %2285 = vmatprep.mubr.bf16.mxu0 %v1518
    %2286 = vmatmul.mubr.bf16.gmra.mrb[0].mxu0 %v946
    %v2287 = vpop.f32.mrb[0].mxu0
    %v2288 = vadd.f32 %v1999, %v2287
    %v2289 = vpop.f32.mrb[0].mxu0
    %v2290 = vpop.f32.mrb[0].mxu0
    %v2291 = vadd.f32 %v2002, %v2290
    %v2292 = vpop.f32.mrb[0].mxu0
    %2293 = vmatprep.mubr.bf16.mxu0 %v1521
    %2294 = vmatmul.mubr.bf16.gmra.mrb[0].mxu0 %v952
    %v2295 = vpop.f32.mrb[0].mxu0
    %v2296 = vadd.f32 %v2007, %v2295
    %v2297 = vpop.f32.mrb[0].mxu0
    %v2298 = vpop.f32.mrb[0].mxu0
    %v2299 = vadd.f32 %v2010, %v2298
    %v2300 = vpop.f32.mrb[0].mxu0
    %2301 = vmatprep.mubr.bf16.mxu0 %v1524
    %2302 = vmatmul.mubr.bf16.gmra.mrb[0].mxu0 %v958
    %v2303 = vpop.f32.mrb[0].mxu0
    %v2304 = vadd.f32 %v2015, %v2303
    %v2305 = vpop.f32.mrb[0].mxu0
    %v2306 = vpop.f32.mrb[0].mxu0
    %v2307 = vadd.f32 %v2018, %v2306
    %v2308 = vpop.f32.mrb[0].mxu0
    %2309 = vmatprep.mubr.bf16.mxu0 %v1527
    %2310 = vmatmul.mubr.bf16.gmra.mrb[0].mxu0 %v964
    %v2311 = vpop.f32.mrb[0].mxu0
    %v2312 = vadd.f32 %v2023, %v2311
    %v2313 = vpop.f32.mrb[0].mxu0
    %v2314 = vpop.f32.mrb[0].mxu0
    %v2315 = vadd.f32 %v2026, %v2314
    %v2316 = vpop.f32.mrb[0].mxu0
    %2317 = vmatprep.mubr.bf16.mxu0 %v1530
    %2318 = vmatmul.mubr.bf16.gmra.mrb[0].mxu0 %v970
    %v2319 = vpop.f32.mrb[0].mxu0
    %v2320 = vadd.f32 %v2031, %v2319
    %v2321 = vpop.f32.mrb[0].mxu0
    %v2322 = vpop.f32.mrb[0].mxu0
    %v2323 = vadd.f32 %v2034, %v2322
    %v2324 = vpop.f32.mrb[0].mxu0
    %2325 = vmatprep.mubr.bf16.mxu0 %v1533
    %2326 = vmatmul.mubr.bf16.gmra.mrb[0].mxu0 %v976
    %v2327 = vpop.f32.mrb[0].mxu0
    %v2328 = vadd.f32 %v2039, %v2327
    %v2329 = vpop.f32.mrb[0].mxu0
    %v2330 = vpop.f32.mrb[0].mxu0
    %v2331 = vadd.f32 %v2042, %v2330
    %v2332 = vpop.f32.mrb[0].mxu0
    %2333 = vmatprep.mubr.bf16.mxu0 %v1536
    %2334 = vmatmul.mubr.bf16.gmra.mrb[0].mxu0 %v982
    %v2335 = vpop.f32.mrb[0].mxu0
    %v2336 = vadd.f32 %v2047, %v2335
    %v2337 = vpop.f32.mrb[0].mxu0
    %v2338 = vpop.f32.mrb[0].mxu0
    %v2339 = vadd.f32 %v2050, %v2338
    %v2340 = vpop.f32.mrb[0].mxu0
    %2341 = vmatprep.mubr.bf16.mxu0 %v1539
    %2342 = vmatmul.mubr.bf16.gmra.mrb[0].mxu0 %v988
    %v2343 = vpop.f32.mrb[0].mxu0
    %v2344 = vadd.f32 %v2055, %v2343
    %v2345 = vpop.f32.mrb[0].mxu0
    %v2346 = vpop.f32.mrb[0].mxu0
    %v2347 = vadd.f32 %v2058, %v2346
    %v2348 = vpop.f32.mrb[0].mxu0
    %2349 = vmatprep.mubr.bf16.mxu0 %v1542
    %2350 = vmatmul.mubr.bf16.gmra.mrb[0].mxu0 %v994
    %v2351 = vpop.f32.mrb[0].mxu0
    %v2352 = vadd.f32 %v2063, %v2351
    %v2353 = vpop.f32.mrb[0].mxu0
    %v2354 = vpop.f32.mrb[0].mxu0
    %v2355 = vadd.f32 %v2066, %v2354
    %v2356 = vpop.f32.mrb[0].mxu0
    %2357 = vmatprep.mubr.bf16.mxu0 %v1545
    %2358 = vmatmul.mubr.bf16.gmra.mrb[0].mxu0 %v1000
    %v2359 = vpop.f32.mrb[0].mxu0
    %v2360 = vadd.f32 %v2071, %v2359
    %v2361 = vpop.f32.mrb[0].mxu0
    %v2362 = vpop.f32.mrb[0].mxu0
    %v2363 = vadd.f32 %v2074, %v2362
    %v2364 = vpop.f32.mrb[0].mxu0
    %2365 = vmatprep.mubr.bf16.mxu0 %v1548
    %2366 = vmatmul.mubr.bf16.gmra.mrb[0].mxu0 %v1006
    %v2367 = vpop.f32.mrb[0].mxu0
    %v2368 = vadd.f32 %v2079, %v2367
    %v2369 = vpop.f32.mrb[0].mxu0
    %v2370 = vpop.f32.mrb[0].mxu0
    %v2371 = vadd.f32 %v2082, %v2370
    %v2372 = vpop.f32.mrb[0].mxu0
    %2373 = vmatprep.mubr.bf16.mxu0 %v1551
    %2374 = vmatmul.mubr.bf16.gmra.mrb[0].mxu0 %v1012
    %v2375 = vpop.f32.mrb[0].mxu0
    %v2376 = vadd.f32 %v2087, %v2375
    %v2377 = vpop.f32.mrb[0].mxu0
    %v2378 = vpop.f32.mrb[0].mxu0
    %v2379 = vadd.f32 %v2090, %v2378
    %v2380 = vpop.f32.mrb[0].mxu0
    %2381 = vmatprep.mubr.bf16.mxu0 %v1554
    %2382 = vmatmul.mubr.bf16.gmra.mrb[0].mxu0 %v1018
    %v2383 = vpop.f32.mrb[0].mxu0
    %v2384 = vadd.f32 %v2095, %v2383
    %v2385 = vpop.f32.mrb[0].mxu0
    %v2386 = vpop.f32.mrb[0].mxu0
    %v2387 = vadd.f32 %v2098, %v2386
    %v2388 = vpop.f32.mrb[0].mxu0
    %2389 = vmatprep.mubr.bf16.mxu0 %v1557
    %2390 = vmatmul.mubr.bf16.gmra.mrb[0].mxu0 %v1024
    %v2391 = vpop.f32.mrb[0].mxu0
    %v2392 = vadd.f32 %v2103, %v2391
    %v2393 = vpop.f32.mrb[0].mxu0
    %v2394 = vpop.f32.mrb[0].mxu0
    %v2395 = vadd.f32 %v2106, %v2394
    %v2396 = vpop.f32.mrb[0].mxu0
    %2397 = vmatprep.mubr.bf16.mxu0 %v1560
    %2398 = vmatmul.mubr.bf16.gmra.mrb[0].mxu0 %v1030
    %v2399 = vpop.f32.mrb[0].mxu0
    %v2400 = vadd.f32 %v2111, %v2399
    %v2401 = vpop.f32.mrb[0].mxu0
    %v2402 = vpop.f32.mrb[0].mxu0
    %v2403 = vadd.f32 %v2114, %v2402
    %v2404 = vpop.f32.mrb[0].mxu0
    %2405 = vmatprep.mubr.bf16.mxu0 %v1563
    %2406 = vmatmul.mubr.bf16.gmra.mrb[0].mxu0 %v1036
    %v2407 = vpop.f32.mrb[0].mxu0
    %v2408 = vadd.f32 %v2119, %v2407
    %v2409 = vpop.f32.mrb[0].mxu0
    %v2410 = vpop.f32.mrb[0].mxu0
    %v2411 = vadd.f32 %v2122, %v2410
    %v2412 = vpop.f32.mrb[0].mxu0
    %2413 = vmatprep.mubr.bf16.mxu0 %v1566
    %2414 = vmatmul.mubr.bf16.gmra.mrb[0].mxu0 %v1042
    %v2415 = vpop.f32.mrb[0].mxu0
    %v2416 = vadd.f32 %v2127, %v2415
    %v2417 = vpop.f32.mrb[0].mxu0
    %v2418 = vpop.f32.mrb[0].mxu0
    %v2419 = vadd.f32 %v2130, %v2418
    %v2420 = vpop.f32.mrb[0].mxu0
    %2421 = vmatprep.mubr.bf16.mxu0 %v1569
    %2422 = vmatmul.mubr.bf16.gmra.mrb[0].mxu0 %v1048
    %v2423 = vpop.f32.mrb[0].mxu0
    %v2424 = vadd.f32 %v2135, %v2423
    %v2425 = vpop.f32.mrb[0].mxu0
    %v2426 = vpop.f32.mrb[0].mxu0
    %v2427 = vadd.f32 %v2138, %v2426
    %v2428 = vpop.f32.mrb[0].mxu0
    %2429 = vmatprep.mubr.bf16.mxu0 %v1572
    %2430 = vmatmul.mubr.bf16.gmra.mrb[0].mxu0 %v1054
    %v2431 = vpop.f32.mrb[0].mxu0
    %v2432 = vadd.f32 %v2143, %v2431
    %v2433 = vpop.f32.mrb[0].mxu0
    %v2434 = vpop.f32.mrb[0].mxu0
    %v2435 = vadd.f32 %v2146, %v2434
    %v2436 = vpop.f32.mrb[0].mxu0
    %2437 = vmatprep.mubr.bf16.mxu0 %v1575
    %2438 = vmatmul.mubr.bf16.gmra.mrb[0].mxu0 %v1060
    %v2439 = vpop.f32.mrb[0].mxu0
    %v2440 = vadd.f32 %v2151, %v2439
    %v2441 = vpop.f32.mrb[0].mxu0
    %v2442 = vpop.f32.mrb[0].mxu0
    %v2443 = vadd.f32 %v2154, %v2442
    %v2444 = vpop.f32.mrb[0].mxu0
    %2445 = vmatprep.mubr.bf16.mxu0 %v1578
    %2446 = vmatmul.mubr.bf16.gmra.mrb[0].mxu0 %v1066
    %v2447 = vpop.f32.mrb[0].mxu0
    %v2448 = vadd.f32 %v2159, %v2447
    %v2449 = vpop.f32.mrb[0].mxu0
    %v2450 = vpop.f32.mrb[0].mxu0
    %v2451 = vadd.f32 %v2162, %v2450
    %v2452 = vpop.f32.mrb[0].mxu0
    %2453 = vdwg.mxu0
    %v2454 = vpack.c.bf16 %v2203, %v2200
    %v2455 = vpack.c.bf16 %v2211, %v2208
    %v2456 = vpack.c.bf16 %v2219, %v2216
    %v2457 = vpack.c.bf16 %v2227, %v2224
    %v2458 = vpack.c.bf16 %v2235, %v2232
    %v2459 = vpack.c.bf16 %v2243, %v2240
    %v2460 = vpack.c.bf16 %v2251, %v2248
    %v2461 = vpack.c.bf16 %v2259, %v2256
    %v2462 = vpack.c.bf16 %v2267, %v2264
    %v2463 = vpack.c.bf16 %v2275, %v2272
    %v2464 = vpack.c.bf16 %v2283, %v2280
    %v2465 = vpack.c.bf16 %v2291, %v2288
    %v2466 = vpack.c.bf16 %v2299, %v2296
    %v2467 = vpack.c.bf16 %v2307, %v2304
    %v2468 = vpack.c.bf16 %v2315, %v2312
    %v2469 = vpack.c.bf16 %v2323, %v2320
    %v2470 = vpack.c.bf16 %v2331, %v2328
    %v2471 = vpack.c.bf16 %v2339, %v2336
    %v2472 = vpack.c.bf16 %v2347, %v2344
    %v2473 = vpack.c.bf16 %v2355, %v2352
    %v2474 = vpack.c.bf16 %v2363, %v2360
    %v2475 = vpack.c.bf16 %v2371, %v2368
    %v2476 = vpack.c.bf16 %v2379, %v2376
    %v2477 = vpack.c.bf16 %v2387, %v2384
    %v2478 = vpack.c.bf16 %v2395, %v2392
    %v2479 = vpack.c.bf16 %v2403, %v2400
    %v2480 = vpack.c.bf16 %v2411, %v2408
    %v2481 = vpack.c.bf16 %v2419, %v2416
    %v2482 = vpack.c.bf16 %v2427, %v2424
    %v2483 = vpack.c.bf16 %v2435, %v2432
    %v2484 = vpack.c.bf16 %v2443, %v2440
    %v2485 = vpack.c.bf16 %v2451, %v2448
    %v2518 = vunpack.c.l.b16 %v2454
    %v2519 = vunpack.c.h.b16 %v2454
    %v2520 = vunpack.c.l.b16 %v2455
    %v2521 = vunpack.c.h.b16 %v2455
    %v2522 = vunpack.c.l.b16 %v2456
    %v2523 = vunpack.c.h.b16 %v2456
    %v2524 = vunpack.c.l.b16 %v2457
    %v2525 = vunpack.c.h.b16 %v2457
    %v2526 = vunpack.c.l.b16 %v2458
    %v2527 = vunpack.c.h.b16 %v2458
    %v2528 = vunpack.c.l.b16 %v2459
    %v2529 = vunpack.c.h.b16 %v2459
    %v2530 = vunpack.c.l.b16 %v2460
    %v2531 = vunpack.c.h.b16 %v2460
    %v2532 = vunpack.c.l.b16 %v2461
    %v2533 = vunpack.c.h.b16 %v2461
    %v2534 = vunpack.c.l.b16 %v2462
    %v2535 = vunpack.c.h.b16 %v2462
    %v2536 = vunpack.c.l.b16 %v2463
    %v2537 = vunpack.c.h.b16 %v2463
    %v2538 = vunpack.c.l.b16 %v2464
    %v2539 = vunpack.c.h.b16 %v2464
    %v2540 = vunpack.c.l.b16 %v2465
    %v2541 = vunpack.c.h.b16 %v2465
    %v2542 = vunpack.c.l.b16 %v2466
    %v2543 = vunpack.c.h.b16 %v2466
    %v2544 = vunpack.c.l.b16 %v2467
    %v2545 = vunpack.c.h.b16 %v2467
    %v2546 = vunpack.c.l.b16 %v2468
    %v2547 = vunpack.c.h.b16 %v2468
    %v2548 = vunpack.c.l.b16 %v2469
    %v2549 = vunpack.c.h.b16 %v2469
    %v2550 = vunpack.c.l.b16 %v2470
    %v2551 = vunpack.c.h.b16 %v2470
    %v2552 = vunpack.c.l.b16 %v2471
    %v2553 = vunpack.c.h.b16 %v2471
    %v2554 = vunpack.c.l.b16 %v2472
    %v2555 = vunpack.c.h.b16 %v2472
    %v2556 = vunpack.c.l.b16 %v2473
    %v2557 = vunpack.c.h.b16 %v2473
    %v2558 = vunpack.c.l.b16 %v2474
    %v2559 = vunpack.c.h.b16 %v2474
    %v2560 = vunpack.c.l.b16 %v2475
    %v2561 = vunpack.c.h.b16 %v2475
    %v2562 = vunpack.c.l.b16 %v2476
    %v2563 = vunpack.c.h.b16 %v2476
    %v2564 = vunpack.c.l.b16 %v2477
    %v2565 = vunpack.c.h.b16 %v2477
    %v2566 = vunpack.c.l.b16 %v2478
    %v2567 = vunpack.c.h.b16 %v2478
    %v2568 = vunpack.c.l.b16 %v2479
    %v2569 = vunpack.c.h.b16 %v2479
    %v2570 = vunpack.c.l.b16 %v2480
    %v2571 = vunpack.c.h.b16 %v2480
    %v2572 = vunpack.c.l.b16 %v2481
    %v2573 = vunpack.c.h.b16 %v2481
    %v2574 = vunpack.c.l.b16 %v2482
    %v2575 = vunpack.c.h.b16 %v2482
    %v2576 = vunpack.c.l.b16 %v2483
    %v2577 = vunpack.c.h.b16 %v2483
    %v2578 = vunpack.c.l.b16 %v2484
    %v2579 = vunpack.c.h.b16 %v2484
    %v2580 = vunpack.c.l.b16 %v2485
    %v2581 = vunpack.c.h.b16 %v2485
    %v2582 = vpack.c.b16 %v2518, %v2518
    %v2583 = vpack.c.b16 %v2519, %v2519
    %v2584 = vpack.c.b16 %v2520, %v2520
    %v2585 = vpack.c.b16 %v2521, %v2521
    %v2586 = vpack.c.b16 %v2522, %v2522
    %v2587 = vpack.c.b16 %v2523, %v2523
    %v2588 = vpack.c.b16 %v2524, %v2524
    %v2589 = vpack.c.b16 %v2525, %v2525
    %v2590 = vpack.c.b16 %v2526, %v2526
    %v2591 = vpack.c.b16 %v2527, %v2527
    %v2592 = vpack.c.b16 %v2528, %v2528
    %v2593 = vpack.c.b16 %v2529, %v2529
    %v2594 = vpack.c.b16 %v2530, %v2530
    %v2595 = vpack.c.b16 %v2531, %v2531
    %v2596 = vpack.c.b16 %v2532, %v2532
    %v2597 = vpack.c.b16 %v2533, %v2533
    %v2598 = vpack.c.b16 %v2534, %v2534
    %v2599 = vpack.c.b16 %v2535, %v2535
    %v2600 = vpack.c.b16 %v2536, %v2536
    %v2601 = vpack.c.b16 %v2537, %v2537
    %v2602 = vpack.c.b16 %v2538, %v2538
    %v2603 = vpack.c.b16 %v2539, %v2539
    %v2604 = vpack.c.b16 %v2540, %v2540
    %v2605 = vpack.c.b16 %v2541, %v2541
    %v2606 = vpack.c.b16 %v2542, %v2542
    %v2607 = vpack.c.b16 %v2543, %v2543
    %v2608 = vpack.c.b16 %v2544, %v2544
    %v2609 = vpack.c.b16 %v2545, %v2545
    %v2610 = vpack.c.b16 %v2546, %v2546
    %v2611 = vpack.c.b16 %v2547, %v2547
    %v2612 = vpack.c.b16 %v2548, %v2548
    %v2613 = vpack.c.b16 %v2549, %v2549
    %v2614 = vpack.c.b16 %v2550, %v2550
    %v2615 = vpack.c.b16 %v2551, %v2551
    %v2616 = vpack.c.b16 %v2552, %v2552
    %v2617 = vpack.c.b16 %v2553, %v2553
    %v2618 = vpack.c.b16 %v2554, %v2554
    %v2619 = vpack.c.b16 %v2555, %v2555
    %v2620 = vpack.c.b16 %v2556, %v2556
    %v2621 = vpack.c.b16 %v2557, %v2557
    %v2622 = vpack.c.b16 %v2558, %v2558
    %v2623 = vpack.c.b16 %v2559, %v2559
    %v2624 = vpack.c.b16 %v2560, %v2560
    %v2625 = vpack.c.b16 %v2561, %v2561
    %v2626 = vpack.c.b16 %v2562, %v2562
    %v2627 = vpack.c.b16 %v2563, %v2563
    %v2628 = vpack.c.b16 %v2564, %v2564
    %v2629 = vpack.c.b16 %v2565, %v2565
    %v2630 = vpack.c.b16 %v2566, %v2566
    %v2631 = vpack.c.b16 %v2567, %v2567
    %v2632 = vpack.c.b16 %v2568, %v2568
    %v2633 = vpack.c.b16 %v2569, %v2569
    %v2634 = vpack.c.b16 %v2570, %v2570
    %v2635 = vpack.c.b16 %v2571, %v2571
    %v2636 = vpack.c.b16 %v2572, %v2572
    %v2637 = vpack.c.b16 %v2573, %v2573
    %v2638 = vpack.c.b16 %v2574, %v2574
    %v2639 = vpack.c.b16 %v2575, %v2575
    %v2640 = vpack.c.b16 %v2576, %v2576
    %v2641 = vpack.c.b16 %v2577, %v2577
    %v2642 = vpack.c.b16 %v2578, %v2578
    %v2643 = vpack.c.b16 %v2579, %v2579
    %v2644 = vpack.c.b16 %v2580, %v2580
    %v2645 = vpack.c.b16 %v2581, %v2581
    %2710 = vst [vmem:[#allocation2] sm:$0xf] %v2582
    %2711 = vst [vmem:[#allocation2 + $0x4] sm:$0xf] %v2583
    %2712 = vst [vmem:[#allocation2 + $0x8] sm:$0xf] %v2584
    %2713 = vst [vmem:[#allocation2 + $0xc] sm:$0xf] %v2585
    %2714 = vst [vmem:[#allocation2 + $0x10] sm:$0xf] %v2586
    %2715 = vst [vmem:[#allocation2 + $0x14] sm:$0xf] %v2587
    %2716 = vst [vmem:[#allocation2 + $0x18] sm:$0xf] %v2588
    %2717 = vst [vmem:[#allocation2 + $0x1c] sm:$0xf] %v2589
    %2718 = vst [vmem:[#allocation2 + $0x20] sm:$0xf] %v2590
    %2719 = vst [vmem:[#allocation2 + $0x24] sm:$0xf] %v2591
    %2720 = vst [vmem:[#allocation2 + $0x28] sm:$0xf] %v2592
    %2721 = vst [vmem:[#allocation2 + $0x2c] sm:$0xf] %v2593
    %2722 = vst [vmem:[#allocation2 + $0x30] sm:$0xf] %v2594
    %2723 = vst [vmem:[#allocation2 + $0x34] sm:$0xf] %v2595
    %2724 = vst [vmem:[#allocation2 + $0x38] sm:$0xf] %v2596
    %2725 = vst [vmem:[#allocation2 + $0x3c] sm:$0xf] %v2597
    %2726 = vst [vmem:[#allocation2 + $0x40] sm:$0xf] %v2598
    %2727 = vst [vmem:[#allocation2 + $0x44] sm:$0xf] %v2599
    %2728 = vst [vmem:[#allocation2 + $0x48] sm:$0xf] %v2600
    %2729 = vst [vmem:[#allocation2 + $0x4c] sm:$0xf] %v2601
    %2730 = vst [vmem:[#allocation2 + $0x50] sm:$0xf] %v2602
    %2731 = vst [vmem:[#allocation2 + $0x54] sm:$0xf] %v2603
    %2732 = vst [vmem:[#allocation2 + $0x58] sm:$0xf] %v2604
    %2733 = vst [vmem:[#allocation2 + $0x5c] sm:$0xf] %v2605
    %2734 = vst [vmem:[#allocation2 + $0x60] sm:$0xf] %v2606
    %2735 = vst [vmem:[#allocation2 + $0x64] sm:$0xf] %v2607
    %2736 = vst [vmem:[#allocation2 + $0x68] sm:$0xf] %v2608
    %2737 = vst [vmem:[#allocation2 + $0x6c] sm:$0xf] %v2609
    %2738 = vst [vmem:[#allocation2 + $0x70] sm:$0xf] %v2610
    %2739 = vst [vmem:[#allocation2 + $0x74] sm:$0xf] %v2611
    %2740 = vst [vmem:[#allocation2 + $0x78] sm:$0xf] %v2612
    %2741 = vst [vmem:[#allocation2 + $0x7c] sm:$0xf] %v2613
    %2742 = vst [vmem:[#allocation2 + $0x80] sm:$0xf] %v2614
    %2743 = vst [vmem:[#allocation2 + $0x84] sm:$0xf] %v2615
    %2744 = vst [vmem:[#allocation2 + $0x88] sm:$0xf] %v2616
    %2745 = vst [vmem:[#allocation2 + $0x8c] sm:$0xf] %v2617
    %2746 = vst [vmem:[#allocation2 + $0x90] sm:$0xf] %v2618
    %2747 = vst [vmem:[#allocation2 + $0x94] sm:$0xf] %v2619
    %2748 = vst [vmem:[#allocation2 + $0x98] sm:$0xf] %v2620
    %2749 = vst [vmem:[#allocation2 + $0x9c] sm:$0xf] %v2621
    %2750 = vst [vmem:[#allocation2 + $0xa0] sm:$0xf] %v2622
    %2751 = vst [vmem:[#allocation2 + $0xa4] sm:$0xf] %v2623
    %2752 = vst [vmem:[#allocation2 + $0xa8] sm:$0xf] %v2624
    %2753 = vst [vmem:[#allocation2 + $0xac] sm:$0xf] %v2625
    %2754 = vst [vmem:[#allocation2 + $0xb0] sm:$0xf] %v2626
    %2755 = vst [vmem:[#allocation2 + $0xb4] sm:$0xf] %v2627
    %2756 = vst [vmem:[#allocation2 + $0xb8] sm:$0xf] %v2628
    %2757 = vst [vmem:[#allocation2 + $0xbc] sm:$0xf] %v2629
    %2758 = vst [vmem:[#allocation2 + $0xc0] sm:$0xf] %v2630
    %2759 = vst [vmem:[#allocation2 + $0xc4] sm:$0xf] %v2631
    %2760 = vst [vmem:[#allocation2 + $0xc8] sm:$0xf] %v2632
    %2761 = vst [vmem:[#allocation2 + $0xcc] sm:$0xf] %v2633
    %2762 = vst [vmem:[#allocation2 + $0xd0] sm:$0xf] %v2634
    %2763 = vst [vmem:[#allocation2 + $0xd4] sm:$0xf] %v2635
    %2764 = vst [vmem:[#allocation2 + $0xd8] sm:$0xf] %v2636
    %2765 = vst [vmem:[#allocation2 + $0xdc] sm:$0xf] %v2637
    %2766 = vst [vmem:[#allocation2 + $0xe0] sm:$0xf] %v2638
    %2767 = vst [vmem:[#allocation2 + $0xe4] sm:$0xf] %v2639
    %2768 = vst [vmem:[#allocation2 + $0xe8] sm:$0xf] %v2640
    %2769 = vst [vmem:[#allocation2 + $0xec] sm:$0xf] %v2641
    %2770 = vst [vmem:[#allocation2 + $0xf0] sm:$0xf] %v2642
    %2771 = vst [vmem:[#allocation2 + $0xf4] sm:$0xf] %v2643
    %2772 = vst [vmem:[#allocation2 + $0xf8] sm:$0xf] %v2644
    %2773 = vst [vmem:[#allocation2 + $0xfc] sm:$0xf] %v2645
    // Predicated region
    $region14: #{u_net_forward.3} parent=1 // pred_check
      _
    $region15: #{u_net_forward.3} parent=1 // pred_check_branch
      %2775 = sbr.rel (0) target = $region17
    $region16: #{u_net_forward.3} parent=1 // pred_region
      %s2777 = ssub.s32 4096, 4096
      %2778 = vsyncadd [#allocation3], %s2777
      %s2779 = sshll.u32 [#allocation2], 4
      %s2780 = int_to_ptr.vmem [resolvable:$true] %s2779
      %2785 = dma.vmem_to_hbm [thread:$0]  %s2780, 4096, %s3, [#allocation3], 64, 64, 4
    $region17: #{u_net_forward.3} parent=1 // pred_fallthru
      _
    // Predicated region
    $region18: #{u_net_forward.3} parent=1 // pred_check
      _
    $region19: #{u_net_forward.3} parent=1 // pred_check_branch
      %2787 = sbr.rel (0) target = $region21
    $region20: #{u_net_forward.3} parent=1 // pred_region
      %2788 = dma.done [#allocation3], 4096
    $region21: #{u_net_forward.3} parent=1 // pred_fallthru
      _
    %2789 = vsyncpa [#allocation3], 1

</llo_original>
